<compile_context>
chip_gen: v7x
topology: tpu7x:2x2x1
jax: 0.10.0
libtpu: 0.0.40
codegen_flags: <defaults>
</compile_context>

<pallas_src>
import functools
import math

import jax
import jax.numpy as jnp
from jax.experimental import pallas as pl
from jax.experimental.pallas import tpu as pltpu


def _round_up(x, m):
    return ((x + m - 1) // m) * m


def _pick_time_block(T, max_tt=64):
    tt = min(T, max_tt)
    while T % tt:
        tt -= 1
    return tt


# --------------------------------------------------------------------------
# Tiled GEMM with fused bias:  (M, K) @ (K, N) + (N,)  ->  (M, N)
# Used only for the one-time embedding-table projection (tiny for char vocabs).
# --------------------------------------------------------------------------
def _matmul_bias_kernel_1k(x_ref, w_ref, b_ref, o_ref):
    # Single K block: no accumulator scratch, no reduction grid axis.
    o_ref[...] = (jnp.dot(x_ref[...], w_ref[...],
                          preferred_element_type=jnp.float32)
                  + b_ref[...]).astype(o_ref.dtype)


def _matmul_bias_kernel_acc(x_ref, w_ref, b_ref, o_ref, acc_ref):
    @pl.when(pl.program_id(2) == 0)
    def _():
        acc_ref[...] = jnp.zeros_like(acc_ref)

    acc_ref[...] += jnp.dot(x_ref[...], w_ref[...],
                            preferred_element_type=jnp.float32)

    @pl.when(pl.program_id(2) == pl.num_programs(2) - 1)
    def _():
        o_ref[...] = (acc_ref[...] + b_ref[...]).astype(o_ref.dtype)


def matmul_bias(x, w, b, *, tm=256, tn=256, tk=512,
                compute_dtype=None, out_dtype=jnp.float32):
    """Tiled MXU GEMM with f32 accumulation.  Small dims get full-dim blocks
    (no padding / no output-slice round trip); large dims tile at (tm,tn,tk)."""
    M, K = x.shape
    K2, N = w.shape
    assert K2 == K
    if compute_dtype is not None:
        x = x.astype(compute_dtype)
        w = w.astype(compute_dtype)
    b2 = b.astype(jnp.float32).reshape(1, N)

    def tile(dim, pref):
        if dim <= pref:
            return dim, dim                  # full-dim block, no padding
        return pref, _round_up(dim, pref)    # pref is (8,128)-aligned

    tm, Mp = tile(M, tm)
    tk, Kp = tile(K, tk)
    tn, Np = tile(N, tn)

    if (Mp, Kp) != (M, K):
        x = jnp.pad(x, ((0, Mp - M), (0, Kp - K)))
    if (Kp, Np) != (K, N):
        w = jnp.pad(w, ((0, Kp - K), (0, Np - N)))
    if Np != N:
        b2 = jnp.pad(b2, ((0, 0), (0, Np - N)))

    nk = Kp // tk
    if nk == 1:
        out = pl.pallas_call(
            _matmul_bias_kernel_1k,
            out_shape=jax.ShapeDtypeStruct((Mp, Np), out_dtype),
            grid_spec=pltpu.PrefetchScalarGridSpec(
                num_scalar_prefetch=0,
                grid=(Mp // tm, Np // tn),
                in_specs=[
                    pl.BlockSpec((tm, Kp), lambda i, j: (i, 0)),
                    pl.BlockSpec((Kp, tn), lambda i, j: (0, j)),
                    pl.BlockSpec((1, tn), lambda i, j: (0, j)),
                ],
                out_specs=pl.BlockSpec((tm, tn), lambda i, j: (i, j)),
            ),
            compiler_params=pltpu.CompilerParams(
                # Purely parallel grid: shards across v7x's two TensorCores.
                dimension_semantics=("parallel", "parallel")),
        )(x, w, b2)
    else:
        out = pl.pallas_call(
            _matmul_bias_kernel_acc,
            out_shape=jax.ShapeDtypeStruct((Mp, Np), out_dtype),
            grid_spec=pltpu.PrefetchScalarGridSpec(
                num_scalar_prefetch=0,
                grid=(Mp // tm, Np // tn, nk),
                in_specs=[
                    pl.BlockSpec((tm, tk), lambda i, j, k: (i, k)),
                    pl.BlockSpec((tk, tn), lambda i, j, k: (k, j)),
                    pl.BlockSpec((1, tn), lambda i, j, k: (0, j)),
                ],
                out_specs=pl.BlockSpec((tm, tn), lambda i, j, k: (i, j)),
                scratch_shapes=[pltpu.VMEM((tm, tn), jnp.float32)],
            ),
            compiler_params=pltpu.CompilerParams(
                # K is a reduction and must stay innermost + arbitrary.
                dimension_semantics=("parallel", "parallel", "arbitrary")),
        )(x, w, b2)

    if (Mp, Np) != (M, N):
        out = out[:M, :N]
    return out


# --------------------------------------------------------------------------
# Fused LSTM kernel: token gather + recurrence + vocab projection.
# --------------------------------------------------------------------------
def _lstm_fused_kernel(tok_ref, emb_ref, wh_ref, wl_ref, bl_ref,
                       logits_ref, h_sc, c_sc, hblk_sc):
    """One grid step == TT timesteps.

      tok_ref   : SMEM (T*B,) int32  scalar-prefetched token ids (flattened [T,B])
      emb_ref   : VMEM (V, 4H) f32   emb_table @ wx + b (constant index_map)
      wh_ref    : VMEM (H, 4H) f32   recurrent weights   (constant index_map)
      wl_ref    : VMEM (H, V)        output projection   (compute dtype)
      bl_ref    : VMEM (1, V)  f32   output bias
      logits_ref: VMEM (TT*B, V)     output block for this time block
      h_sc/c_sc : VMEM (B, H)  f32   recurrent state carried across grid steps
      hblk_sc   : VMEM (TT*B, H) f32 staging for this block's hidden states

    Only correct because the time grid axis is 'arbitrary' (sequential).
    """
    B, H = h_sc.shape
    TT = hblk_sc.shape[0] // B

    @pl.when(pl.program_id(0) == 0)
    def _():
        h_sc[...] = jnp.zeros_like(h_sc)   # model starts with h = c = 0
        c_sc[...] = jnp.zeros_like(c_sc)

    wh = wh_ref[...]                       # hoisted load, reused every timestep
    t0 = pl.program_id(0) * TT

    def step(t, carry):
        h, c = carry
        base = (t0 + t) * B
        # Fused gather: xproj[b] = emb_proj[tokens[t0+t, b]]  (exact; replaces
        # the per-token x @ wx + b and its (T,B,4H) HBM round trip).
        rows = [emb_ref[pl.ds(tok_ref[base + b], 1), :] for b in range(B)]
        xproj = jnp.concatenate(rows, axis=0)                     # (B, 4H) f32

        big = jnp.dot(h, wh, preferred_element_type=jnp.float32) + xproj

        # torch.chunk order: g, i, f, o.
        # sigmoid(x) = 0.5 * (tanh(x/2) + 1): one EUP op instead of exp+div.
        g = jnp.tanh(big[:, 0 * H:1 * H])
        i = 0.5 * (jnp.tanh(0.5 * big[:, 1 * H:2 * H]) + 1.0)
        f = 0.5 * (jnp.tanh(0.5 * big[:, 2 * H:3 * H]) + 1.0)
        o = 0.5 * (jnp.tanh(0.5 * big[:, 3 * H:4 * H]) + 1.0)

        c_new = g * i + c * f
        h_new = jnp.tanh(c_new) * o
        hblk_sc[pl.ds(pl.multiple_of(t * B, B), B), :] = h_new
        return h_new, c_new

    # Partial unroll: keeps LLO visibility without blowing the 64-vreg budget
    # when TT is large.
    h_fin, c_fin = jax.lax.fori_loop(0, TT, step, (h_sc[...], c_sc[...]),
                                     unroll=min(TT, 8))
    h_sc[...] = h_fin
    c_sc[...] = c_fin

    # Vocab projection for the whole time block, riding in the MXU slack of
    # the latency-bound recurrence; hidden states never touch HBM.
    hs = hblk_sc[...].astype(wl_ref.dtype)                        # (TT*B, H)
    logits = jnp.dot(hs, wl_ref[...],
                     preferred_element_type=jnp.float32) + bl_ref[...]
    logits_ref[...] = logits.astype(logits_ref.dtype)


def lstm_fused_forward(tokens, emb_proj, wh, wl, bl, *,
                       compute_dtype=None, time_block=64):
    """tokens (T,B) int32, emb_proj (V,4H) f32, wh (H,4H), wl (H,V), bl (V,)
       -> logits (T*B, V) f32."""
    T, B = tokens.shape
    V, H4 = emb_proj.shape
    H = wh.shape[0]
    assert H4 == 4 * H and wl.shape == (H, V) and bl.shape == (V,)

    TT = _pick_time_block(T, time_block)
    tok_flat = tokens.reshape(T * B).astype(jnp.int32)   # 1-D: SMEM-friendly
    wl_c = wl.astype(compute_dtype) if compute_dtype is not None else wl
    bl2 = bl.astype(jnp.float32).reshape(1, V)
    wh_f32 = wh.astype(jnp.float32)        # recurrent path stays f32 (accuracy)
    emb_f32 = emb_proj.astype(jnp.float32)

    return pl.pallas_call(
        _lstm_fused_kernel,
        out_shape=jax.ShapeDtypeStruct((T * B, V), jnp.float32),
        grid_spec=pltpu.PrefetchScalarGridSpec(
            num_scalar_prefetch=1,                     # token ids -> SMEM
            grid=(T // TT,),
            in_specs=[
                # Constant index maps: fetched once, resident across grid steps.
                # TODO(synk): for large H on v7x, single-buffer wh/emb_proj
                # (pipeline_mode=pl.Buffered(1)) to halve their VMEM footprint.
                pl.BlockSpec((V, 4 * H), lambda t, tok: (0, 0)),   # emb_proj
                pl.BlockSpec((H, 4 * H), lambda t, tok: (0, 0)),   # wh
                pl.BlockSpec((H, V), lambda t, tok: (0, 0)),       # wl
                pl.BlockSpec((1, V), lambda t, tok: (0, 0)),       # bl
            ],
            out_specs=pl.BlockSpec((TT * B, V), lambda t, tok: (t, 0)),
            scratch_shapes=[
                pltpu.VMEM((B, H), jnp.float32),        # h carry
                pltpu.VMEM((B, H), jnp.float32),        # c carry
                pltpu.VMEM((TT * B, H), jnp.float32),   # block hidden states
            ],
        ),
        compiler_params=pltpu.CompilerParams(
            # Recurrence over time: MUST stay sequential.
            dimension_semantics=("arbitrary",),
        ),
    )(tok_flat, emb_f32, wh_f32, wl_c, bl2)


# --------------------------------------------------------------------------
# Full TextGenerationModel forward.
# --------------------------------------------------------------------------
def text_generation_forward(tokens, params, *, compute_dtype=jnp.bfloat16,
                            time_block=64):
    """tokens: int32 [T, B]  ->  logits float32 [T, B, V]."""
    emb_table = params["embedding"]        # (V, E)
    wh = params["wh"]                      # (H, 4H)
    wx = params["wx"]                      # (E, 4H)
    b = params["b"]                        # (4H,)
    wl = params["wl"]                      # (H, V)
    bl = params["bl"]                      # (V,)

    T, B = tokens.shape
    V, E = emb_table.shape

    # (1) Input projection hoisted out of the recurrence: project the whole
    #     embedding table once (char-level vocab => tiny), fold in the bias.
    emb_proj = matmul_bias(emb_table, wx, b,
                           compute_dtype=compute_dtype,
                           out_dtype=jnp.float32)                 # (V, 4H)

    # (2) Fully fused kernel: token gather + LSTM recurrence + vocab projection.
    logits = lstm_fused_forward(tokens, emb_proj, wh, wl, bl,
                                compute_dtype=compute_dtype,
                                time_block=time_block)            # (T*B, V)
    return logits.reshape(T, B, V)


# --------------------------------------------------------------------------
# Parameters & pure-JAX reference (mirrors the PyTorch module).
# --------------------------------------------------------------------------
def init_params(key, vocab_size, embed_size, hidden_dim):
    k_emb, k_w, k_b, k_lw, k_lb = jax.random.split(key, 5)
    factor = 1.0 / math.sqrt(hidden_dim)

    # nn.Embedding default: N(0, 1)
    embedding = jax.random.normal(k_emb, (vocab_size, embed_size), jnp.float32)

    # LSTM: uniform(-1/sqrt(H), 1/sqrt(H)); +1 on the forget-gate bias chunk.
    w = jax.random.uniform(k_w, (hidden_dim + embed_size, 4 * hidden_dim),
                           jnp.float32, minval=-factor, maxval=factor)
    b = jax.random.uniform(k_b, (4 * hidden_dim,), jnp.float32,
                           minval=-factor, maxval=factor)
    b = b.at[2 * hidden_dim:3 * hidden_dim].add(1.0)

    # nn.Linear(H, V): weight (V, H), bias (V,).
    lw = jax.random.uniform(k_lw, (vocab_size, hidden_dim), jnp.float32,
                            minval=-factor, maxval=factor)
    lb = jax.random.uniform(k_lb, (vocab_size,), jnp.float32,
                            minval=-factor, maxval=factor)

    return {
        "embedding": embedding,
        "wh": w[:hidden_dim],        # (H, 4H) — rows matching h in cat((h, x))
        "wx": w[hidden_dim:],        # (E, 4H) — rows matching x
        "b": b,                      # (4H,)
        "wl": lw.T,                  # (H, V)
        "bl": lb,                    # (V,)
    }


def reference_forward(tokens, params):
    emb = params["embedding"][tokens]                # (T, B, E)
    T, B, E = emb.shape
    H = params["wh"].shape[0]
    w = jnp.concatenate([params["wh"], params["wx"]], axis=0)

    def step(carry, x_t):
        h, c = carry
        data = jnp.concatenate([h, x_t], axis=-1)
        big = data @ w + params["b"]
        g, i, f, o = jnp.split(big, 4, axis=1)
        g = jnp.tanh(g)
        i = jax.nn.sigmoid(i)
        f = jax.nn.sigmoid(f)
        o = jax.nn.sigmoid(o)
        c = g * i + c * f
        h = jnp.tanh(c) * o
        return (h, c), h

    init = (jnp.zeros((B, H), jnp.float32), jnp.zeros((B, H), jnp.float32))
    _, hs = jax.lax.scan(step, init, emb)
    return hs @ params["wl"] + params["bl"]


if __name__ == "__main__":
    VOCAB = 32
    EMBED = 32
    HIDDEN = 128   # lane-aligned: gate slices / h tiles are full 128-lane vregs
    T, B = 16, 8

    key = jax.random.PRNGKey(0)
    k_params, k_tokens = jax.random.split(key)
    params = init_params(k_params, VOCAB, EMBED, HIDDEN)
    tokens = jax.random.randint(k_tokens, (T, B), 0, VOCAB, dtype=jnp.int32)

    # time_block=8 -> 2 sequential grid steps, exercising the carried h/c state.
    fwd = jax.jit(functools.partial(text_generation_forward, time_block=8))
    logits = jax.block_until_ready(fwd(tokens, params))

    ref = reference_forward(tokens, params)
    assert logits.shape == (T, B, VOCAB)
    # bf16 GEMM paths (per perf review) -> looser tolerance than f32-only check.
    assert jnp.allclose(logits, ref, atol=5e-2, rtol=5e-2), "mismatch vs reference"

    print("KERNEL_OK")
</pallas_src>

<mosaic_0001>
module attributes {stable_mosaic.version = 11 : i64} {
  func.func @_matmul_bias_kernel_1k(%arg0: i32, %arg1: i32, %arg2: memref<32x32xbf16, #tpu.memory_space<vmem>>, %arg3: memref<32x256xbf16, #tpu.memory_space<vmem>>, %arg4: memref<1x256xf32, #tpu.memory_space<vmem>>, %arg5: memref<32x256xf32, #tpu.memory_space<vmem>>) attributes {dimension_semantics = [#tpu.dimension_semantics<parallel>, #tpu.dimension_semantics<parallel>], iteration_bounds = array<i64: 1, 2>, scalar_prefetch = 0 : i64, scratch_operands = 0 : i64, tpu.core_type = #tpu.core_type<tc>, window_params = [{transform_indices = @transform_0, window_bounds = array<i64: 32, 32>}, {transform_indices = @transform_1, window_bounds = array<i64: 32, 256>}, {transform_indices = @transform_2, window_bounds = array<i64: 1, 256>}, {transform_indices = @transform_3, window_bounds = array<i64: 32, 256>}]} {
    %c0 = arith.constant 0 : index
    %c0_0 = arith.constant 0 : index
    %0 = vector.load %arg2[%c0, %c0_0] : memref<32x32xbf16, #tpu.memory_space<vmem>>, vector<32x32xbf16>
    %c0_1 = arith.constant 0 : index
    %c0_2 = arith.constant 0 : index
    %1 = vector.load %arg3[%c0_1, %c0_2] : memref<32x256xbf16, #tpu.memory_space<vmem>>, vector<32x256xbf16>
    %cst = arith.constant dense<0.000000e+00> : vector<32x256xf32>
    %2 = tpu.matmul %0, %1, %cst {dimension_numbers = #tpu.dot_dimension_numbers<[1], [0], [0], [1], [0, 0, 1, 1], [], []>} : vector<32x32xbf16>, vector<32x256xbf16>, vector<32x256xf32> -> vector<32x256xf32>
    %c0_3 = arith.constant 0 : index
    %c0_4 = arith.constant 0 : index
    %3 = vector.load %arg4[%c0_3, %c0_4] : memref<1x256xf32, #tpu.memory_space<vmem>>, vector<1x256xf32>
    %4 = vector.broadcast %3 : vector<1x256xf32> to vector<32x256xf32>
    %5 = arith.addf %2, %4 : vector<32x256xf32>
    %c0_5 = arith.constant 0 : index
    %c0_6 = arith.constant 0 : index
    %6 = vector.load %arg5[%c0_5, %c0_6] : memref<32x256xf32, #tpu.memory_space<vmem>>, vector<32x256xf32>
    tpu.vector_store %arg5[%c0_5, %c0_6], %5 {strides = array<i32>} : memref<32x256xf32, #tpu.memory_space<vmem>>, vector<32x256xf32>,
    return
  }
  func.func @transform_0(%arg0: i32, %arg1: i32) -> (i32, i32) {
    %c0_i32 = arith.constant 0 : i32
    %c0_i32_0 = arith.constant 0 : i32
    return %arg0, %c0_i32 : i32, i32
  }
  func.func @transform_1(%arg0: i32, %arg1: i32) -> (i32, i32) {
    %c0_i32 = arith.constant 0 : i32
    %c0_i32_0 = arith.constant 0 : i32
    return %c0_i32, %arg1 : i32, i32
  }
  func.func @transform_2(%arg0: i32, %arg1: i32) -> (i32, i32) {
    %c0_i32 = arith.constant 0 : i32
    %c0_i32_0 = arith.constant 0 : i32
    return %c0_i32, %arg1 : i32, i32
  }
  func.func @transform_3(%arg0: i32, %arg1: i32) -> (i32, i32) {
    %c0_i32 = arith.constant 0 : i32
    return %arg0, %arg1 : i32, i32
  }
}

module attributes {stable_mosaic.version = 11 : i64} {
  func.func @_lstm_fused_kernel(%arg0: i32, %arg1: memref<128xi32, #tpu.memory_space<smem>>, %arg2: memref<32x512xf32, #tpu.memory_space<vmem>>, %arg3: memref<128x512xf32, #tpu.memory_space<vmem>>, %arg4: memref<128x32xbf16, #tpu.memory_space<vmem>>, %arg5: memref<1x32xf32, #tpu.memory_space<vmem>>, %arg6: memref<64x32xf32, #tpu.memory_space<vmem>>, %arg7: memref<8x128xf32, #tpu.memory_space<vmem>>, %arg8: memref<8x128xf32, #tpu.memory_space<vmem>>, %arg9: memref<64x128xf32, #tpu.memory_space<vmem>>) attributes {dimension_semantics = [#tpu.dimension_semantics<arbitrary>], iteration_bounds = array<i64: 2>, scalar_prefetch = 1 : i64, scratch_operands = 3 : i64, tpu.core_type = #tpu.core_type<tc>, window_params = [{pipeline_mode = #tpu.pipeline_mode<synchronous>, transform_indices = @transform_0, window_bounds = array<i64: 32, 512>}, {pipeline_mode = #tpu.pipeline_mode<synchronous>, transform_indices = @transform_1, window_bounds = array<i64: 128, 512>}, {pipeline_mode = #tpu.pipeline_mode<synchronous>, transform_indices = @transform_2, window_bounds = array<i64: 128, 32>}, {pipeline_mode = #tpu.pipeline_mode<synchronous>, transform_indices = @transform_3, window_bounds = array<i64: 1, 32>}, {transform_indices = @transform_4, window_bounds = array<i64: 64, 32>}]} {
    %c0_i32 = arith.constant 0 : i32
    %0 = arith.cmpi eq, %arg0, %c0_i32 : i32
    %1 = arith.extui %0 : i1 to i32
    %c0_i32_0 = arith.constant 0 : i32
    %2 = arith.cmpi ne, %1, %c0_i32_0 : i32
    scf.if %2 {
      %cst_252 = arith.constant 0.000000e+00 : f32
      %657 = vector.broadcast %cst_252 : f32 to vector<8x128xf32>
      %c0_253 = arith.constant 0 : index
      %c0_254 = arith.constant 0 : index
      %658 = vector.load %arg7[%c0_253, %c0_254] : memref<8x128xf32, #tpu.memory_space<vmem>>, vector<8x128xf32>
      tpu.vector_store %arg7[%c0_253, %c0_254], %657 {strides = array<i32>} : memref<8x128xf32, #tpu.memory_space<vmem>>, vector<8x128xf32>,
      %cst_255 = arith.constant 0.000000e+00 : f32
      %659 = vector.broadcast %cst_255 : f32 to vector<8x128xf32>
      %c0_256 = arith.constant 0 : index
      %c0_257 = arith.constant 0 : index
      %660 = vector.load %arg8[%c0_256, %c0_257] : memref<8x128xf32, #tpu.memory_space<vmem>>, vector<8x128xf32>
      tpu.vector_store %arg8[%c0_256, %c0_257], %659 {strides = array<i32>} : memref<8x128xf32, #tpu.memory_space<vmem>>, vector<8x128xf32>,
    } else {
    }
    %c0 = arith.constant 0 : index
    %c0_1 = arith.constant 0 : index
    %3 = vector.load %arg3[%c0, %c0_1] : memref<128x512xf32, #tpu.memory_space<vmem>>, vector<128x512xf32>
    %c8_i32 = arith.constant 8 : i32
    %4 = arith.muli %arg0, %c8_i32 : i32
    %c0_2 = arith.constant 0 : index
    %c0_3 = arith.constant 0 : index
    %5 = vector.load %arg7[%c0_2, %c0_3] : memref<8x128xf32, #tpu.memory_space<vmem>>, vector<8x128xf32>
    %c0_4 = arith.constant 0 : index
    %c0_5 = arith.constant 0 : index
    %6 = vector.load %arg8[%c0_4, %c0_5] : memref<8x128xf32, #tpu.memory_space<vmem>>, vector<8x128xf32>
    %c0_i32_6 = arith.constant 0 : i32
    %7 = arith.addi %4, %c0_i32_6 : i32
    %c8_i32_7 = arith.constant 8 : i32
    %8 = arith.muli %7, %c8_i32_7 : i32
    %c0_i32_8 = arith.constant 0 : i32
    %9 = arith.addi %8, %c0_i32_8 : i32
    %10 = arith.index_cast %9 : i32 to index
    %11 = memref.load %arg1[%10] : memref<128xi32, #tpu.memory_space<smem>>
    %12 = arith.index_cast %11 : i32 to index
    %c0_9 = arith.constant 0 : index
    %13 = vector.load %arg2[%12, %c0_9] : memref<32x512xf32, #tpu.memory_space<vmem>>, vector<1x512xf32>
    %c1_i32 = arith.constant 1 : i32
    %14 = arith.addi %8, %c1_i32 : i32
    %15 = arith.index_cast %14 : i32 to index
    %16 = memref.load %arg1[%15] : memref<128xi32, #tpu.memory_space<smem>>
    %17 = arith.index_cast %16 : i32 to index
    %c0_10 = arith.constant 0 : index
    %18 = vector.load %arg2[%17, %c0_10] : memref<32x512xf32, #tpu.memory_space<vmem>>, vector<1x512xf32>
    %c2_i32 = arith.constant 2 : i32
    %19 = arith.addi %8, %c2_i32 : i32
    %20 = arith.index_cast %19 : i32 to index
    %21 = memref.load %arg1[%20] : memref<128xi32, #tpu.memory_space<smem>>
    %22 = arith.index_cast %21 : i32 to index
    %c0_11 = arith.constant 0 : index
    %23 = vector.load %arg2[%22, %c0_11] : memref<32x512xf32, #tpu.memory_space<vmem>>, vector<1x512xf32>
    %c3_i32 = arith.constant 3 : i32
    %24 = arith.addi %8, %c3_i32 : i32
    %25 = arith.index_cast %24 : i32 to index
    %26 = memref.load %arg1[%25] : memref<128xi32, #tpu.memory_space<smem>>
    %27 = arith.index_cast %26 : i32 to index
    %c0_12 = arith.constant 0 : index
    %28 = vector.load %arg2[%27, %c0_12] : memref<32x512xf32, #tpu.memory_space<vmem>>, vector<1x512xf32>
    %c4_i32 = arith.constant 4 : i32
    %29 = arith.addi %8, %c4_i32 : i32
    %30 = arith.index_cast %29 : i32 to index
    %31 = memref.load %arg1[%30] : memref<128xi32, #tpu.memory_space<smem>>
    %32 = arith.index_cast %31 : i32 to index
    %c0_13 = arith.constant 0 : index
    %33 = vector.load %arg2[%32, %c0_13] : memref<32x512xf32, #tpu.memory_space<vmem>>, vector<1x512xf32>
    %c5_i32 = arith.constant 5 : i32
    %34 = arith.addi %8, %c5_i32 : i32
    %35 = arith.index_cast %34 : i32 to index
    %36 = memref.load %arg1[%35] : memref<128xi32, #tpu.memory_space<smem>>
    %37 = arith.index_cast %36 : i32 to index
    %c0_14 = arith.constant 0 : index
    %38 = vector.load %arg2[%37, %c0_14] : memref<32x512xf32, #tpu.memory_space<vmem>>, vector<1x512xf32>
    %c6_i32 = arith.constant 6 : i32
    %39 = arith.addi %8, %c6_i32 : i32
    %40 = arith.index_cast %39 : i32 to index
    %41 = memref.load %arg1[%40] : memref<128xi32, #tpu.memory_space<smem>>
    %42 = arith.index_cast %41 : i32 to index
    %c0_15 = arith.constant 0 : index
    %43 = vector.load %arg2[%42, %c0_15] : memref<32x512xf32, #tpu.memory_space<vmem>>, vector<1x512xf32>
    %c7_i32 = arith.constant 7 : i32
    %44 = arith.addi %8, %c7_i32 : i32
    %45 = arith.index_cast %44 : i32 to index
    %46 = memref.load %arg1[%45] : memref<128xi32, #tpu.memory_space<smem>>
    %47 = arith.index_cast %46 : i32 to index
    %c0_16 = arith.constant 0 : index
    %48 = vector.load %arg2[%47, %c0_16] : memref<32x512xf32, #tpu.memory_space<vmem>>, vector<1x512xf32>
    %49 = tpu.concatenate %13, %18, %23, %28, %33, %38, %43, %48 in 0 : vector<1x512xf32>, vector<1x512xf32>, vector<1x512xf32>, vector<1x512xf32>, vector<1x512xf32>, vector<1x512xf32>, vector<1x512xf32>, vector<1x512xf32> -> vector<8x512xf32>
    %cst = arith.constant dense<0.000000e+00> : vector<8x512xf32>
    %50 = tpu.matmul %5, %3, %cst {dimension_numbers = #tpu.dot_dimension_numbers<[1], [0], [0], [1], [0, 0, 1, 1], [], []>} : vector<8x128xf32>, vector<128x512xf32>, vector<8x512xf32> -> vector<8x512xf32>
    %51 = arith.addf %50, %49 : vector<8x512xf32>
    %52 = vector.extract_strided_slice %51 {offsets = [0, 0], sizes = [8, 128], strides = [1, 1]} : vector<8x512xf32> to vector<8x128xf32>
    %53 = math.tanh %52 : vector<8x128xf32>
    %54 = vector.extract_strided_slice %51 {offsets = [0, 128], sizes = [8, 128], strides = [1, 1]} : vector<8x512xf32> to vector<8x128xf32>
    %cst_17 = arith.constant 5.000000e-01 : f32
    %55 = vector.broadcast %cst_17 : f32 to vector<8x128xf32>
    %56 = arith.mulf %55, %54 : vector<8x128xf32>
    %57 = math.tanh %56 : vector<8x128xf32>
    %cst_18 = arith.constant 1.000000e+00 : f32
    %58 = vector.broadcast %cst_18 : f32 to vector<8x128xf32>
    %59 = arith.addf %57, %58 : vector<8x128xf32>
    %cst_19 = arith.constant 5.000000e-01 : f32
    %60 = vector.broadcast %cst_19 : f32 to vector<8x128xf32>
    %61 = arith.mulf %60, %59 : vector<8x128xf32>
    %62 = vector.extract_strided_slice %51 {offsets = [0, 256], sizes = [8, 128], strides = [1, 1]} : vector<8x512xf32> to vector<8x128xf32>
    %cst_20 = arith.constant 5.000000e-01 : f32
    %63 = vector.broadcast %cst_20 : f32 to vector<8x128xf32>
    %64 = arith.mulf %63, %62 : vector<8x128xf32>
    %65 = math.tanh %64 : vector<8x128xf32>
    %cst_21 = arith.constant 1.000000e+00 : f32
    %66 = vector.broadcast %cst_21 : f32 to vector<8x128xf32>
    %67 = arith.addf %65, %66 : vector<8x128xf32>
    %cst_22 = arith.constant 5.000000e-01 : f32
    %68 = vector.broadcast %cst_22 : f32 to vector<8x128xf32>
    %69 = arith.mulf %68, %67 : vector<8x128xf32>
    %70 = vector.extract_strided_slice %51 {offsets = [0, 384], sizes = [8, 128], strides = [1, 1]} : vector<8x512xf32> to vector<8x128xf32>
    %cst_23 = arith.constant 5.000000e-01 : f32
    %71 = vector.broadcast %cst_23 : f32 to vector<8x128xf32>
    %72 = arith.mulf %71, %70 : vector<8x128xf32>
    %73 = math.tanh %72 : vector<8x128xf32>
    %cst_24 = arith.constant 1.000000e+00 : f32
    %74 = vector.broadcast %cst_24 : f32 to vector<8x128xf32>
    %75 = arith.addf %73, %74 : vector<8x128xf32>
    %cst_25 = arith.constant 5.000000e-01 : f32
    %76 = vector.broadcast %cst_25 : f32 to vector<8x128xf32>
    %77 = arith.mulf %76, %75 : vector<8x128xf32>
    %78 = arith.mulf %53, %61 : vector<8x128xf32>
    %79 = arith.mulf %6, %69 : vector<8x128xf32>
    %80 = arith.addf %78, %79 : vector<8x128xf32>
    %81 = math.tanh %80 : vector<8x128xf32>
    %82 = arith.mulf %81, %77 : vector<8x128xf32>
    %c8_i32_26 = arith.constant 8 : i32
    %83 = arith.muli %c0_i32_6, %c8_i32_26 : i32
    %84 = tpu.assume_multiple %83, 8 : i32
    %85 = arith.index_cast %84 : i32 to index
    %c0_27 = arith.constant 0 : index
    %86 = vector.load %arg9[%85, %c0_27] : memref<64x128xf32, #tpu.memory_space<vmem>>, vector<8x128xf32>
    tpu.vector_store %arg9[%85, %c0_27], %82 {strides = array<i32>} : memref<64x128xf32, #tpu.memory_space<vmem>>, vector<8x128xf32>,
    %c1_i32_28 = arith.constant 1 : i32
    %87 = arith.addi %4, %c1_i32_28 : i32
    %c8_i32_29 = arith.constant 8 : i32
    %88 = arith.muli %87, %c8_i32_29 : i32
    %c0_i32_30 = arith.constant 0 : i32
    %89 = arith.addi %88, %c0_i32_30 : i32
    %90 = arith.index_cast %89 : i32 to index
    %91 = memref.load %arg1[%90] : memref<128xi32, #tpu.memory_space<smem>>
    %92 = arith.index_cast %91 : i32 to index
    %c0_31 = arith.constant 0 : index
    %93 = vector.load %arg2[%92, %c0_31] : memref<32x512xf32, #tpu.memory_space<vmem>>, vector<1x512xf32>
    %c1_i32_32 = arith.constant 1 : i32
    %94 = arith.addi %88, %c1_i32_32 : i32
    %95 = arith.index_cast %94 : i32 to index
    %96 = memref.load %arg1[%95] : memref<128xi32, #tpu.memory_space<smem>>
    %97 = arith.index_cast %96 : i32 to index
    %c0_33 = arith.constant 0 : index
    %98 = vector.load %arg2[%97, %c0_33] : memref<32x512xf32, #tpu.memory_space<vmem>>, vector<1x512xf32>
    %c2_i32_34 = arith.constant 2 : i32
    %99 = arith.addi %88, %c2_i32_34 : i32
    %100 = arith.index_cast %99 : i32 to index
    %101 = memref.load %arg1[%100] : memref<128xi32, #tpu.memory_space<smem>>
    %102 = arith.index_cast %101 : i32 to index
    %c0_35 = arith.constant 0 : index
    %103 = vector.load %arg2[%102, %c0_35] : memref<32x512xf32, #tpu.memory_space<vmem>>, vector<1x512xf32>
    %c3_i32_36 = arith.constant 3 : i32
    %104 = arith.addi %88, %c3_i32_36 : i32
    %105 = arith.index_cast %104 : i32 to index
    %106 = memref.load %arg1[%105] : memref<128xi32, #tpu.memory_space<smem>>
    %107 = arith.index_cast %106 : i32 to index
    %c0_37 = arith.constant 0 : index
    %108 = vector.load %arg2[%107, %c0_37] : memref<32x512xf32, #tpu.memory_space<vmem>>, vector<1x512xf32>
    %c4_i32_38 = arith.constant 4 : i32
    %109 = arith.addi %88, %c4_i32_38 : i32
    %110 = arith.index_cast %109 : i32 to index
    %111 = memref.load %arg1[%110] : memref<128xi32, #tpu.memory_space<smem>>
    %112 = arith.index_cast %111 : i32 to index
    %c0_39 = arith.constant 0 : index
    %113 = vector.load %arg2[%112, %c0_39] : memref<32x512xf32, #tpu.memory_space<vmem>>, vector<1x512xf32>
    %c5_i32_40 = arith.constant 5 : i32
    %114 = arith.addi %88, %c5_i32_40 : i32
    %115 = arith.index_cast %114 : i32 to index
    %116 = memref.load %arg1[%115] : memref<128xi32, #tpu.memory_space<smem>>
    %117 = arith.index_cast %116 : i32 to index
    %c0_41 = arith.constant 0 : index
    %118 = vector.load %arg2[%117, %c0_41] : memref<32x512xf32, #tpu.memory_space<vmem>>, vector<1x512xf32>
    %c6_i32_42 = arith.constant 6 : i32
    %119 = arith.addi %88, %c6_i32_42 : i32
    %120 = arith.index_cast %119 : i32 to index
    %121 = memref.load %arg1[%120] : memref<128xi32, #tpu.memory_space<smem>>
    %122 = arith.index_cast %121 : i32 to index
    %c0_43 = arith.constant 0 : index
    %123 = vector.load %arg2[%122, %c0_43] : memref<32x512xf32, #tpu.memory_space<vmem>>, vector<1x512xf32>
    %c7_i32_44 = arith.constant 7 : i32
    %124 = arith.addi %88, %c7_i32_44 : i32
    %125 = arith.index_cast %124 : i32 to index
    %126 = memref.load %arg1[%125] : memref<128xi32, #tpu.memory_space<smem>>
    %127 = arith.index_cast %126 : i32 to index
    %c0_45 = arith.constant 0 : index
    %128 = vector.load %arg2[%127, %c0_45] : memref<32x512xf32, #tpu.memory_space<vmem>>, vector<1x512xf32>
    %129 = tpu.concatenate %93, %98, %103, %108, %113, %118, %123, %128 in 0 : vector<1x512xf32>, vector<1x512xf32>, vector<1x512xf32>, vector<1x512xf32>, vector<1x512xf32>, vector<1x512xf32>, vector<1x512xf32>, vector<1x512xf32> -> vector<8x512xf32>
    %cst_46 = arith.constant dense<0.000000e+00> : vector<8x512xf32>
    %130 = tpu.matmul %82, %3, %cst_46 {dimension_numbers = #tpu.dot_dimension_numbers<[1], [0], [0], [1], [0, 0, 1, 1], [], []>} : vector<8x128xf32>, vector<128x512xf32>, vector<8x512xf32> -> vector<8x512xf32>
    %131 = arith.addf %130, %129 : vector<8x512xf32>
    %132 = vector.extract_strided_slice %131 {offsets = [0, 0], sizes = [8, 128], strides = [1, 1]} : vector<8x512xf32> to vector<8x128xf32>
    %133 = math.tanh %132 : vector<8x128xf32>
    %134 = vector.extract_strided_slice %131 {offsets = [0, 128], sizes = [8, 128], strides = [1, 1]} : vector<8x512xf32> to vector<8x128xf32>
    %cst_47 = arith.constant 5.000000e-01 : f32
    %135 = vector.broadcast %cst_47 : f32 to vector<8x128xf32>
    %136 = arith.mulf %135, %134 : vector<8x128xf32>
    %137 = math.tanh %136 : vector<8x128xf32>
    %cst_48 = arith.constant 1.000000e+00 : f32
    %138 = vector.broadcast %cst_48 : f32 to vector<8x128xf32>
    %139 = arith.addf %137, %138 : vector<8x128xf32>
    %cst_49 = arith.constant 5.000000e-01 : f32
    %140 = vector.broadcast %cst_49 : f32 to vector<8x128xf32>
    %141 = arith.mulf %140, %139 : vector<8x128xf32>
    %142 = vector.extract_strided_slice %131 {offsets = [0, 256], sizes = [8, 128], strides = [1, 1]} : vector<8x512xf32> to vector<8x128xf32>
    %cst_50 = arith.constant 5.000000e-01 : f32
    %143 = vector.broadcast %cst_50 : f32 to vector<8x128xf32>
    %144 = arith.mulf %143, %142 : vector<8x128xf32>
    %145 = math.tanh %144 : vector<8x128xf32>
    %cst_51 = arith.constant 1.000000e+00 : f32
    %146 = vector.broadcast %cst_51 : f32 to vector<8x128xf32>
    %147 = arith.addf %145, %146 : vector<8x128xf32>
    %cst_52 = arith.constant 5.000000e-01 : f32
    %148 = vector.broadcast %cst_52 : f32 to vector<8x128xf32>
    %149 = arith.mulf %148, %147 : vector<8x128xf32>
    %150 = vector.extract_strided_slice %131 {offsets = [0, 384], sizes = [8, 128], strides = [1, 1]} : vector<8x512xf32> to vector<8x128xf32>
    %cst_53 = arith.constant 5.000000e-01 : f32
    %151 = vector.broadcast %cst_53 : f32 to vector<8x128xf32>
    %152 = arith.mulf %151, %150 : vector<8x128xf32>
    %153 = math.tanh %152 : vector<8x128xf32>
    %cst_54 = arith.constant 1.000000e+00 : f32
    %154 = vector.broadcast %cst_54 : f32 to vector<8x128xf32>
    %155 = arith.addf %153, %154 : vector<8x128xf32>
    %cst_55 = arith.constant 5.000000e-01 : f32
    %156 = vector.broadcast %cst_55 : f32 to vector<8x128xf32>
    %157 = arith.mulf %156, %155 : vector<8x128xf32>
    %158 = arith.mulf %133, %141 : vector<8x128xf32>
    %159 = arith.mulf %80, %149 : vector<8x128xf32>
    %160 = arith.addf %158, %159 : vector<8x128xf32>
    %161 = math.tanh %160 : vector<8x128xf32>
    %162 = arith.mulf %161, %157 : vector<8x128xf32>
    %c8_i32_56 = arith.constant 8 : i32
    %163 = arith.muli %c1_i32_28, %c8_i32_56 : i32
    %164 = tpu.assume_multiple %163, 8 : i32
    %165 = arith.index_cast %164 : i32 to index
    %c0_57 = arith.constant 0 : index
    %166 = vector.load %arg9[%165, %c0_57] : memref<64x128xf32, #tpu.memory_space<vmem>>, vector<8x128xf32>
    tpu.vector_store %arg9[%165, %c0_57], %162 {strides = array<i32>} : memref<64x128xf32, #tpu.memory_space<vmem>>, vector<8x128xf32>,
    %c2_i32_58 = arith.constant 2 : i32
    %167 = arith.addi %4, %c2_i32_58 : i32
    %c8_i32_59 = arith.constant 8 : i32
    %168 = arith.muli %167, %c8_i32_59 : i32
    %c0_i32_60 = arith.constant 0 : i32
    %169 = arith.addi %168, %c0_i32_60 : i32
    %170 = arith.index_cast %169 : i32 to index
    %171 = memref.load %arg1[%170] : memref<128xi32, #tpu.memory_space<smem>>
    %172 = arith.index_cast %171 : i32 to index
    %c0_61 = arith.constant 0 : index
    %173 = vector.load %arg2[%172, %c0_61] : memref<32x512xf32, #tpu.memory_space<vmem>>, vector<1x512xf32>
    %c1_i32_62 = arith.constant 1 : i32
    %174 = arith.addi %168, %c1_i32_62 : i32
    %175 = arith.index_cast %174 : i32 to index
    %176 = memref.load %arg1[%175] : memref<128xi32, #tpu.memory_space<smem>>
    %177 = arith.index_cast %176 : i32 to index
    %c0_63 = arith.constant 0 : index
    %178 = vector.load %arg2[%177, %c0_63] : memref<32x512xf32, #tpu.memory_space<vmem>>, vector<1x512xf32>
    %c2_i32_64 = arith.constant 2 : i32
    %179 = arith.addi %168, %c2_i32_64 : i32
    %180 = arith.index_cast %179 : i32 to index
    %181 = memref.load %arg1[%180] : memref<128xi32, #tpu.memory_space<smem>>
    %182 = arith.index_cast %181 : i32 to index
    %c0_65 = arith.constant 0 : index
    %183 = vector.load %arg2[%182, %c0_65] : memref<32x512xf32, #tpu.memory_space<vmem>>, vector<1x512xf32>
    %c3_i32_66 = arith.constant 3 : i32
    %184 = arith.addi %168, %c3_i32_66 : i32
    %185 = arith.index_cast %184 : i32 to index
    %186 = memref.load %arg1[%185] : memref<128xi32, #tpu.memory_space<smem>>
    %187 = arith.index_cast %186 : i32 to index
    %c0_67 = arith.constant 0 : index
    %188 = vector.load %arg2[%187, %c0_67] : memref<32x512xf32, #tpu.memory_space<vmem>>, vector<1x512xf32>
    %c4_i32_68 = arith.constant 4 : i32
    %189 = arith.addi %168, %c4_i32_68 : i32
    %190 = arith.index_cast %189 : i32 to index
    %191 = memref.load %arg1[%190] : memref<128xi32, #tpu.memory_space<smem>>
    %192 = arith.index_cast %191 : i32 to index
    %c0_69 = arith.constant 0 : index
    %193 = vector.load %arg2[%192, %c0_69] : memref<32x512xf32, #tpu.memory_space<vmem>>, vector<1x512xf32>
    %c5_i32_70 = arith.constant 5 : i32
    %194 = arith.addi %168, %c5_i32_70 : i32
    %195 = arith.index_cast %194 : i32 to index
    %196 = memref.load %arg1[%195] : memref<128xi32, #tpu.memory_space<smem>>
    %197 = arith.index_cast %196 : i32 to index
    %c0_71 = arith.constant 0 : index
    %198 = vector.load %arg2[%197, %c0_71] : memref<32x512xf32, #tpu.memory_space<vmem>>, vector<1x512xf32>
    %c6_i32_72 = arith.constant 6 : i32
    %199 = arith.addi %168, %c6_i32_72 : i32
    %200 = arith.index_cast %199 : i32 to index
    %201 = memref.load %arg1[%200] : memref<128xi32, #tpu.memory_space<smem>>
    %202 = arith.index_cast %201 : i32 to index
    %c0_73 = arith.constant 0 : index
    %203 = vector.load %arg2[%202, %c0_73] : memref<32x512xf32, #tpu.memory_space<vmem>>, vector<1x512xf32>
    %c7_i32_74 = arith.constant 7 : i32
    %204 = arith.addi %168, %c7_i32_74 : i32
    %205 = arith.index_cast %204 : i32 to index
    %206 = memref.load %arg1[%205] : memref<128xi32, #tpu.memory_space<smem>>
    %207 = arith.index_cast %206 : i32 to index
    %c0_75 = arith.constant 0 : index
    %208 = vector.load %arg2[%207, %c0_75] : memref<32x512xf32, #tpu.memory_space<vmem>>, vector<1x512xf32>
    %209 = tpu.concatenate %173, %178, %183, %188, %193, %198, %203, %208 in 0 : vector<1x512xf32>, vector<1x512xf32>, vector<1x512xf32>, vector<1x512xf32>, vector<1x512xf32>, vector<1x512xf32>, vector<1x512xf32>, vector<1x512xf32> -> vector<8x512xf32>
    %cst_76 = arith.constant dense<0.000000e+00> : vector<8x512xf32>
    %210 = tpu.matmul %162, %3, %cst_76 {dimension_numbers = #tpu.dot_dimension_numbers<[1], [0], [0], [1], [0, 0, 1, 1], [], []>} : vector<8x128xf32>, vector<128x512xf32>, vector<8x512xf32> -> vector<8x512xf32>
    %211 = arith.addf %210, %209 : vector<8x512xf32>
    %212 = vector.extract_strided_slice %211 {offsets = [0, 0], sizes = [8, 128], strides = [1, 1]} : vector<8x512xf32> to vector<8x128xf32>
    %213 = math.tanh %212 : vector<8x128xf32>
    %214 = vector.extract_strided_slice %211 {offsets = [0, 128], sizes = [8, 128], strides = [1, 1]} : vector<8x512xf32> to vector<8x128xf32>
    %cst_77 = arith.constant 5.000000e-01 : f32
    %215 = vector.broadcast %cst_77 : f32 to vector<8x128xf32>
    %216 = arith.mulf %215, %214 : vector<8x128xf32>
    %217 = math.tanh %216 : vector<8x128xf32>
    %cst_78 = arith.constant 1.000000e+00 : f32
    %218 = vector.broadcast %cst_78 : f32 to vector<8x128xf32>
    %219 = arith.addf %217, %218 : vector<8x128xf32>
    %cst_79 = arith.constant 5.000000e-01 : f32
    %220 = vector.broadcast %cst_79 : f32 to vector<8x128xf32>
    %221 = arith.mulf %220, %219 : vector<8x128xf32>
    %222 = vector.extract_strided_slice %211 {offsets = [0, 256], sizes = [8, 128], strides = [1, 1]} : vector<8x512xf32> to vector<8x128xf32>
    %cst_80 = arith.constant 5.000000e-01 : f32
    %223 = vector.broadcast %cst_80 : f32 to vector<8x128xf32>
    %224 = arith.mulf %223, %222 : vector<8x128xf32>
    %225 = math.tanh %224 : vector<8x128xf32>
    %cst_81 = arith.constant 1.000000e+00 : f32
    %226 = vector.broadcast %cst_81 : f32 to vector<8x128xf32>
    %227 = arith.addf %225, %226 : vector<8x128xf32>
    %cst_82 = arith.constant 5.000000e-01 : f32
    %228 = vector.broadcast %cst_82 : f32 to vector<8x128xf32>
    %229 = arith.mulf %228, %227 : vector<8x128xf32>
    %230 = vector.extract_strided_slice %211 {offsets = [0, 384], sizes = [8, 128], strides = [1, 1]} : vector<8x512xf32> to vector<8x128xf32>
    %cst_83 = arith.constant 5.000000e-01 : f32
    %231 = vector.broadcast %cst_83 : f32 to vector<8x128xf32>
    %232 = arith.mulf %231, %230 : vector<8x128xf32>
    %233 = math.tanh %232 : vector<8x128xf32>
    %cst_84 = arith.constant 1.000000e+00 : f32
    %234 = vector.broadcast %cst_84 : f32 to vector<8x128xf32>
    %235 = arith.addf %233, %234 : vector<8x128xf32>
    %cst_85 = arith.constant 5.000000e-01 : f32
    %236 = vector.broadcast %cst_85 : f32 to vector<8x128xf32>
    %237 = arith.mulf %236, %235 : vector<8x128xf32>
    %238 = arith.mulf %213, %221 : vector<8x128xf32>
    %239 = arith.mulf %160, %229 : vector<8x128xf32>
    %240 = arith.addf %238, %239 : vector<8x128xf32>
    %241 = math.tanh %240 : vector<8x128xf32>
    %242 = arith.mulf %241, %237 : vector<8x128xf32>
    %c8_i32_86 = arith.constant 8 : i32
    %243 = arith.muli %c2_i32_58, %c8_i32_86 : i32
    %244 = tpu.assume_multiple %243, 8 : i32
    %245 = arith.index_cast %244 : i32 to index
    %c0_87 = arith.constant 0 : index
    %246 = vector.load %arg9[%245, %c0_87] : memref<64x128xf32, #tpu.memory_space<vmem>>, vector<8x128xf32>
    tpu.vector_store %arg9[%245, %c0_87], %242 {strides = array<i32>} : memref<64x128xf32, #tpu.memory_space<vmem>>, vector<8x128xf32>,
    %c3_i32_88 = arith.constant 3 : i32
    %247 = arith.addi %4, %c3_i32_88 : i32
    %c8_i32_89 = arith.constant 8 : i32
    %248 = arith.muli %247, %c8_i32_89 : i32
    %c0_i32_90 = arith.constant 0 : i32
    %249 = arith.addi %248, %c0_i32_90 : i32
    %250 = arith.index_cast %249 : i32 to index
    %251 = memref.load %arg1[%250] : memref<128xi32, #tpu.memory_space<smem>>
    %252 = arith.index_cast %251 : i32 to index
    %c0_91 = arith.constant 0 : index
    %253 = vector.load %arg2[%252, %c0_91] : memref<32x512xf32, #tpu.memory_space<vmem>>, vector<1x512xf32>
    %c1_i32_92 = arith.constant 1 : i32
    %254 = arith.addi %248, %c1_i32_92 : i32
    %255 = arith.index_cast %254 : i32 to index
    %256 = memref.load %arg1[%255] : memref<128xi32, #tpu.memory_space<smem>>
    %257 = arith.index_cast %256 : i32 to index
    %c0_93 = arith.constant 0 : index
    %258 = vector.load %arg2[%257, %c0_93] : memref<32x512xf32, #tpu.memory_space<vmem>>, vector<1x512xf32>
    %c2_i32_94 = arith.constant 2 : i32
    %259 = arith.addi %248, %c2_i32_94 : i32
    %260 = arith.index_cast %259 : i32 to index
    %261 = memref.load %arg1[%260] : memref<128xi32, #tpu.memory_space<smem>>
    %262 = arith.index_cast %261 : i32 to index
    %c0_95 = arith.constant 0 : index
    %263 = vector.load %arg2[%262, %c0_95] : memref<32x512xf32, #tpu.memory_space<vmem>>, vector<1x512xf32>
    %c3_i32_96 = arith.constant 3 : i32
    %264 = arith.addi %248, %c3_i32_96 : i32
    %265 = arith.index_cast %264 : i32 to index
    %266 = memref.load %arg1[%265] : memref<128xi32, #tpu.memory_space<smem>>
    %267 = arith.index_cast %266 : i32 to index
    %c0_97 = arith.constant 0 : index
    %268 = vector.load %arg2[%267, %c0_97] : memref<32x512xf32, #tpu.memory_space<vmem>>, vector<1x512xf32>
    %c4_i32_98 = arith.constant 4 : i32
    %269 = arith.addi %248, %c4_i32_98 : i32
    %270 = arith.index_cast %269 : i32 to index
    %271 = memref.load %arg1[%270] : memref<128xi32, #tpu.memory_space<smem>>
    %272 = arith.index_cast %271 : i32 to index
    %c0_99 = arith.constant 0 : index
    %273 = vector.load %arg2[%272, %c0_99] : memref<32x512xf32, #tpu.memory_space<vmem>>, vector<1x512xf32>
    %c5_i32_100 = arith.constant 5 : i32
    %274 = arith.addi %248, %c5_i32_100 : i32
    %275 = arith.index_cast %274 : i32 to index
    %276 = memref.load %arg1[%275] : memref<128xi32, #tpu.memory_space<smem>>
    %277 = arith.index_cast %276 : i32 to index
    %c0_101 = arith.constant 0 : index
    %278 = vector.load %arg2[%277, %c0_101] : memref<32x512xf32, #tpu.memory_space<vmem>>, vector<1x512xf32>
    %c6_i32_102 = arith.constant 6 : i32
    %279 = arith.addi %248, %c6_i32_102 : i32
    %280 = arith.index_cast %279 : i32 to index
    %281 = memref.load %arg1[%280] : memref<128xi32, #tpu.memory_space<smem>>
    %282 = arith.index_cast %281 : i32 to index
    %c0_103 = arith.constant 0 : index
    %283 = vector.load %arg2[%282, %c0_103] : memref<32x512xf32, #tpu.memory_space<vmem>>, vector<1x512xf32>
    %c7_i32_104 = arith.constant 7 : i32
    %284 = arith.addi %248, %c7_i32_104 : i32
    %285 = arith.index_cast %284 : i32 to index
    %286 = memref.load %arg1[%285] : memref<128xi32, #tpu.memory_space<smem>>
    %287 = arith.index_cast %286 : i32 to index
    %c0_105 = arith.constant 0 : index
    %288 = vector.load %arg2[%287, %c0_105] : memref<32x512xf32, #tpu.memory_space<vmem>>, vector<1x512xf32>
    %289 = tpu.concatenate %253, %258, %263, %268, %273, %278, %283, %288 in 0 : vector<1x512xf32>, vector<1x512xf32>, vector<1x512xf32>, vector<1x512xf32>, vector<1x512xf32>, vector<1x512xf32>, vector<1x512xf32>, vector<1x512xf32> -> vector<8x512xf32>
    %cst_106 = arith.constant dense<0.000000e+00> : vector<8x512xf32>
    %290 = tpu.matmul %242, %3, %cst_106 {dimension_numbers = #tpu.dot_dimension_numbers<[1], [0], [0], [1], [0, 0, 1, 1], [], []>} : vector<8x128xf32>, vector<128x512xf32>, vector<8x512xf32> -> vector<8x512xf32>
    %291 = arith.addf %290, %289 : vector<8x512xf32>
    %292 = vector.extract_strided_slice %291 {offsets = [0, 0], sizes = [8, 128], strides = [1, 1]} : vector<8x512xf32> to vector<8x128xf32>
    %293 = math.tanh %292 : vector<8x128xf32>
    %294 = vector.extract_strided_slice %291 {offsets = [0, 128], sizes = [8, 128], strides = [1, 1]} : vector<8x512xf32> to vector<8x128xf32>
    %cst_107 = arith.constant 5.000000e-01 : f32
    %295 = vector.broadcast %cst_107 : f32 to vector<8x128xf32>
    %296 = arith.mulf %295, %294 : vector<8x128xf32>
    %297 = math.tanh %296 : vector<8x128xf32>
    %cst_108 = arith.constant 1.000000e+00 : f32
    %298 = vector.broadcast %cst_108 : f32 to vector<8x128xf32>
    %299 = arith.addf %297, %298 : vector<8x128xf32>
    %cst_109 = arith.constant 5.000000e-01 : f32
    %300 = vector.broadcast %cst_109 : f32 to vector<8x128xf32>
    %301 = arith.mulf %300, %299 : vector<8x128xf32>
    %302 = vector.extract_strided_slice %291 {offsets = [0, 256], sizes = [8, 128], strides = [1, 1]} : vector<8x512xf32> to vector<8x128xf32>
    %cst_110 = arith.constant 5.000000e-01 : f32
    %303 = vector.broadcast %cst_110 : f32 to vector<8x128xf32>
    %304 = arith.mulf %303, %302 : vector<8x128xf32>
    %305 = math.tanh %304 : vector<8x128xf32>
    %cst_111 = arith.constant 1.000000e+00 : f32
    %306 = vector.broadcast %cst_111 : f32 to vector<8x128xf32>
    %307 = arith.addf %305, %306 : vector<8x128xf32>
    %cst_112 = arith.constant 5.000000e-01 : f32
    %308 = vector.broadcast %cst_112 : f32 to vector<8x128xf32>
    %309 = arith.mulf %308, %307 : vector<8x128xf32>
    %310 = vector.extract_strided_slice %291 {offsets = [0, 384], sizes = [8, 128], strides = [1, 1]} : vector<8x512xf32> to vector<8x128xf32>
    %cst_113 = arith.constant 5.000000e-01 : f32
    %311 = vector.broadcast %cst_113 : f32 to vector<8x128xf32>
    %312 = arith.mulf %311, %310 : vector<8x128xf32>
    %313 = math.tanh %312 : vector<8x128xf32>
    %cst_114 = arith.constant 1.000000e+00 : f32
    %314 = vector.broadcast %cst_114 : f32 to vector<8x128xf32>
    %315 = arith.addf %313, %314 : vector<8x128xf32>
    %cst_115 = arith.constant 5.000000e-01 : f32
    %316 = vector.broadcast %cst_115 : f32 to vector<8x128xf32>
    %317 = arith.mulf %316, %315 : vector<8x128xf32>
    %318 = arith.mulf %293, %301 : vector<8x128xf32>
    %319 = arith.mulf %240, %309 : vector<8x128xf32>
    %320 = arith.addf %318, %319 : vector<8x128xf32>
    %321 = math.tanh %320 : vector<8x128xf32>
    %322 = arith.mulf %321, %317 : vector<8x128xf32>
    %c8_i32_116 = arith.constant 8 : i32
    %323 = arith.muli %c3_i32_88, %c8_i32_116 : i32
    %324 = tpu.assume_multiple %323, 8 : i32
    %325 = arith.index_cast %324 : i32 to index
    %c0_117 = arith.constant 0 : index
    %326 = vector.load %arg9[%325, %c0_117] : memref<64x128xf32, #tpu.memory_space<vmem>>, vector<8x128xf32>
    tpu.vector_store %arg9[%325, %c0_117], %322 {strides = array<i32>} : memref<64x128xf32, #tpu.memory_space<vmem>>, vector<8x128xf32>,
    %c4_i32_118 = arith.constant 4 : i32
    %327 = arith.addi %4, %c4_i32_118 : i32
    %c8_i32_119 = arith.constant 8 : i32
    %328 = arith.muli %327, %c8_i32_119 : i32
    %c0_i32_120 = arith.constant 0 : i32
    %329 = arith.addi %328, %c0_i32_120 : i32
    %330 = arith.index_cast %329 : i32 to index
    %331 = memref.load %arg1[%330] : memref<128xi32, #tpu.memory_space<smem>>
    %332 = arith.index_cast %331 : i32 to index
    %c0_121 = arith.constant 0 : index
    %333 = vector.load %arg2[%332, %c0_121] : memref<32x512xf32, #tpu.memory_space<vmem>>, vector<1x512xf32>
    %c1_i32_122 = arith.constant 1 : i32
    %334 = arith.addi %328, %c1_i32_122 : i32
    %335 = arith.index_cast %334 : i32 to index
    %336 = memref.load %arg1[%335] : memref<128xi32, #tpu.memory_space<smem>>
    %337 = arith.index_cast %336 : i32 to index
    %c0_123 = arith.constant 0 : index
    %338 = vector.load %arg2[%337, %c0_123] : memref<32x512xf32, #tpu.memory_space<vmem>>, vector<1x512xf32>
    %c2_i32_124 = arith.constant 2 : i32
    %339 = arith.addi %328, %c2_i32_124 : i32
    %340 = arith.index_cast %339 : i32 to index
    %341 = memref.load %arg1[%340] : memref<128xi32, #tpu.memory_space<smem>>
    %342 = arith.index_cast %341 : i32 to index
    %c0_125 = arith.constant 0 : index
    %343 = vector.load %arg2[%342, %c0_125] : memref<32x512xf32, #tpu.memory_space<vmem>>, vector<1x512xf32>
    %c3_i32_126 = arith.constant 3 : i32
    %344 = arith.addi %328, %c3_i32_126 : i32
    %345 = arith.index_cast %344 : i32 to index
    %346 = memref.load %arg1[%345] : memref<128xi32, #tpu.memory_space<smem>>
    %347 = arith.index_cast %346 : i32 to index
    %c0_127 = arith.constant 0 : index
    %348 = vector.load %arg2[%347, %c0_127] : memref<32x512xf32, #tpu.memory_space<vmem>>, vector<1x512xf32>
    %c4_i32_128 = arith.constant 4 : i32
    %349 = arith.addi %328, %c4_i32_128 : i32
    %350 = arith.index_cast %349 : i32 to index
    %351 = memref.load %arg1[%350] : memref<128xi32, #tpu.memory_space<smem>>
    %352 = arith.index_cast %351 : i32 to index
    %c0_129 = arith.constant 0 : index
    %353 = vector.load %arg2[%352, %c0_129] : memref<32x512xf32, #tpu.memory_space<vmem>>, vector<1x512xf32>
    %c5_i32_130 = arith.constant 5 : i32
    %354 = arith.addi %328, %c5_i32_130 : i32
    %355 = arith.index_cast %354 : i32 to index
    %356 = memref.load %arg1[%355] : memref<128xi32, #tpu.memory_space<smem>>
    %357 = arith.index_cast %356 : i32 to index
    %c0_131 = arith.constant 0 : index
    %358 = vector.load %arg2[%357, %c0_131] : memref<32x512xf32, #tpu.memory_space<vmem>>, vector<1x512xf32>
    %c6_i32_132 = arith.constant 6 : i32
    %359 = arith.addi %328, %c6_i32_132 : i32
    %360 = arith.index_cast %359 : i32 to index
    %361 = memref.load %arg1[%360] : memref<128xi32, #tpu.memory_space<smem>>
    %362 = arith.index_cast %361 : i32 to index
    %c0_133 = arith.constant 0 : index
    %363 = vector.load %arg2[%362, %c0_133] : memref<32x512xf32, #tpu.memory_space<vmem>>, vector<1x512xf32>
    %c7_i32_134 = arith.constant 7 : i32
    %364 = arith.addi %328, %c7_i32_134 : i32
    %365 = arith.index_cast %364 : i32 to index
    %366 = memref.load %arg1[%365] : memref<128xi32, #tpu.memory_space<smem>>
    %367 = arith.index_cast %366 : i32 to index
    %c0_135 = arith.constant 0 : index
    %368 = vector.load %arg2[%367, %c0_135] : memref<32x512xf32, #tpu.memory_space<vmem>>, vector<1x512xf32>
    %369 = tpu.concatenate %333, %338, %343, %348, %353, %358, %363, %368 in 0 : vector<1x512xf32>, vector<1x512xf32>, vector<1x512xf32>, vector<1x512xf32>, vector<1x512xf32>, vector<1x512xf32>, vector<1x512xf32>, vector<1x512xf32> -> vector<8x512xf32>
    %cst_136 = arith.constant dense<0.000000e+00> : vector<8x512xf32>
    %370 = tpu.matmul %322, %3, %cst_136 {dimension_numbers = #tpu.dot_dimension_numbers<[1], [0], [0], [1], [0, 0, 1, 1], [], []>} : vector<8x128xf32>, vector<128x512xf32>, vector<8x512xf32> -> vector<8x512xf32>
    %371 = arith.addf %370, %369 : vector<8x512xf32>
    %372 = vector.extract_strided_slice %371 {offsets = [0, 0], sizes = [8, 128], strides = [1, 1]} : vector<8x512xf32> to vector<8x128xf32>
    %373 = math.tanh %372 : vector<8x128xf32>
    %374 = vector.extract_strided_slice %371 {offsets = [0, 128], sizes = [8, 128], strides = [1, 1]} : vector<8x512xf32> to vector<8x128xf32>
    %cst_137 = arith.constant 5.000000e-01 : f32
    %375 = vector.broadcast %cst_137 : f32 to vector<8x128xf32>
    %376 = arith.mulf %375, %374 : vector<8x128xf32>
    %377 = math.tanh %376 : vector<8x128xf32>
    %cst_138 = arith.constant 1.000000e+00 : f32
    %378 = vector.broadcast %cst_138 : f32 to vector<8x128xf32>
    %379 = arith.addf %377, %378 : vector<8x128xf32>
    %cst_139 = arith.constant 5.000000e-01 : f32
    %380 = vector.broadcast %cst_139 : f32 to vector<8x128xf32>
    %381 = arith.mulf %380, %379 : vector<8x128xf32>
    %382 = vector.extract_strided_slice %371 {offsets = [0, 256], sizes = [8, 128], strides = [1, 1]} : vector<8x512xf32> to vector<8x128xf32>
    %cst_140 = arith.constant 5.000000e-01 : f32
    %383 = vector.broadcast %cst_140 : f32 to vector<8x128xf32>
    %384 = arith.mulf %383, %382 : vector<8x128xf32>
    %385 = math.tanh %384 : vector<8x128xf32>
    %cst_141 = arith.constant 1.000000e+00 : f32
    %386 = vector.broadcast %cst_141 : f32 to vector<8x128xf32>
    %387 = arith.addf %385, %386 : vector<8x128xf32>
    %cst_142 = arith.constant 5.000000e-01 : f32
    %388 = vector.broadcast %cst_142 : f32 to vector<8x128xf32>
    %389 = arith.mulf %388, %387 : vector<8x128xf32>
    %390 = vector.extract_strided_slice %371 {offsets = [0, 384], sizes = [8, 128], strides = [1, 1]} : vector<8x512xf32> to vector<8x128xf32>
    %cst_143 = arith.constant 5.000000e-01 : f32
    %391 = vector.broadcast %cst_143 : f32 to vector<8x128xf32>
    %392 = arith.mulf %391, %390 : vector<8x128xf32>
    %393 = math.tanh %392 : vector<8x128xf32>
    %cst_144 = arith.constant 1.000000e+00 : f32
    %394 = vector.broadcast %cst_144 : f32 to vector<8x128xf32>
    %395 = arith.addf %393, %394 : vector<8x128xf32>
    %cst_145 = arith.constant 5.000000e-01 : f32
    %396 = vector.broadcast %cst_145 : f32 to vector<8x128xf32>
    %397 = arith.mulf %396, %395 : vector<8x128xf32>
    %398 = arith.mulf %373, %381 : vector<8x128xf32>
    %399 = arith.mulf %320, %389 : vector<8x128xf32>
    %400 = arith.addf %398, %399 : vector<8x128xf32>
    %401 = math.tanh %400 : vector<8x128xf32>
    %402 = arith.mulf %401, %397 : vector<8x128xf32>
    %c8_i32_146 = arith.constant 8 : i32
    %403 = arith.muli %c4_i32_118, %c8_i32_146 : i32
    %404 = tpu.assume_multiple %403, 8 : i32
    %405 = arith.index_cast %404 : i32 to index
    %c0_147 = arith.constant 0 : index
    %406 = vector.load %arg9[%405, %c0_147] : memref<64x128xf32, #tpu.memory_space<vmem>>, vector<8x128xf32>
    tpu.vector_store %arg9[%405, %c0_147], %402 {strides = array<i32>} : memref<64x128xf32, #tpu.memory_space<vmem>>, vector<8x128xf32>,
    %c5_i32_148 = arith.constant 5 : i32
    %407 = arith.addi %4, %c5_i32_148 : i32
    %c8_i32_149 = arith.constant 8 : i32
    %408 = arith.muli %407, %c8_i32_149 : i32
    %c0_i32_150 = arith.constant 0 : i32
    %409 = arith.addi %408, %c0_i32_150 : i32
    %410 = arith.index_cast %409 : i32 to index
    %411 = memref.load %arg1[%410] : memref<128xi32, #tpu.memory_space<smem>>
    %412 = arith.index_cast %411 : i32 to index
    %c0_151 = arith.constant 0 : index
    %413 = vector.load %arg2[%412, %c0_151] : memref<32x512xf32, #tpu.memory_space<vmem>>, vector<1x512xf32>
    %c1_i32_152 = arith.constant 1 : i32
    %414 = arith.addi %408, %c1_i32_152 : i32
    %415 = arith.index_cast %414 : i32 to index
    %416 = memref.load %arg1[%415] : memref<128xi32, #tpu.memory_space<smem>>
    %417 = arith.index_cast %416 : i32 to index
    %c0_153 = arith.constant 0 : index
    %418 = vector.load %arg2[%417, %c0_153] : memref<32x512xf32, #tpu.memory_space<vmem>>, vector<1x512xf32>
    %c2_i32_154 = arith.constant 2 : i32
    %419 = arith.addi %408, %c2_i32_154 : i32
    %420 = arith.index_cast %419 : i32 to index
    %421 = memref.load %arg1[%420] : memref<128xi32, #tpu.memory_space<smem>>
    %422 = arith.index_cast %421 : i32 to index
    %c0_155 = arith.constant 0 : index
    %423 = vector.load %arg2[%422, %c0_155] : memref<32x512xf32, #tpu.memory_space<vmem>>, vector<1x512xf32>
    %c3_i32_156 = arith.constant 3 : i32
    %424 = arith.addi %408, %c3_i32_156 : i32
    %425 = arith.index_cast %424 : i32 to index
    %426 = memref.load %arg1[%425] : memref<128xi32, #tpu.memory_space<smem>>
    %427 = arith.index_cast %426 : i32 to index
    %c0_157 = arith.constant 0 : index
    %428 = vector.load %arg2[%427, %c0_157] : memref<32x512xf32, #tpu.memory_space<vmem>>, vector<1x512xf32>
    %c4_i32_158 = arith.constant 4 : i32
    %429 = arith.addi %408, %c4_i32_158 : i32
    %430 = arith.index_cast %429 : i32 to index
    %431 = memref.load %arg1[%430] : memref<128xi32, #tpu.memory_space<smem>>
    %432 = arith.index_cast %431 : i32 to index
    %c0_159 = arith.constant 0 : index
    %433 = vector.load %arg2[%432, %c0_159] : memref<32x512xf32, #tpu.memory_space<vmem>>, vector<1x512xf32>
    %c5_i32_160 = arith.constant 5 : i32
    %434 = arith.addi %408, %c5_i32_160 : i32
    %435 = arith.index_cast %434 : i32 to index
    %436 = memref.load %arg1[%435] : memref<128xi32, #tpu.memory_space<smem>>
    %437 = arith.index_cast %436 : i32 to index
    %c0_161 = arith.constant 0 : index
    %438 = vector.load %arg2[%437, %c0_161] : memref<32x512xf32, #tpu.memory_space<vmem>>, vector<1x512xf32>
    %c6_i32_162 = arith.constant 6 : i32
    %439 = arith.addi %408, %c6_i32_162 : i32
    %440 = arith.index_cast %439 : i32 to index
    %441 = memref.load %arg1[%440] : memref<128xi32, #tpu.memory_space<smem>>
    %442 = arith.index_cast %441 : i32 to index
    %c0_163 = arith.constant 0 : index
    %443 = vector.load %arg2[%442, %c0_163] : memref<32x512xf32, #tpu.memory_space<vmem>>, vector<1x512xf32>
    %c7_i32_164 = arith.constant 7 : i32
    %444 = arith.addi %408, %c7_i32_164 : i32
    %445 = arith.index_cast %444 : i32 to index
    %446 = memref.load %arg1[%445] : memref<128xi32, #tpu.memory_space<smem>>
    %447 = arith.index_cast %446 : i32 to index
    %c0_165 = arith.constant 0 : index
    %448 = vector.load %arg2[%447, %c0_165] : memref<32x512xf32, #tpu.memory_space<vmem>>, vector<1x512xf32>
    %449 = tpu.concatenate %413, %418, %423, %428, %433, %438, %443, %448 in 0 : vector<1x512xf32>, vector<1x512xf32>, vector<1x512xf32>, vector<1x512xf32>, vector<1x512xf32>, vector<1x512xf32>, vector<1x512xf32>, vector<1x512xf32> -> vector<8x512xf32>
    %cst_166 = arith.constant dense<0.000000e+00> : vector<8x512xf32>
    %450 = tpu.matmul %402, %3, %cst_166 {dimension_numbers = #tpu.dot_dimension_numbers<[1], [0], [0], [1], [0, 0, 1, 1], [], []>} : vector<8x128xf32>, vector<128x512xf32>, vector<8x512xf32> -> vector<8x512xf32>
    %451 = arith.addf %450, %449 : vector<8x512xf32>
    %452 = vector.extract_strided_slice %451 {offsets = [0, 0], sizes = [8, 128], strides = [1, 1]} : vector<8x512xf32> to vector<8x128xf32>
    %453 = math.tanh %452 : vector<8x128xf32>
    %454 = vector.extract_strided_slice %451 {offsets = [0, 128], sizes = [8, 128], strides = [1, 1]} : vector<8x512xf32> to vector<8x128xf32>
    %cst_167 = arith.constant 5.000000e-01 : f32
    %455 = vector.broadcast %cst_167 : f32 to vector<8x128xf32>
    %456 = arith.mulf %455, %454 : vector<8x128xf32>
    %457 = math.tanh %456 : vector<8x128xf32>
    %cst_168 = arith.constant 1.000000e+00 : f32
    %458 = vector.broadcast %cst_168 : f32 to vector<8x128xf32>
    %459 = arith.addf %457, %458 : vector<8x128xf32>
    %cst_169 = arith.constant 5.000000e-01 : f32
    %460 = vector.broadcast %cst_169 : f32 to vector<8x128xf32>
    %461 = arith.mulf %460, %459 : vector<8x128xf32>
    %462 = vector.extract_strided_slice %451 {offsets = [0, 256], sizes = [8, 128], strides = [1, 1]} : vector<8x512xf32> to vector<8x128xf32>
    %cst_170 = arith.constant 5.000000e-01 : f32
    %463 = vector.broadcast %cst_170 : f32 to vector<8x128xf32>
    %464 = arith.mulf %463, %462 : vector<8x128xf32>
    %465 = math.tanh %464 : vector<8x128xf32>
    %cst_171 = arith.constant 1.000000e+00 : f32
    %466 = vector.broadcast %cst_171 : f32 to vector<8x128xf32>
    %467 = arith.addf %465, %466 : vector<8x128xf32>
    %cst_172 = arith.constant 5.000000e-01 : f32
    %468 = vector.broadcast %cst_172 : f32 to vector<8x128xf32>
    %469 = arith.mulf %468, %467 : vector<8x128xf32>
    %470 = vector.extract_strided_slice %451 {offsets = [0, 384], sizes = [8, 128], strides = [1, 1]} : vector<8x512xf32> to vector<8x128xf32>
    %cst_173 = arith.constant 5.000000e-01 : f32
    %471 = vector.broadcast %cst_173 : f32 to vector<8x128xf32>
    %472 = arith.mulf %471, %470 : vector<8x128xf32>
    %473 = math.tanh %472 : vector<8x128xf32>
    %cst_174 = arith.constant 1.000000e+00 : f32
    %474 = vector.broadcast %cst_174 : f32 to vector<8x128xf32>
    %475 = arith.addf %473, %474 : vector<8x128xf32>
    %cst_175 = arith.constant 5.000000e-01 : f32
    %476 = vector.broadcast %cst_175 : f32 to vector<8x128xf32>
    %477 = arith.mulf %476, %475 : vector<8x128xf32>
    %478 = arith.mulf %453, %461 : vector<8x128xf32>
    %479 = arith.mulf %400, %469 : vector<8x128xf32>
    %480 = arith.addf %478, %479 : vector<8x128xf32>
    %481 = math.tanh %480 : vector<8x128xf32>
    %482 = arith.mulf %481, %477 : vector<8x128xf32>
    %c8_i32_176 = arith.constant 8 : i32
    %483 = arith.muli %c5_i32_148, %c8_i32_176 : i32
    %484 = tpu.assume_multiple %483, 8 : i32
    %485 = arith.index_cast %484 : i32 to index
    %c0_177 = arith.constant 0 : index
    %486 = vector.load %arg9[%485, %c0_177] : memref<64x128xf32, #tpu.memory_space<vmem>>, vector<8x128xf32>
    tpu.vector_store %arg9[%485, %c0_177], %482 {strides = array<i32>} : memref<64x128xf32, #tpu.memory_space<vmem>>, vector<8x128xf32>,
    %c6_i32_178 = arith.constant 6 : i32
    %487 = arith.addi %4, %c6_i32_178 : i32
    %c8_i32_179 = arith.constant 8 : i32
    %488 = arith.muli %487, %c8_i32_179 : i32
    %c0_i32_180 = arith.constant 0 : i32
    %489 = arith.addi %488, %c0_i32_180 : i32
    %490 = arith.index_cast %489 : i32 to index
    %491 = memref.load %arg1[%490] : memref<128xi32, #tpu.memory_space<smem>>
    %492 = arith.index_cast %491 : i32 to index
    %c0_181 = arith.constant 0 : index
    %493 = vector.load %arg2[%492, %c0_181] : memref<32x512xf32, #tpu.memory_space<vmem>>, vector<1x512xf32>
    %c1_i32_182 = arith.constant 1 : i32
    %494 = arith.addi %488, %c1_i32_182 : i32
    %495 = arith.index_cast %494 : i32 to index
    %496 = memref.load %arg1[%495] : memref<128xi32, #tpu.memory_space<smem>>
    %497 = arith.index_cast %496 : i32 to index
    %c0_183 = arith.constant 0 : index
    %498 = vector.load %arg2[%497, %c0_183] : memref<32x512xf32, #tpu.memory_space<vmem>>, vector<1x512xf32>
    %c2_i32_184 = arith.constant 2 : i32
    %499 = arith.addi %488, %c2_i32_184 : i32
    %500 = arith.index_cast %499 : i32 to index
    %501 = memref.load %arg1[%500] : memref<128xi32, #tpu.memory_space<smem>>
    %502 = arith.index_cast %501 : i32 to index
    %c0_185 = arith.constant 0 : index
    %503 = vector.load %arg2[%502, %c0_185] : memref<32x512xf32, #tpu.memory_space<vmem>>, vector<1x512xf32>
    %c3_i32_186 = arith.constant 3 : i32
    %504 = arith.addi %488, %c3_i32_186 : i32
    %505 = arith.index_cast %504 : i32 to index
    %506 = memref.load %arg1[%505] : memref<128xi32, #tpu.memory_space<smem>>
    %507 = arith.index_cast %506 : i32 to index
    %c0_187 = arith.constant 0 : index
    %508 = vector.load %arg2[%507, %c0_187] : memref<32x512xf32, #tpu.memory_space<vmem>>, vector<1x512xf32>
    %c4_i32_188 = arith.constant 4 : i32
    %509 = arith.addi %488, %c4_i32_188 : i32
    %510 = arith.index_cast %509 : i32 to index
    %511 = memref.load %arg1[%510] : memref<128xi32, #tpu.memory_space<smem>>
    %512 = arith.index_cast %511 : i32 to index
    %c0_189 = arith.constant 0 : index
    %513 = vector.load %arg2[%512, %c0_189] : memref<32x512xf32, #tpu.memory_space<vmem>>, vector<1x512xf32>
    %c5_i32_190 = arith.constant 5 : i32
    %514 = arith.addi %488, %c5_i32_190 : i32
    %515 = arith.index_cast %514 : i32 to index
    %516 = memref.load %arg1[%515] : memref<128xi32, #tpu.memory_space<smem>>
    %517 = arith.index_cast %516 : i32 to index
    %c0_191 = arith.constant 0 : index
    %518 = vector.load %arg2[%517, %c0_191] : memref<32x512xf32, #tpu.memory_space<vmem>>, vector<1x512xf32>
    %c6_i32_192 = arith.constant 6 : i32
    %519 = arith.addi %488, %c6_i32_192 : i32
    %520 = arith.index_cast %519 : i32 to index
    %521 = memref.load %arg1[%520] : memref<128xi32, #tpu.memory_space<smem>>
    %522 = arith.index_cast %521 : i32 to index
    %c0_193 = arith.constant 0 : index
    %523 = vector.load %arg2[%522, %c0_193] : memref<32x512xf32, #tpu.memory_space<vmem>>, vector<1x512xf32>
    %c7_i32_194 = arith.constant 7 : i32
    %524 = arith.addi %488, %c7_i32_194 : i32
    %525 = arith.index_cast %524 : i32 to index
    %526 = memref.load %arg1[%525] : memref<128xi32, #tpu.memory_space<smem>>
    %527 = arith.index_cast %526 : i32 to index
    %c0_195 = arith.constant 0 : index
    %528 = vector.load %arg2[%527, %c0_195] : memref<32x512xf32, #tpu.memory_space<vmem>>, vector<1x512xf32>
    %529 = tpu.concatenate %493, %498, %503, %508, %513, %518, %523, %528 in 0 : vector<1x512xf32>, vector<1x512xf32>, vector<1x512xf32>, vector<1x512xf32>, vector<1x512xf32>, vector<1x512xf32>, vector<1x512xf32>, vector<1x512xf32> -> vector<8x512xf32>
    %cst_196 = arith.constant dense<0.000000e+00> : vector<8x512xf32>
    %530 = tpu.matmul %482, %3, %cst_196 {dimension_numbers = #tpu.dot_dimension_numbers<[1], [0], [0], [1], [0, 0, 1, 1], [], []>} : vector<8x128xf32>, vector<128x512xf32>, vector<8x512xf32> -> vector<8x512xf32>
    %531 = arith.addf %530, %529 : vector<8x512xf32>
    %532 = vector.extract_strided_slice %531 {offsets = [0, 0], sizes = [8, 128], strides = [1, 1]} : vector<8x512xf32> to vector<8x128xf32>
    %533 = math.tanh %532 : vector<8x128xf32>
    %534 = vector.extract_strided_slice %531 {offsets = [0, 128], sizes = [8, 128], strides = [1, 1]} : vector<8x512xf32> to vector<8x128xf32>
    %cst_197 = arith.constant 5.000000e-01 : f32
    %535 = vector.broadcast %cst_197 : f32 to vector<8x128xf32>
    %536 = arith.mulf %535, %534 : vector<8x128xf32>
    %537 = math.tanh %536 : vector<8x128xf32>
    %cst_198 = arith.constant 1.000000e+00 : f32
    %538 = vector.broadcast %cst_198 : f32 to vector<8x128xf32>
    %539 = arith.addf %537, %538 : vector<8x128xf32>
    %cst_199 = arith.constant 5.000000e-01 : f32
    %540 = vector.broadcast %cst_199 : f32 to vector<8x128xf32>
    %541 = arith.mulf %540, %539 : vector<8x128xf32>
    %542 = vector.extract_strided_slice %531 {offsets = [0, 256], sizes = [8, 128], strides = [1, 1]} : vector<8x512xf32> to vector<8x128xf32>
    %cst_200 = arith.constant 5.000000e-01 : f32
    %543 = vector.broadcast %cst_200 : f32 to vector<8x128xf32>
    %544 = arith.mulf %543, %542 : vector<8x128xf32>
    %545 = math.tanh %544 : vector<8x128xf32>
    %cst_201 = arith.constant 1.000000e+00 : f32
    %546 = vector.broadcast %cst_201 : f32 to vector<8x128xf32>
    %547 = arith.addf %545, %546 : vector<8x128xf32>
    %cst_202 = arith.constant 5.000000e-01 : f32
    %548 = vector.broadcast %cst_202 : f32 to vector<8x128xf32>
    %549 = arith.mulf %548, %547 : vector<8x128xf32>
    %550 = vector.extract_strided_slice %531 {offsets = [0, 384], sizes = [8, 128], strides = [1, 1]} : vector<8x512xf32> to vector<8x128xf32>
    %cst_203 = arith.constant 5.000000e-01 : f32
    %551 = vector.broadcast %cst_203 : f32 to vector<8x128xf32>
    %552 = arith.mulf %551, %550 : vector<8x128xf32>
    %553 = math.tanh %552 : vector<8x128xf32>
    %cst_204 = arith.constant 1.000000e+00 : f32
    %554 = vector.broadcast %cst_204 : f32 to vector<8x128xf32>
    %555 = arith.addf %553, %554 : vector<8x128xf32>
    %cst_205 = arith.constant 5.000000e-01 : f32
    %556 = vector.broadcast %cst_205 : f32 to vector<8x128xf32>
    %557 = arith.mulf %556, %555 : vector<8x128xf32>
    %558 = arith.mulf %533, %541 : vector<8x128xf32>
    %559 = arith.mulf %480, %549 : vector<8x128xf32>
    %560 = arith.addf %558, %559 : vector<8x128xf32>
    %561 = math.tanh %560 : vector<8x128xf32>
    %562 = arith.mulf %561, %557 : vector<8x128xf32>
    %c8_i32_206 = arith.constant 8 : i32
    %563 = arith.muli %c6_i32_178, %c8_i32_206 : i32
    %564 = tpu.assume_multiple %563, 8 : i32
    %565 = arith.index_cast %564 : i32 to index
    %c0_207 = arith.constant 0 : index
    %566 = vector.load %arg9[%565, %c0_207] : memref<64x128xf32, #tpu.memory_space<vmem>>, vector<8x128xf32>
    tpu.vector_store %arg9[%565, %c0_207], %562 {strides = array<i32>} : memref<64x128xf32, #tpu.memory_space<vmem>>, vector<8x128xf32>,
    %c7_i32_208 = arith.constant 7 : i32
    %567 = arith.addi %4, %c7_i32_208 : i32
    %c8_i32_209 = arith.constant 8 : i32
    %568 = arith.muli %567, %c8_i32_209 : i32
    %c0_i32_210 = arith.constant 0 : i32
    %569 = arith.addi %568, %c0_i32_210 : i32
    %570 = arith.index_cast %569 : i32 to index
    %571 = memref.load %arg1[%570] : memref<128xi32, #tpu.memory_space<smem>>
    %572 = arith.index_cast %571 : i32 to index
    %c0_211 = arith.constant 0 : index
    %573 = vector.load %arg2[%572, %c0_211] : memref<32x512xf32, #tpu.memory_space<vmem>>, vector<1x512xf32>
    %c1_i32_212 = arith.constant 1 : i32
    %574 = arith.addi %568, %c1_i32_212 : i32
    %575 = arith.index_cast %574 : i32 to index
    %576 = memref.load %arg1[%575] : memref<128xi32, #tpu.memory_space<smem>>
    %577 = arith.index_cast %576 : i32 to index
    %c0_213 = arith.constant 0 : index
    %578 = vector.load %arg2[%577, %c0_213] : memref<32x512xf32, #tpu.memory_space<vmem>>, vector<1x512xf32>
    %c2_i32_214 = arith.constant 2 : i32
    %579 = arith.addi %568, %c2_i32_214 : i32
    %580 = arith.index_cast %579 : i32 to index
    %581 = memref.load %arg1[%580] : memref<128xi32, #tpu.memory_space<smem>>
    %582 = arith.index_cast %581 : i32 to index
    %c0_215 = arith.constant 0 : index
    %583 = vector.load %arg2[%582, %c0_215] : memref<32x512xf32, #tpu.memory_space<vmem>>, vector<1x512xf32>
    %c3_i32_216 = arith.constant 3 : i32
    %584 = arith.addi %568, %c3_i32_216 : i32
    %585 = arith.index_cast %584 : i32 to index
    %586 = memref.load %arg1[%585] : memref<128xi32, #tpu.memory_space<smem>>
    %587 = arith.index_cast %586 : i32 to index
    %c0_217 = arith.constant 0 : index
    %588 = vector.load %arg2[%587, %c0_217] : memref<32x512xf32, #tpu.memory_space<vmem>>, vector<1x512xf32>
    %c4_i32_218 = arith.constant 4 : i32
    %589 = arith.addi %568, %c4_i32_218 : i32
    %590 = arith.index_cast %589 : i32 to index
    %591 = memref.load %arg1[%590] : memref<128xi32, #tpu.memory_space<smem>>
    %592 = arith.index_cast %591 : i32 to index
    %c0_219 = arith.constant 0 : index
    %593 = vector.load %arg2[%592, %c0_219] : memref<32x512xf32, #tpu.memory_space<vmem>>, vector<1x512xf32>
    %c5_i32_220 = arith.constant 5 : i32
    %594 = arith.addi %568, %c5_i32_220 : i32
    %595 = arith.index_cast %594 : i32 to index
    %596 = memref.load %arg1[%595] : memref<128xi32, #tpu.memory_space<smem>>
    %597 = arith.index_cast %596 : i32 to index
    %c0_221 = arith.constant 0 : index
    %598 = vector.load %arg2[%597, %c0_221] : memref<32x512xf32, #tpu.memory_space<vmem>>, vector<1x512xf32>
    %c6_i32_222 = arith.constant 6 : i32
    %599 = arith.addi %568, %c6_i32_222 : i32
    %600 = arith.index_cast %599 : i32 to index
    %601 = memref.load %arg1[%600] : memref<128xi32, #tpu.memory_space<smem>>
    %602 = arith.index_cast %601 : i32 to index
    %c0_223 = arith.constant 0 : index
    %603 = vector.load %arg2[%602, %c0_223] : memref<32x512xf32, #tpu.memory_space<vmem>>, vector<1x512xf32>
    %c7_i32_224 = arith.constant 7 : i32
    %604 = arith.addi %568, %c7_i32_224 : i32
    %605 = arith.index_cast %604 : i32 to index
    %606 = memref.load %arg1[%605] : memref<128xi32, #tpu.memory_space<smem>>
    %607 = arith.index_cast %606 : i32 to index
    %c0_225 = arith.constant 0 : index
    %608 = vector.load %arg2[%607, %c0_225] : memref<32x512xf32, #tpu.memory_space<vmem>>, vector<1x512xf32>
    %609 = tpu.concatenate %573, %578, %583, %588, %593, %598, %603, %608 in 0 : vector<1x512xf32>, vector<1x512xf32>, vector<1x512xf32>, vector<1x512xf32>, vector<1x512xf32>, vector<1x512xf32>, vector<1x512xf32>, vector<1x512xf32> -> vector<8x512xf32>
    %cst_226 = arith.constant dense<0.000000e+00> : vector<8x512xf32>
    %610 = tpu.matmul %562, %3, %cst_226 {dimension_numbers = #tpu.dot_dimension_numbers<[1], [0], [0], [1], [0, 0, 1, 1], [], []>} : vector<8x128xf32>, vector<128x512xf32>, vector<8x512xf32> -> vector<8x512xf32>
    %611 = arith.addf %610, %609 : vector<8x512xf32>
    %612 = vector.extract_strided_slice %611 {offsets = [0, 0], sizes = [8, 128], strides = [1, 1]} : vector<8x512xf32> to vector<8x128xf32>
    %613 = math.tanh %612 : vector<8x128xf32>
    %614 = vector.extract_strided_slice %611 {offsets = [0, 128], sizes = [8, 128], strides = [1, 1]} : vector<8x512xf32> to vector<8x128xf32>
    %cst_227 = arith.constant 5.000000e-01 : f32
    %615 = vector.broadcast %cst_227 : f32 to vector<8x128xf32>
    %616 = arith.mulf %615, %614 : vector<8x128xf32>
    %617 = math.tanh %616 : vector<8x128xf32>
    %cst_228 = arith.constant 1.000000e+00 : f32
    %618 = vector.broadcast %cst_228 : f32 to vector<8x128xf32>
    %619 = arith.addf %617, %618 : vector<8x128xf32>
    %cst_229 = arith.constant 5.000000e-01 : f32
    %620 = vector.broadcast %cst_229 : f32 to vector<8x128xf32>
    %621 = arith.mulf %620, %619 : vector<8x128xf32>
    %622 = vector.extract_strided_slice %611 {offsets = [0, 256], sizes = [8, 128], strides = [1, 1]} : vector<8x512xf32> to vector<8x128xf32>
    %cst_230 = arith.constant 5.000000e-01 : f32
    %623 = vector.broadcast %cst_230 : f32 to vector<8x128xf32>
    %624 = arith.mulf %623, %622 : vector<8x128xf32>
    %625 = math.tanh %624 : vector<8x128xf32>
    %cst_231 = arith.constant 1.000000e+00 : f32
    %626 = vector.broadcast %cst_231 : f32 to vector<8x128xf32>
    %627 = arith.addf %625, %626 : vector<8x128xf32>
    %cst_232 = arith.constant 5.000000e-01 : f32
    %628 = vector.broadcast %cst_232 : f32 to vector<8x128xf32>
    %629 = arith.mulf %628, %627 : vector<8x128xf32>
    %630 = vector.extract_strided_slice %611 {offsets = [0, 384], sizes = [8, 128], strides = [1, 1]} : vector<8x512xf32> to vector<8x128xf32>
    %cst_233 = arith.constant 5.000000e-01 : f32
    %631 = vector.broadcast %cst_233 : f32 to vector<8x128xf32>
    %632 = arith.mulf %631, %630 : vector<8x128xf32>
    %633 = math.tanh %632 : vector<8x128xf32>
    %cst_234 = arith.constant 1.000000e+00 : f32
    %634 = vector.broadcast %cst_234 : f32 to vector<8x128xf32>
    %635 = arith.addf %633, %634 : vector<8x128xf32>
    %cst_235 = arith.constant 5.000000e-01 : f32
    %636 = vector.broadcast %cst_235 : f32 to vector<8x128xf32>
    %637 = arith.mulf %636, %635 : vector<8x128xf32>
    %638 = arith.mulf %613, %621 : vector<8x128xf32>
    %639 = arith.mulf %560, %629 : vector<8x128xf32>
    %640 = arith.addf %638, %639 : vector<8x128xf32>
    %641 = math.tanh %640 : vector<8x128xf32>
    %642 = arith.mulf %641, %637 : vector<8x128xf32>
    %c8_i32_236 = arith.constant 8 : i32
    %643 = arith.muli %c7_i32_208, %c8_i32_236 : i32
    %644 = tpu.assume_multiple %643, 8 : i32
    %645 = arith.index_cast %644 : i32 to index
    %c0_237 = arith.constant 0 : index
    %646 = vector.load %arg9[%645, %c0_237] : memref<64x128xf32, #tpu.memory_space<vmem>>, vector<8x128xf32>
    tpu.vector_store %arg9[%645, %c0_237], %642 {strides = array<i32>} : memref<64x128xf32, #tpu.memory_space<vmem>>, vector<8x128xf32>,
    %c8_i32_238 = arith.constant 8 : i32
    %c0_239 = arith.constant 0 : index
    %c0_240 = arith.constant 0 : index
    %647 = vector.load %arg7[%c0_239, %c0_240] : memref<8x128xf32, #tpu.memory_space<vmem>>, vector<8x128xf32>
    tpu.vector_store %arg7[%c0_239, %c0_240], %642 {strides = array<i32>} : memref<8x128xf32, #tpu.memory_space<vmem>>, vector<8x128xf32>,
    %c0_241 = arith.constant 0 : index
    %c0_242 = arith.constant 0 : index
    %648 = vector.load %arg8[%c0_241, %c0_242] : memref<8x128xf32, #tpu.memory_space<vmem>>, vector<8x128xf32>
    tpu.vector_store %arg8[%c0_241, %c0_242], %640 {strides = array<i32>} : memref<8x128xf32, #tpu.memory_space<vmem>>, vector<8x128xf32>,
    %c0_243 = arith.constant 0 : index
    %c0_244 = arith.constant 0 : index
    %649 = vector.load %arg9[%c0_243, %c0_244] : memref<64x128xf32, #tpu.memory_space<vmem>>, vector<64x128xf32>
    %650 = arith.truncf %649 : vector<64x128xf32> to vector<64x128xbf16>
    %c0_245 = arith.constant 0 : index
    %c0_246 = arith.constant 0 : index
    %651 = vector.load %arg4[%c0_245, %c0_246] : memref<128x32xbf16, #tpu.memory_space<vmem>>, vector<128x32xbf16>
    %cst_247 = arith.constant dense<0.000000e+00> : vector<64x32xf32>
    %652 = tpu.matmul %650, %651, %cst_247 {dimension_numbers = #tpu.dot_dimension_numbers<[1], [0], [0], [1], [0, 0, 1, 1], [], []>} : vector<64x128xbf16>, vector<128x32xbf16>, vector<64x32xf32> -> vector<64x32xf32>
    %c0_248 = arith.constant 0 : index
    %c0_249 = arith.constant 0 : index
    %653 = vector.load %arg5[%c0_248, %c0_249] : memref<1x32xf32, #tpu.memory_space<vmem>>, vector<1x32xf32>
    %654 = vector.broadcast %653 : vector<1x32xf32> to vector<64x32xf32>
    %655 = arith.addf %652, %654 : vector<64x32xf32>
    %c0_250 = arith.constant 0 : index
    %c0_251 = arith.constant 0 : index
    %656 = vector.load %arg6[%c0_250, %c0_251] : memref<64x32xf32, #tpu.memory_space<vmem>>, vector<64x32xf32>
    tpu.vector_store %arg6[%c0_250, %c0_251], %655 {strides = array<i32>} : memref<64x32xf32, #tpu.memory_space<vmem>>, vector<64x32xf32>,
    return
  }
  func.func @transform_0(%arg0: i32, %arg1: memref<128xi32, #tpu.memory_space<smem>>) -> (i32, i32) {
    %c0_i32 = arith.constant 0 : i32
    %c0_i32_0 = arith.constant 0 : i32
    %c0_i32_1 = arith.constant 0 : i32
    return %c0_i32, %c0_i32_0 : i32, i32
  }
  func.func @transform_1(%arg0: i32, %arg1: memref<128xi32, #tpu.memory_space<smem>>) -> (i32, i32) {
    %c0_i32 = arith.constant 0 : i32
    %c0_i32_0 = arith.constant 0 : i32
    %c0_i32_1 = arith.constant 0 : i32
    return %c0_i32, %c0_i32_0 : i32, i32
  }
  func.func @transform_2(%arg0: i32, %arg1: memref<128xi32, #tpu.memory_space<smem>>) -> (i32, i32) {
    %c0_i32 = arith.constant 0 : i32
    %c0_i32_0 = arith.constant 0 : i32
    %c0_i32_1 = arith.constant 0 : i32
    return %c0_i32, %c0_i32_0 : i32, i32
  }
  func.func @transform_3(%arg0: i32, %arg1: memref<128xi32, #tpu.memory_space<smem>>) -> (i32, i32) {
    %c0_i32 = arith.constant 0 : i32
    %c0_i32_0 = arith.constant 0 : i32
    %c0_i32_1 = arith.constant 0 : i32
    return %c0_i32, %c0_i32_0 : i32, i32
  }
  func.func @transform_4(%arg0: i32, %arg1: memref<128xi32, #tpu.memory_space<smem>>) -> (i32, i32) {
    %c0_i32 = arith.constant 0 : i32
    %c0_i32_0 = arith.constant 0 : i32
    return %arg0, %c0_i32 : i32, i32
  }
}

</mosaic_0001>

<llo_original>
// kernel: text_generation_forward.2
$region0: #{text_generation_forward.2}
  #allocation0 [shape = 'u32[]', space=smem, size = 0x4, offset = 0x4, fixed_abs, tag = 'smem constant byte address 0x4 - core index']
  #allocation1 [shape = 'u32[144,128]{1,0:T(1,128)}', space=vmem, size = 0x12000, scoped, tag = 'internal scratch']
  %s0 = inlined_call_operand.vmem [shape: bf16[32,32], index: 0, kind: input, shape index: {}]
  %s1 = inlined_call_operand.vmem [shape: bf16[32,512], index: 1, kind: input, shape index: {}]
  %s2 = inlined_call_operand.hbm [shape: f32[1,512], index: 2, kind: input, shape index: {}]
  %s3 = inlined_call_operand.vmem [shape: f32[32,512], index: 3, kind: output, shape index: {}]
  %s4 = sld [smem:[#allocation0]]
  $region106: #{text_generation_forward.2} parent=0
    _
  %s6 = ssub.s32 1, %s4
  %s7 = scalar_select 0, %s6, %s4
  $region1: #{text_generation_forward.2} parent=0
    #allocation2 [shape = 'u8[32768]{0}', space=vmem, size = 0x8000, scoped, tag = 'input window, operand 1']
    #allocation3 [shape = 'u8[2048]{0}', space=vmem, size = 0x800, scoped, tag = 'input window, operand 2']
    #allocation4 [shape = 's32[2]{0}', space=sflag, size = 0x8, scoped, tag = 'scoped memory for text_generation_forward.2']
    #allocation5 [shape = 'u8[65536]{0}', space=vmem, size = 0x10000, scoped, tag = 'output window, operand 0']
    %8 = vsyncpa [#allocation4], 0
    %s9 = scalar_lea.sflag [#allocation4], 1
    %10 = vsyncpa %s9, 0
    loop: start=0, step=1, limit=4
    $region2: #{text_generation_forward.2} parent=1 // loop_pre_header
      _
    $region3: #{text_generation_forward.2} parent=1 // loop_header
      %s12 = sphi 0, %s16
      %p13 = scmp.ge.s32.totalorder %s12, 4
      %s19 = sphi 0, %s31
      %s20 = sphi 0, %s27
      %s21 = sphi 0, %s19
      %s22 = sphi 0, %s20
      %s23 = sphi 0, %s21
      %s24 = sphi 0, %s22
      %s34 = sphi 0, %s36
      %s37 = sphi 0, %s34
      %s38 = sphi 0, %s37
      %s54 = sphi 0, %s38
      %s60 = sphi 0, %s62
      %s63 = sphi 0, %s60
      %s64 = sphi 0, %s63
      %s80 = sphi 0, %s64
      %s86 = sphi 0, %s88
      %s89 = sphi 0, %s86
      %s90 = sphi 0, %s89
      %s106 = sphi 0, %s90
      %s114 = sphi 0, %s116
      %s117 = sphi 0, %s114
      %s118 = sphi 0, %s117
      %s134 = sphi 0, %s118
    $region4: #{text_generation_forward.2} parent=1 // loop_header_branch
      %15 = sbr.rel (%p13) target = $region8
    $region5: #{text_generation_forward.2} parent=1 // loop_body
      %s17 = ssub.s32 %s12, 1
      %s18 = ssub.s32 %s12, 2
      %s25 = sadd.s32 1, %s20
      %p26 = scmp.ge.s32.totalorder %s25, 2
      %s27 = scalar_select %p26, 0, %s25
      %s28 = sadd.s32 1, %s19
      %s29 = scalar_select %p26, %s28, %s19
      %p30 = scmp.ge.s32.totalorder %s29, 1
      %s31 = scalar_select %p30, 0, %s29
      %s32 = ssub.s32 %s19, %s31
      %p33 = scmp.eq.s32.totalorder %s32, 0
      %s35 = sadd.s32 %s34, 1
      %s36 = scalar_select %p33, %s34, %s35
      %p39 = pneg %p33
      %p40 = scmp.eq.s32.totalorder %s12, 1
      %p41 = por %p39, %p40
      %p42 = scmp.ne.s32.totalorder %s34, %s37
      %p43 = scmp.eq.s32.totalorder %s12, 0
      %p44 = por %p42, %p43
      %p45 = scmp.ne.s32.totalorder %s34, %s37
      %p46 = scmp.eq.s32.totalorder %s17, 1
      %p47 = por %p45, %p46
      %p48 = scmp.ne.s32.totalorder %s37, %s38
      %p49 = scmp.eq.s32.totalorder %s17, 0
      %p50 = por %p48, %p49
      %p51 = scmp.ne.s32.totalorder %s37, %s38
      %p52 = scmp.eq.s32.totalorder %s18, 1
      %p53 = por %p51, %p52
      %p55 = scmp.ne.s32.totalorder %s38, %s54
      %p56 = scmp.eq.s32.totalorder %s18, 0
      %p57 = por %p55, %p56
      %s58 = ssub.s32 %s20, %s27
      %p59 = scmp.eq.s32.totalorder %s58, 0
      %s61 = sadd.s32 %s60, 1
      %s62 = scalar_select %p59, %s60, %s61
      %p65 = pneg %p59
      %p66 = scmp.eq.s32.totalorder %s12, 1
      %p67 = por %p65, %p66
      %p68 = scmp.ne.s32.totalorder %s60, %s63
      %p69 = scmp.eq.s32.totalorder %s12, 0
      %p70 = por %p68, %p69
      %p71 = scmp.ne.s32.totalorder %s60, %s63
      %p72 = scmp.eq.s32.totalorder %s17, 1
      %p73 = por %p71, %p72
      %p74 = scmp.ne.s32.totalorder %s63, %s64
      %p75 = scmp.eq.s32.totalorder %s17, 0
      %p76 = por %p74, %p75
      %p77 = scmp.ne.s32.totalorder %s63, %s64
      %p78 = scmp.eq.s32.totalorder %s18, 1
      %p79 = por %p77, %p78
      %p81 = scmp.ne.s32.totalorder %s64, %s80
      %p82 = scmp.eq.s32.totalorder %s18, 0
      %p83 = por %p81, %p82
      %s84 = ssub.s32 %s20, %s27
      %p85 = scmp.eq.s32.totalorder %s84, 0
      %s87 = sadd.s32 %s86, 1
      %s88 = scalar_select %p85, %s86, %s87
      %p91 = pneg %p85
      %p92 = scmp.eq.s32.totalorder %s12, 1
      %p93 = por %p91, %p92
      %p94 = scmp.ne.s32.totalorder %s86, %s89
      %p95 = scmp.eq.s32.totalorder %s12, 0
      %p96 = por %p94, %p95
      %p97 = scmp.ne.s32.totalorder %s86, %s89
      %p98 = scmp.eq.s32.totalorder %s17, 1
      %p99 = por %p97, %p98
      %p100 = scmp.ne.s32.totalorder %s89, %s90
      %p101 = scmp.eq.s32.totalorder %s17, 0
      %p102 = por %p100, %p101
      %p103 = scmp.ne.s32.totalorder %s89, %s90
      %p104 = scmp.eq.s32.totalorder %s18, 1
      %p105 = por %p103, %p104
      %p107 = scmp.ne.s32.totalorder %s90, %s106
      %p108 = scmp.eq.s32.totalorder %s18, 0
      %p109 = por %p107, %p108
      %s110 = ssub.s32 %s19, %s31
      %s111 = ssub.s32 %s20, %s27
      %s112 = sor.u32 %s110, %s111
      %p113 = scmp.eq.s32.totalorder %s112, 0
      %s115 = sadd.s32 %s114, 1
      %s116 = scalar_select %p113, %s114, %s115
      %p119 = pneg %p113
      %p120 = scmp.eq.s32.totalorder %s12, 1
      %p121 = por %p119, %p120
      %p122 = scmp.ne.s32.totalorder %s114, %s117
      %p123 = scmp.eq.s32.totalorder %s12, 0
      %p124 = por %p122, %p123
      %p125 = scmp.ne.s32.totalorder %s114, %s117
      %p126 = scmp.eq.s32.totalorder %s17, 1
      %p127 = por %p125, %p126
      %p128 = scmp.ne.s32.totalorder %s117, %s118
      %p129 = scmp.eq.s32.totalorder %s17, 0
      %p130 = por %p128, %p129
      %p131 = scmp.ne.s32.totalorder %s117, %s118
      %p132 = scmp.eq.s32.totalorder %s18, 1
      %p133 = por %p131, %p132
      %p135 = scmp.ne.s32.totalorder %s118, %s134
      %p136 = scmp.eq.s32.totalorder %s18, 0
      %p137 = por %p135, %p136
      %p138 = scmp.le.s32.totalorder 1, %s12
      %p139 = scmp.lt.s32.totalorder %s12, 3
      %p140 = pnand %p138, %p139
      %p141 = pneg %p140
      // Predicated region
      $region9: #{text_generation_forward.2} parent=5 // pred_check
        _
      $region10: #{text_generation_forward.2} parent=5 // pred_check_branch
        %143 = sbr.rel (%p140) target = $region12
      $region11: #{text_generation_forward.2} parent=5 // pred_region
        %s144 = ssub.s32 %s12, 1
        // Predicated region
        $region13: #{text_generation_forward.2} parent=11 // pred_check
          %p145 = pneg %p50
        $region14: #{text_generation_forward.2} parent=11 // pred_check_branch
          %147 = sbr.rel (%p145) target = $region16
        $region15: #{text_generation_forward.2} parent=11 // pred_region
          %s148 = smul.u32 4, %s21
          %p149 = scmp.lt.s32.totalorder %s148, 3
          %s150 = scalar_select %p149, %s148, 3
          %s151 = smul.addr %s150, 4
          %s152 = scalar_lea.vmem %s0, %s151
          %s153 = smul.u32 4, %s21
        $region16: #{text_generation_forward.2} parent=11 // pred_fallthru
          _
      $region12: #{text_generation_forward.2} parent=5 // pred_fallthru
        _
      %p154 = scmp.lt.s32.totalorder %s12, 2
      // Predicated region
      $region17: #{text_generation_forward.2} parent=5 // pred_check
        %p155 = pneg %p154
      $region18: #{text_generation_forward.2} parent=5 // pred_check_branch
        %157 = sbr.rel (%p155) target = $region20
      $region19: #{text_generation_forward.2} parent=5 // pred_region
        // Predicated region
        $region21: #{text_generation_forward.2} parent=19 // pred_check
          %p158 = pneg %p70
        $region22: #{text_generation_forward.2} parent=19 // pred_check_branch
          %160 = sbr.rel (%p158) target = $region24
        $region23: #{text_generation_forward.2} parent=19 // pred_region
          %s161 = sand.u32 %s60, 1
          %s162 = sand.u32 %s60, 1
          %s163 = smul.addr %s162, 32
          %s164 = scalar_lea.vmem [#allocation2], %s163
          %s165 = smul.u32 2, %s20
          %s166 = smul.addr %s165, 4
          %s167 = scalar_lea.vmem %s1, %s166
          // Predicated region
          $region25: #{text_generation_forward.2} parent=23 // pred_check
            _
          $region26: #{text_generation_forward.2} parent=23 // pred_check_branch
            %169 = sbr.rel (0) target = $region28
          $region27: #{text_generation_forward.2} parent=23 // pred_region
            // Predicated region
            $region29: #{text_generation_forward.2} parent=27 // pred_check
              _
            $region30: #{text_generation_forward.2} parent=27 // pred_check_branch
              %171 = sbr.rel (0) target = $region32
            $region31: #{text_generation_forward.2} parent=27 // pred_region
              // Predicated region
              $region44: #{text_generation_forward.2} parent=31 // pred_check
                _
              $region45: #{text_generation_forward.2} parent=31 // pred_check_branch
                %192 = sbr.rel (0) target = $region47
              $region46: #{text_generation_forward.2} parent=31 // pred_region
                loop: start=0, step=1, limit=1
                $region48: #{text_generation_forward.2} parent=46 // loop_pre_header
                  _
                $region49: #{text_generation_forward.2} parent=46 // loop_header
                  %s194 = sphi 0, %s198
                  %p195 = scmp.ge.s32.totalorder %s194, 1
                  %s199 = sphi %s167, %s167
                  %s200 = sphi %s164, %s164
                $region50: #{text_generation_forward.2} parent=46 // loop_header_branch
                  %197 = sbr.rel (%p195) target = $region54
                $region51: #{text_generation_forward.2} parent=46 // loop_body
                  %v201 = vld [vmem:[%s199] sm:$0xff]
                  %202 = vst [vmem:[%s200] sm:$0xff] %v201
                  %v203 = vld [vmem:[%s199 + $0x10] sm:$0xff]
                  %204 = vst [vmem:[%s200 + $0x8] sm:$0xff] %v203
                  %v205 = vld [vmem:[%s199 + $0x20] sm:$0xff]
                  %206 = vst [vmem:[%s200 + $0x10] sm:$0xff] %v205
                  %v207 = vld [vmem:[%s199 + $0x30] sm:$0xff]
                  %208 = vst [vmem:[%s200 + $0x18] sm:$0xff] %v207
                $region52: #{text_generation_forward.2} parent=46 // loop_footer
                  %s198 = sadd.s32 1, %s194
                $region53: #{text_generation_forward.2} parent=46 // loop_footer_branch
                  %193 = sbr.rel target = $region49
                $region54: #{text_generation_forward.2} parent=46 // loop_exit
                  _
              $region47: #{text_generation_forward.2} parent=31 // pred_fallthru
                _
              // Predicated region
              $region55: #{text_generation_forward.2} parent=31 // pred_check
                _
              $region56: #{text_generation_forward.2} parent=31 // pred_check_branch
                %210 = sbr.rel target = $region58
              $region57: #{text_generation_forward.2} parent=31 // pred_region
                _
              $region58: #{text_generation_forward.2} parent=31 // pred_fallthru
                _
            $region32: #{text_generation_forward.2} parent=27 // pred_fallthru
              _
            // Predicated region
            $region33: #{text_generation_forward.2} parent=27 // pred_check
              _
            $region34: #{text_generation_forward.2} parent=27 // pred_check_branch
              %173 = sbr.rel target = $region36
            $region35: #{text_generation_forward.2} parent=27 // pred_region
              loop: start=0, step=1, limit=1
              $region37: #{text_generation_forward.2} parent=35 // loop_pre_header
                _
              $region38: #{text_generation_forward.2} parent=35 // loop_header
                %s176 = sphi 0, %s180
                %p177 = scmp.ge.s32.totalorder %s176, 1
                %s181 = sphi %s167, %s167
                %s182 = sphi %s164, %s164
              $region39: #{text_generation_forward.2} parent=35 // loop_header_branch
                %179 = sbr.rel (%p177) target = $region43
              $region40: #{text_generation_forward.2} parent=35 // loop_body
                %v183 = vld [vmem:[%s181] sm:$0xff]
                %184 = vst [vmem:[%s182] sm:$0xff] %v183
                %v185 = vld [vmem:[%s181 + $0x10] sm:$0xff]
                %186 = vst [vmem:[%s182 + $0x8] sm:$0xff] %v185
                %v187 = vld [vmem:[%s181 + $0x20] sm:$0xff]
                %188 = vst [vmem:[%s182 + $0x10] sm:$0xff] %v187
                %v189 = vld [vmem:[%s181 + $0x30] sm:$0xff]
                %190 = vst [vmem:[%s182 + $0x18] sm:$0xff] %v189
              $region41: #{text_generation_forward.2} parent=35 // loop_footer
                %s180 = sadd.s32 1, %s176
              $region42: #{text_generation_forward.2} parent=35 // loop_footer_branch
                %175 = sbr.rel target = $region38
              $region43: #{text_generation_forward.2} parent=35 // loop_exit
                _
            $region36: #{text_generation_forward.2} parent=27 // pred_fallthru
              _
          $region28: #{text_generation_forward.2} parent=23 // pred_fallthru
            _
          %211 = vnop
        $region24: #{text_generation_forward.2} parent=19 // pred_fallthru
          _
        // Predicated region
        $region59: #{text_generation_forward.2} parent=19 // pred_check
          %p212 = pneg %p96
        $region60: #{text_generation_forward.2} parent=19 // pred_check_branch
          %214 = sbr.rel (%p212) target = $region62
        $region61: #{text_generation_forward.2} parent=19 // pred_region
          %s215 = sand.u32 %s86, 1
          %s216 = scalar_lea.sflag [#allocation4], %s215
          %s217 = sand.u32 %s86, 1
          %s218 = smul.addr %s217, 2
          %s219 = scalar_lea.vmem [#allocation3], %s218
          %s220 = smul.u32 2, %s20
          %s222 = ssub.s32 32, 32
          %223 = vsyncadd %s216, %s222
          %s224 = smul.addr %s220, 16
          %s225 = scalar_lea.hbm %s2, %s224
          %s227 = sshll.u32 %s219, 4
          %s228 = int_to_ptr.vmem [resolvable:$true] %s227
          %230 = dma.hbm_to_vmem [thread:$0]  %s225, 32, %s228, %s216
        $region62: #{text_generation_forward.2} parent=19 // pred_fallthru
          _
      $region20: #{text_generation_forward.2} parent=5 // pred_fallthru
        _
      %p231 = scmp.le.s32.totalorder 1, %s12
      %p232 = scmp.lt.s32.totalorder %s12, 3
      %p233 = pnand %p231, %p232
      %p234 = pneg %p233
      // Predicated region
      $region63: #{text_generation_forward.2} parent=5 // pred_check
        _
      $region64: #{text_generation_forward.2} parent=5 // pred_check_branch
        %236 = sbr.rel (%p233) target = $region66
      $region65: #{text_generation_forward.2} parent=5 // pred_region
        %s237 = ssub.s32 %s12, 1
        %s238 = sand.u32 %s63, 1
        %s239 = sand.u32 %s63, 1
        %s240 = smul.addr %s239, 32
        %s241 = scalar_lea.vmem [#allocation2], %s240
        // Predicated region
        $region67: #{text_generation_forward.2} parent=65 // pred_check
          %p242 = pneg %p76
        $region68: #{text_generation_forward.2} parent=65 // pred_check_branch
          %244 = sbr.rel (%p242) target = $region70
        $region69: #{text_generation_forward.2} parent=65 // pred_region
          _
        $region70: #{text_generation_forward.2} parent=65 // pred_fallthru
          _
        %s245 = sand.u32 %s89, 1
        %s246 = scalar_lea.sflag [#allocation4], %s245
        %s247 = sand.u32 %s89, 1
        %s248 = smul.addr %s247, 2
        %s249 = scalar_lea.vmem [#allocation3], %s248
        // Predicated region
        $region71: #{text_generation_forward.2} parent=65 // pred_check
          %p250 = pneg %p102
        $region72: #{text_generation_forward.2} parent=65 // pred_check_branch
          %252 = sbr.rel (%p250) target = $region74
        $region73: #{text_generation_forward.2} parent=65 // pred_region
          %253 = dma.done %s246, 32
        $region74: #{text_generation_forward.2} parent=65 // pred_fallthru
          _
        %s254 = smul.u32 4, %s21
        %p255 = scmp.lt.s32.totalorder %s254, 3
        %s256 = scalar_select %p255, %s254, 3
        %s257 = smul.addr %s256, 4
        %s258 = scalar_lea.vmem %s0, %s257
        %p259 = pneg %p50
        %p260 = pneg %p47
        %s261 = sand.u32 %s63, 1
        %s262 = sand.u32 %s63, 1
        %s263 = smul.addr %s262, 32
        %s264 = scalar_lea.vmem [#allocation2], %s263
        %p265 = pneg %p76
        %p266 = pneg %p73
        %s267 = sand.u32 %s89, 1
        %s268 = scalar_lea.sflag [#allocation4], %s267
        %s269 = sand.u32 %s89, 1
        %s270 = smul.addr %s269, 2
        %s271 = scalar_lea.vmem [#allocation3], %s270
        %p272 = pneg %p102
        %p273 = pneg %p99
        %p274 = pneg %p130
        %p275 = pneg %p127
        %s276 = sand.u32 %s117, 1
        %s277 = sand.u32 %s117, 1
        %s278 = smul.addr %s277, 64
        %s279 = scalar_lea.vmem [#allocation5], %s278
        %s280 = smul.u32 4, %s21
        %p281 = scmp.lt.s32.totalorder %s280, 3
        %s282 = scalar_select %p281, %s280, 3
        %s283 = smul.addr %s282, 4
        %s284 = scalar_lea.vmem %s0, %s283
        %s285 = smul.u32 4, %s21
        %s286 = smul.u32 2, %s22
        %s287 = smul.u32 2, %s22
        %s288 = smul.u32 4, %s21
        %s289 = smul.u32 2, %s22
        %v291 = vld [vmem:[%s284] sm:$0xf]
        %v292 = vld [vmem:[%s284 + $0x4] sm:$0xf]
        %v293 = vld [vmem:[%s284 + $0x8] sm:$0xf]
        %v294 = vld [vmem:[%s284 + $0xc] sm:$0xf]
        %v295 = vld [vmem:[%s241] sm:$0xff]
        %v296 = vld [vmem:[%s241 + $0x8] sm:$0xff]
        %v297 = vld [vmem:[%s241 + $0x10] sm:$0xff]
        %v298 = vld [vmem:[%s241 + $0x18] sm:$0xff]
        %v299 = vld [vmem:[%s249] sm:$0x3]
        %v301 = vlaneseq
        %v302 = vshrl.u32 %v301, 7
        %v303 = vsub.s32 0, %v302
        %v304 = vrot.slane %v299, %v303
        %v305 = vlaneseq
        %v306 = vshrl.u32 %v305, 7
        %v307 = vsub.s32 1, %v306
        %v308 = vrot.slane %v299, %v307
        %v315 = vunpack.c.l.b16 %v291
        %v316 = vunpack.c.l.b16 %v292
        %v317 = vunpack.c.l.b16 %v293
        %v318 = vunpack.c.l.b16 %v294
        %v319 = vpack.c.b16 %v316, %v315
        %v320 = vpack.c.b16 %v318, %v317
        %v325 = vunpack.c.l.b16 %v295
        %v326 = vunpack.c.h.b16 %v295
        %v327 = vunpack.c.l.b16 %v296
        %v328 = vunpack.c.h.b16 %v296
        %v329 = vunpack.c.l.b16 %v297
        %v330 = vunpack.c.h.b16 %v297
        %v331 = vunpack.c.l.b16 %v298
        %v332 = vunpack.c.h.b16 %v298
        %v333 = vpack.c.b16 %v327, %v325
        %v334 = vpack.c.b16 %v328, %v326
        %v335 = vpack.c.b16 %v331, %v329
        %v336 = vpack.c.b16 %v332, %v330
        %vm341 = vcmask 261120
        %v343 = vsel %vm341, %v319, 0
        %v346 = vsel %vm341, %v320, 0
        %348 = vmatprep.subr.bf16.mxu0 %v334
        %349 = vmatpush1.bf16.msra.mxu0 %v333
        %350 = vmatprep.subr.bf16.mxu0 %v336
        %351 = vmatpush1.bf16.msra.mxu0 %v335
        %352 = vmatprep.subr.bf16.mxu0 0
        %353 = vmatpush1.bf16.msra.mxu0 0
        %354 = vmatprep.subr.bf16.mxu0 0
        %355 = vmatpush1.bf16.msra.mxu0 0
        %356 = vmatprep.subr.bf16.mxu0 0
        %357 = vmatpush1.bf16.msra.mxu0 0
        %358 = vmatprep.subr.bf16.mxu0 0
        %359 = vmatpush1.bf16.msra.mxu0 0
        %360 = vmatprep.subr.bf16.mxu0 0
        %361 = vmatpush1.bf16.msra.mxu0 0
        %362 = vmatprep.subr.bf16.mxu0 0
        %363 = vmatpush1.bf16.msra.mxu0 0
        %364 = vmatprep.subr.bf16.mxu0 0
        %365 = vmatpush1.bf16.msra.mxu0 0
        %366 = vmatprep.subr.bf16.mxu0 0
        %367 = vmatpush1.bf16.msra.mxu0 0
        %368 = vmatprep.subr.bf16.mxu0 0
        %369 = vmatpush1.bf16.msra.mxu0 0
        %370 = vmatprep.subr.bf16.mxu0 0
        %371 = vmatpush1.bf16.msra.mxu0 0
        %372 = vmatprep.subr.bf16.mxu0 0
        %373 = vmatpush1.bf16.msra.mxu0 0
        %374 = vmatprep.subr.bf16.mxu0 0
        %375 = vmatpush1.bf16.msra.mxu0 0
        %376 = vmatprep.subr.bf16.mxu0 0
        %377 = vmatpush1.bf16.msra.mxu0 0
        %378 = vmatprep.subr.bf16.mxu0 0
        %379 = vmatpush1.bf16.msra.mxu0 0
        %380 = vmatprep.mubr.bf16.mxu0 0
        %381 = vmatmul.mubr.bf16.gmra.mrb[0].mxu0 %v343
        %v382 = vpop.f32.mrb[0].mxu0
        %v383 = vadd.f32 %v304, %v382
        %v384 = vpop.f32.mrb[0].mxu0
        %v385 = vadd.f32 %v308, %v384
        %v386 = vpop.f32.mrb[0].mxu0
        %v387 = vadd.f32 %v304, %v386
        %v388 = vpop.f32.mrb[0].mxu0
        %v389 = vadd.f32 %v308, %v388
        %390 = vmatprep.mubr.bf16.mxu0 0
        %391 = vmatmul.mubr.bf16.gmra.mrb[0].mxu0 %v346
        %v392 = vpop.f32.mrb[0].mxu0
        %v393 = vadd.f32 %v304, %v392
        %v394 = vpop.f32.mrb[0].mxu0
        %v395 = vadd.f32 %v308, %v394
        %v396 = vpop.f32.mrb[0].mxu0
        %v397 = vadd.f32 %v304, %v396
        %v398 = vpop.f32.mrb[0].mxu0
        %v399 = vadd.f32 %v308, %v398
        %400 = vdwg.mxu0
        %401 = vst [vmem:[%s279] sm:$0xff] %v383
        %402 = vst [vmem:[%s279 + $0x8] sm:$0xff] %v385
        %403 = vst [vmem:[%s279 + $0x10] sm:$0xff] %v387
        %404 = vst [vmem:[%s279 + $0x18] sm:$0xff] %v389
        %405 = vst [vmem:[%s279 + $0x20] sm:$0xff] %v393
        %406 = vst [vmem:[%s279 + $0x28] sm:$0xff] %v395
        %407 = vst [vmem:[%s279 + $0x30] sm:$0xff] %v397
        %408 = vst [vmem:[%s279 + $0x38] sm:$0xff] %v399
        %s409 = sand.u32 %s117, 1
        %s410 = sand.u32 %s117, 1
        %s411 = smul.addr %s410, 64
        %s412 = scalar_lea.vmem [#allocation5], %s411
        // Predicated region
        $region75: #{text_generation_forward.2} parent=65 // pred_check
          %p413 = pneg %p127
        $region76: #{text_generation_forward.2} parent=65 // pred_check_branch
          %415 = sbr.rel (%p413) target = $region78
        $region77: #{text_generation_forward.2} parent=65 // pred_region
          %s416 = smul.u32 4, %s21
          %s417 = smul.u32 2, %s22
          %s418 = smul.addr %s416, 4
          %s419 = sadd.s32 %s417, %s418
          %s420 = smul.addr %s419, 8
          %s421 = scalar_lea.vmem %s3, %s420
          // Predicated region
          $region79: #{text_generation_forward.2} parent=77 // pred_check
            _
          $region80: #{text_generation_forward.2} parent=77 // pred_check_branch
            %423 = sbr.rel (0) target = $region82
          $region81: #{text_generation_forward.2} parent=77 // pred_region
            // Predicated region
            $region83: #{text_generation_forward.2} parent=81 // pred_check
              _
            $region84: #{text_generation_forward.2} parent=81 // pred_check_branch
              %425 = sbr.rel (0) target = $region86
            $region85: #{text_generation_forward.2} parent=81 // pred_region
              loop: start=0, step=1, limit=1
              $region87: #{text_generation_forward.2} parent=85 // loop_pre_header
                _
              $region88: #{text_generation_forward.2} parent=85 // loop_header
                %s427 = sphi 0, %s431
                %p428 = scmp.ge.s32.totalorder %s427, 1
                %s432 = sphi %s412, %s412
                %s433 = sphi %s421, %s421
              $region89: #{text_generation_forward.2} parent=85 // loop_header_branch
                %430 = sbr.rel (%p428) target = $region93
              $region90: #{text_generation_forward.2} parent=85 // loop_body
                %v434 = vld [vmem:[%s432] sm:$0xff]
                %435 = vst [vmem:[%s433] sm:$0xff] %v434
                %v436 = vld [vmem:[%s432 + $0x8] sm:$0xff]
                %437 = vst [vmem:[%s433 + $0x8] sm:$0xff] %v436
                %v438 = vld [vmem:[%s432 + $0x10] sm:$0xff]
                %439 = vst [vmem:[%s433 + $0x20] sm:$0xff] %v438
                %v440 = vld [vmem:[%s432 + $0x18] sm:$0xff]
                %441 = vst [vmem:[%s433 + $0x28] sm:$0xff] %v440
                %v442 = vld [vmem:[%s432 + $0x20] sm:$0xff]
                %443 = vst [vmem:[%s433 + $0x40] sm:$0xff] %v442
                %v444 = vld [vmem:[%s432 + $0x28] sm:$0xff]
                %445 = vst [vmem:[%s433 + $0x48] sm:$0xff] %v444
                %v446 = vld [vmem:[%s432 + $0x30] sm:$0xff]
                %447 = vst [vmem:[%s433 + $0x60] sm:$0xff] %v446
                %v448 = vld [vmem:[%s432 + $0x38] sm:$0xff]
                %449 = vst [vmem:[%s433 + $0x68] sm:$0xff] %v448
              $region91: #{text_generation_forward.2} parent=85 // loop_footer
                %s431 = sadd.s32 1, %s427
              $region92: #{text_generation_forward.2} parent=85 // loop_footer_branch
                %426 = sbr.rel target = $region88
              $region93: #{text_generation_forward.2} parent=85 // loop_exit
                _
            $region86: #{text_generation_forward.2} parent=81 // pred_fallthru
              _
            // Predicated region
            $region94: #{text_generation_forward.2} parent=81 // pred_check
              _
            $region95: #{text_generation_forward.2} parent=81 // pred_check_branch
              %451 = sbr.rel target = $region97
            $region96: #{text_generation_forward.2} parent=81 // pred_region
              _
            $region97: #{text_generation_forward.2} parent=81 // pred_fallthru
              _
          $region82: #{text_generation_forward.2} parent=77 // pred_fallthru
            _
          %452 = vnop
        $region78: #{text_generation_forward.2} parent=65 // pred_fallthru
          _
      $region66: #{text_generation_forward.2} parent=5 // pred_fallthru
        _
      %p453 = scmp.le.s32.totalorder 2, %s12
      // Predicated region
      $region98: #{text_generation_forward.2} parent=5 // pred_check
        %p454 = pneg %p453
      $region99: #{text_generation_forward.2} parent=5 // pred_check_branch
        %456 = sbr.rel (%p454) target = $region101
      $region100: #{text_generation_forward.2} parent=5 // pred_region
        %s457 = ssub.s32 %s12, 2
        // Predicated region
        $region102: #{text_generation_forward.2} parent=100 // pred_check
          %p458 = pneg %p133
        $region103: #{text_generation_forward.2} parent=100 // pred_check_branch
          %460 = sbr.rel (%p458) target = $region105
        $region104: #{text_generation_forward.2} parent=100 // pred_region
          %s461 = sand.u32 %s118, 1
          %s462 = sand.u32 %s118, 1
          %s463 = smul.addr %s462, 64
          %s464 = scalar_lea.vmem [#allocation5], %s463
        $region105: #{text_generation_forward.2} parent=100 // pred_fallthru
          _
      $region101: #{text_generation_forward.2} parent=5 // pred_fallthru
        _
    $region6: #{text_generation_forward.2} parent=1 // loop_footer
      %s16 = sadd.s32 1, %s12
    $region7: #{text_generation_forward.2} parent=1 // loop_footer_branch
      %11 = sbr.rel target = $region3
    $region8: #{text_generation_forward.2} parent=1 // loop_exit
      _
    %465 = vsyncpa [#allocation4], 1
    %s466 = scalar_lea.sflag [#allocation4], 1
    %467 = vsyncpa %s466, 1

// kernel: text_generation_forward.3
$region0: #{text_generation_forward.3}
  #allocation0 [shape = 'u32[]', space=smem, size = 0x4, offset = 0x4, fixed_abs, tag = 'smem constant byte address 0x4 - core index']
  #allocation1 [shape = 'u32[144,128]{1,0:T(1,128)}', space=vmem, size = 0x12000, scoped, tag = 'internal scratch']
  #allocation2 [shape = 'f32[8,128]{1,0:T(8,128)}', space=vmem, size = 0x1000, scoped, tag = 'scratch operand']
  #allocation3 [shape = 'f32[8,128]{1,0:T(8,128)}', space=vmem, size = 0x1000, scoped, tag = 'scratch operand']
  #allocation4 [shape = 'f32[64,128]{1,0:T(8,128)}', space=vmem, size = 0x8000, scoped, tag = 'scratch operand']
  #allocation5 [shape = 's32[1]{0}', space=sflag, size = 0x4, scoped, tag = 'scoped memory for text_generation_forward.3']
  #allocation6 [shape = 'u8[512]{0}', space=smem, size = 0x200, scoped, tag = 'prefetched SMEM operand 0']
  %s0 = inlined_call_operand.vmem [shape: s32[128], index: 0, kind: input, shape index: {}]
  %s1 = inlined_call_operand.vmem [shape: f32[32,512], index: 1, kind: input, shape index: {}]
  %s2 = inlined_call_operand.vmem [shape: f32[128,512], index: 2, kind: input, shape index: {}]
  %s3 = inlined_call_operand.vmem [shape: bf16[128,32], index: 3, kind: input, shape index: {}]
  %s4 = inlined_call_operand.vmem [shape: f32[1,32], index: 4, kind: input, shape index: {}]
  %s5 = inlined_call_operand.hbm [shape: f32[128,32], index: 5, kind: output, shape index: {}]
  %s6 = sld [smem:[#allocation0]]
  $region53: #{text_generation_forward.3} parent=0
    _
  %s8 = ssub.s32 1, %s6
  %s9 = scalar_select 0, %s8, %s6
  %s10 = sshll.u32 %s0, 4
  %s11 = int_to_ptr.vmem [resolvable:$true] %s10
  %13 = dma.vmem_to_smem %s11, 16, [#allocation6], [#allocation5]
  %14 = dma.done [#allocation5], 16
  %15 = sfence
  $region1: #{text_generation_forward.3} parent=0
    #allocation7 [shape = 'u8[65536]{0}', space=vmem, size = 0x10000, scoped, tag = 'output window, operand 0']
    #allocation8 [shape = 's32[2]{0}', space=sflag, size = 0x8, scoped, tag = 'scoped memory for text_generation_forward.3']
    %16 = vsyncpa [#allocation8], 0
    %s17 = scalar_lea.sflag [#allocation8], 1
    %18 = vsyncpa %s17, 0
    loop: start=0, step=1, limit=4
    $region2: #{text_generation_forward.3} parent=1 // loop_pre_header
      _
    $region3: #{text_generation_forward.3} parent=1 // loop_header
      %s20 = sphi 0, %s24
      %p21 = scmp.ge.s32.totalorder %s20, 4
      %s28 = sphi 0, %s28
      %s30 = sphi 0, %s28
      %s31 = sphi 0, %s30
      %s45 = sphi 0, %s31
      %s49 = sphi 0, %s49
      %s51 = sphi 0, %s49
      %s52 = sphi 0, %s51
      %s66 = sphi 0, %s52
      %s70 = sphi 0, %s70
      %s72 = sphi 0, %s70
      %s73 = sphi 0, %s72
      %s87 = sphi 0, %s73
      %s91 = sphi 0, %s91
      %s93 = sphi 0, %s91
      %s94 = sphi 0, %s93
      %s108 = sphi 0, %s94
      %s114 = sphi 0, %s116
      %s117 = sphi 0, %s114
      %s118 = sphi 0, %s117
      %s134 = sphi 0, %s118
    $region4: #{text_generation_forward.3} parent=1 // loop_header_branch
      %23 = sbr.rel (%p21) target = $region8
    $region5: #{text_generation_forward.3} parent=1 // loop_body
      %s25 = ssub.s32 %s20, 1
      %s26 = ssub.s32 %s20, 2
      %s27 = sadd.s32 %s20, 1
      %s29 = sadd.s32 %s28, 1
      %p32 = scmp.eq.s32.totalorder %s20, 1
      %p33 = scmp.ne.s32.totalorder %s28, %s30
      %p34 = scmp.eq.s32.totalorder %s20, 0
      %p35 = por %p33, %p34
      %p36 = scmp.ne.s32.totalorder %s28, %s30
      %p37 = scmp.eq.s32.totalorder %s25, 1
      %p38 = por %p36, %p37
      %p39 = scmp.ne.s32.totalorder %s30, %s31
      %p40 = scmp.eq.s32.totalorder %s25, 0
      %p41 = por %p39, %p40
      %p42 = scmp.ne.s32.totalorder %s30, %s31
      %p43 = scmp.eq.s32.totalorder %s26, 1
      %p44 = por %p42, %p43
      %p46 = scmp.ne.s32.totalorder %s31, %s45
      %p47 = scmp.eq.s32.totalorder %s26, 0
      %p48 = por %p46, %p47
      %s50 = sadd.s32 %s49, 1
      %p53 = scmp.eq.s32.totalorder %s20, 1
      %p54 = scmp.ne.s32.totalorder %s49, %s51
      %p55 = scmp.eq.s32.totalorder %s20, 0
      %p56 = por %p54, %p55
      %p57 = scmp.ne.s32.totalorder %s49, %s51
      %p58 = scmp.eq.s32.totalorder %s25, 1
      %p59 = por %p57, %p58
      %p60 = scmp.ne.s32.totalorder %s51, %s52
      %p61 = scmp.eq.s32.totalorder %s25, 0
      %p62 = por %p60, %p61
      %p63 = scmp.ne.s32.totalorder %s51, %s52
      %p64 = scmp.eq.s32.totalorder %s26, 1
      %p65 = por %p63, %p64
      %p67 = scmp.ne.s32.totalorder %s52, %s66
      %p68 = scmp.eq.s32.totalorder %s26, 0
      %p69 = por %p67, %p68
      %s71 = sadd.s32 %s70, 1
      %p74 = scmp.eq.s32.totalorder %s20, 1
      %p75 = scmp.ne.s32.totalorder %s70, %s72
      %p76 = scmp.eq.s32.totalorder %s20, 0
      %p77 = por %p75, %p76
      %p78 = scmp.ne.s32.totalorder %s70, %s72
      %p79 = scmp.eq.s32.totalorder %s25, 1
      %p80 = por %p78, %p79
      %p81 = scmp.ne.s32.totalorder %s72, %s73
      %p82 = scmp.eq.s32.totalorder %s25, 0
      %p83 = por %p81, %p82
      %p84 = scmp.ne.s32.totalorder %s72, %s73
      %p85 = scmp.eq.s32.totalorder %s26, 1
      %p86 = por %p84, %p85
      %p88 = scmp.ne.s32.totalorder %s73, %s87
      %p89 = scmp.eq.s32.totalorder %s26, 0
      %p90 = por %p88, %p89
      %s92 = sadd.s32 %s91, 1
      %p95 = scmp.eq.s32.totalorder %s20, 1
      %p96 = scmp.ne.s32.totalorder %s91, %s93
      %p97 = scmp.eq.s32.totalorder %s20, 0
      %p98 = por %p96, %p97
      %p99 = scmp.ne.s32.totalorder %s91, %s93
      %p100 = scmp.eq.s32.totalorder %s25, 1
      %p101 = por %p99, %p100
      %p102 = scmp.ne.s32.totalorder %s93, %s94
      %p103 = scmp.eq.s32.totalorder %s25, 0
      %p104 = por %p102, %p103
      %p105 = scmp.ne.s32.totalorder %s93, %s94
      %p106 = scmp.eq.s32.totalorder %s26, 1
      %p107 = por %p105, %p106
      %p109 = scmp.ne.s32.totalorder %s94, %s108
      %p110 = scmp.eq.s32.totalorder %s26, 0
      %p111 = por %p109, %p110
      %s112 = ssub.s32 %s20, %s27
      %p113 = scmp.eq.s32.totalorder %s112, 0
      %s115 = sadd.s32 %s114, 1
      %s116 = scalar_select %p113, %s114, %s115
      %p119 = pneg %p113
      %p120 = scmp.eq.s32.totalorder %s20, 1
      %p121 = por %p119, %p120
      %p122 = scmp.ne.s32.totalorder %s114, %s117
      %p123 = scmp.eq.s32.totalorder %s20, 0
      %p124 = por %p122, %p123
      %p125 = scmp.ne.s32.totalorder %s114, %s117
      %p126 = scmp.eq.s32.totalorder %s25, 1
      %p127 = por %p125, %p126
      %p128 = scmp.ne.s32.totalorder %s117, %s118
      %p129 = scmp.eq.s32.totalorder %s25, 0
      %p130 = por %p128, %p129
      %p131 = scmp.ne.s32.totalorder %s117, %s118
      %p132 = scmp.eq.s32.totalorder %s26, 1
      %p133 = por %p131, %p132
      %p135 = scmp.ne.s32.totalorder %s118, %s134
      %p136 = scmp.eq.s32.totalorder %s26, 0
      %p137 = por %p135, %p136
      %p138 = scmp.le.s32.totalorder 1, %s20
      %p139 = scmp.lt.s32.totalorder %s20, 3
      %p140 = pnand %p138, %p139
      %p141 = pneg %p140
      // Predicated region
      $region9: #{text_generation_forward.3} parent=5 // pred_check
        _
      $region10: #{text_generation_forward.3} parent=5 // pred_check_branch
        %143 = sbr.rel (%p140) target = $region12
      $region11: #{text_generation_forward.3} parent=5 // pred_region
        %s144 = ssub.s32 %s20, 1
        // Predicated region
        $region13: #{text_generation_forward.3} parent=11 // pred_check
          %p145 = pneg %p41
        $region14: #{text_generation_forward.3} parent=11 // pred_check_branch
          %147 = sbr.rel (%p145) target = $region16
        $region15: #{text_generation_forward.3} parent=11 // pred_region
          _
        $region16: #{text_generation_forward.3} parent=11 // pred_fallthru
          _
        // Predicated region
        $region17: #{text_generation_forward.3} parent=11 // pred_check
          %p148 = pneg %p62
        $region18: #{text_generation_forward.3} parent=11 // pred_check_branch
          %150 = sbr.rel (%p148) target = $region20
        $region19: #{text_generation_forward.3} parent=11 // pred_region
          _
        $region20: #{text_generation_forward.3} parent=11 // pred_fallthru
          _
        // Predicated region
        $region21: #{text_generation_forward.3} parent=11 // pred_check
          %p151 = pneg %p83
        $region22: #{text_generation_forward.3} parent=11 // pred_check_branch
          %153 = sbr.rel (%p151) target = $region24
        $region23: #{text_generation_forward.3} parent=11 // pred_region
          _
        $region24: #{text_generation_forward.3} parent=11 // pred_fallthru
          _
        // Predicated region
        $region25: #{text_generation_forward.3} parent=11 // pred_check
          %p154 = pneg %p104
        $region26: #{text_generation_forward.3} parent=11 // pred_check_branch
          %156 = sbr.rel (%p154) target = $region28
        $region27: #{text_generation_forward.3} parent=11 // pred_region
          _
        $region28: #{text_generation_forward.3} parent=11 // pred_fallthru
          _
      $region12: #{text_generation_forward.3} parent=5 // pred_fallthru
        _
      %p157 = scmp.lt.s32.totalorder %s20, 2
      // Predicated region
      $region29: #{text_generation_forward.3} parent=5 // pred_check
        %p158 = pneg %p157
      $region30: #{text_generation_forward.3} parent=5 // pred_check_branch
        %160 = sbr.rel (%p158) target = $region32
      $region31: #{text_generation_forward.3} parent=5 // pred_region
        _
      $region32: #{text_generation_forward.3} parent=5 // pred_fallthru
        _
      %p161 = scmp.le.s32.totalorder 1, %s20
      %p162 = scmp.lt.s32.totalorder %s20, 3
      %p163 = pnand %p161, %p162
      %p164 = pneg %p163
      // Predicated region
      $region33: #{text_generation_forward.3} parent=5 // pred_check
        _
      $region34: #{text_generation_forward.3} parent=5 // pred_check_branch
        %166 = sbr.rel (%p163) target = $region36
      $region35: #{text_generation_forward.3} parent=5 // pred_region
        %s167 = ssub.s32 %s20, 1
        %p168 = pneg %p41
        %p169 = pneg %p38
        %p170 = pneg %p62
        %p171 = pneg %p59
        %p172 = pneg %p83
        %p173 = pneg %p80
        %p174 = pneg %p104
        %p175 = pneg %p101
        %p176 = pneg %p130
        %p177 = pneg %p127
        %s178 = sand.u32 %s117, 1
        %s179 = scalar_lea.sflag [#allocation8], %s178
        %s180 = sand.u32 %s117, 1
        %s181 = smul.addr %s180, 64
        %s182 = scalar_lea.vmem [#allocation7], %s181
        %s183 = smul.u32 8, %s25
        %p185 = scmp.eq.s32.totalorder %s25, 0
        // Predicated region
        $region37: #{text_generation_forward.3} parent=35 // pred_check
          %p186 = pneg %p185
        $region38: #{text_generation_forward.3} parent=35 // pred_check_branch
          %188 = sbr.rel (%p186) target = $region40
        $region39: #{text_generation_forward.3} parent=35 // pred_region
          %189 = vst [vmem:[#allocation2] sm:$0xff] 0.0
          %190 = vst [vmem:[#allocation3] sm:$0xff] 0.0
        $region40: #{text_generation_forward.3} parent=35 // pred_fallthru
          _
        %v191 = vld [vmem:[%s2] sm:$0xff]
        %v192 = vld [vmem:[%s2 + $0x8] sm:$0xff]
        %v193 = vld [vmem:[%s2 + $0x10] sm:$0xff]
        %v194 = vld [vmem:[%s2 + $0x18] sm:$0xff]
        %v195 = vld [vmem:[%s2 + $0x20] sm:$0xff]
        %v196 = vld [vmem:[%s2 + $0x28] sm:$0xff]
        %v197 = vld [vmem:[%s2 + $0x30] sm:$0xff]
        %v198 = vld [vmem:[%s2 + $0x38] sm:$0xff]
        %v199 = vld [vmem:[%s2 + $0x40] sm:$0xff]
        %v200 = vld [vmem:[%s2 + $0x48] sm:$0xff]
        %v201 = vld [vmem:[%s2 + $0x50] sm:$0xff]
        %v202 = vld [vmem:[%s2 + $0x58] sm:$0xff]
        %v203 = vld [vmem:[%s2 + $0x60] sm:$0xff]
        %v204 = vld [vmem:[%s2 + $0x68] sm:$0xff]
        %v205 = vld [vmem:[%s2 + $0x70] sm:$0xff]
        %v206 = vld [vmem:[%s2 + $0x78] sm:$0xff]
        %v207 = vld [vmem:[%s2 + $0x80] sm:$0xff]
        %v208 = vld [vmem:[%s2 + $0x88] sm:$0xff]
        %v209 = vld [vmem:[%s2 + $0x90] sm:$0xff]
        %v210 = vld [vmem:[%s2 + $0x98] sm:$0xff]
        %v211 = vld [vmem:[%s2 + $0xa0] sm:$0xff]
        %v212 = vld [vmem:[%s2 + $0xa8] sm:$0xff]
        %v213 = vld [vmem:[%s2 + $0xb0] sm:$0xff]
        %v214 = vld [vmem:[%s2 + $0xb8] sm:$0xff]
        %v215 = vld [vmem:[%s2 + $0xc0] sm:$0xff]
        %v216 = vld [vmem:[%s2 + $0xc8] sm:$0xff]
        %v217 = vld [vmem:[%s2 + $0xd0] sm:$0xff]
        %v218 = vld [vmem:[%s2 + $0xd8] sm:$0xff]
        %v219 = vld [vmem:[%s2 + $0xe0] sm:$0xff]
        %v220 = vld [vmem:[%s2 + $0xe8] sm:$0xff]
        %v221 = vld [vmem:[%s2 + $0xf0] sm:$0xff]
        %v222 = vld [vmem:[%s2 + $0xf8] sm:$0xff]
        %v223 = vld [vmem:[%s2 + $0x100] sm:$0xff]
        %v224 = vld [vmem:[%s2 + $0x108] sm:$0xff]
        %v225 = vld [vmem:[%s2 + $0x110] sm:$0xff]
        %v226 = vld [vmem:[%s2 + $0x118] sm:$0xff]
        %v227 = vld [vmem:[%s2 + $0x120] sm:$0xff]
        %v228 = vld [vmem:[%s2 + $0x128] sm:$0xff]
        %v229 = vld [vmem:[%s2 + $0x130] sm:$0xff]
        %v230 = vld [vmem:[%s2 + $0x138] sm:$0xff]
        %v231 = vld [vmem:[%s2 + $0x140] sm:$0xff]
        %v232 = vld [vmem:[%s2 + $0x148] sm:$0xff]
        %v233 = vld [vmem:[%s2 + $0x150] sm:$0xff]
        %v234 = vld [vmem:[%s2 + $0x158] sm:$0xff]
        %v235 = vld [vmem:[%s2 + $0x160] sm:$0xff]
        %v236 = vld [vmem:[%s2 + $0x168] sm:$0xff]
        %v237 = vld [vmem:[%s2 + $0x170] sm:$0xff]
        %v238 = vld [vmem:[%s2 + $0x178] sm:$0xff]
        %v239 = vld [vmem:[%s2 + $0x180] sm:$0xff]
        %v240 = vld [vmem:[%s2 + $0x188] sm:$0xff]
        %v241 = vld [vmem:[%s2 + $0x190] sm:$0xff]
        %v242 = vld [vmem:[%s2 + $0x198] sm:$0xff]
        %v243 = vld [vmem:[%s2 + $0x1a0] sm:$0xff]
        %v244 = vld [vmem:[%s2 + $0x1a8] sm:$0xff]
        %v245 = vld [vmem:[%s2 + $0x1b0] sm:$0xff]
        %v246 = vld [vmem:[%s2 + $0x1b8] sm:$0xff]
        %v247 = vld [vmem:[%s2 + $0x1c0] sm:$0xff]
        %v248 = vld [vmem:[%s2 + $0x1c8] sm:$0xff]
        %v249 = vld [vmem:[%s2 + $0x1d0] sm:$0xff]
        %v250 = vld [vmem:[%s2 + $0x1d8] sm:$0xff]
        %v251 = vld [vmem:[%s2 + $0x1e0] sm:$0xff]
        %v252 = vld [vmem:[%s2 + $0x1e8] sm:$0xff]
        %v253 = vld [vmem:[%s2 + $0x1f0] sm:$0xff]
        %v254 = vld [vmem:[%s2 + $0x1f8] sm:$0xff]
        %s255 = smul.u32 %s25, 8
        %v256 = vld [vmem:[#allocation2] sm:$0xff]
        %v257 = vld [vmem:[#allocation3] sm:$0xff]
        %s258 = smul.u32 %s25, 64
        %s259 = sld [smem:[#allocation6 + %s258]]
        %s260 = sshra.s32 %s259, 3
        %s261 = sand.u32 %s259, 7
        %s262 = sshra.s32 %s259, 3
        %s263 = sand.u32 %s259, 7
        %s264 = smul.u32 %s260, 4
        %s265 = smul.u32 %s264, 8
        %s266 = sadd.s32 %s265, %s263
        %s267 = scalar_lea.vmem %s1, %s266
        %v268 = vld [vmem:[%s267] ss:$8 sm:$0xf]
        %s269 = sadd.s32 %s258, 1
        %s270 = sld [smem:[#allocation6 + %s269]]
        %s271 = sshra.s32 %s270, 3
        %s272 = sand.u32 %s270, 7
        %s273 = sshra.s32 %s270, 3
        %s274 = sand.u32 %s270, 7
        %s275 = smul.u32 %s271, 4
        %s276 = smul.u32 %s275, 8
        %s277 = sadd.s32 %s276, %s274
        %s278 = scalar_lea.vmem %s1, %s277
        %v279 = vld [vmem:[%s278] ss:$8 sm:$0xf]
        %s280 = sadd.s32 %s258, 2
        %s281 = sld [smem:[#allocation6 + %s280]]
        %s282 = sshra.s32 %s281, 3
        %s283 = sand.u32 %s281, 7
        %s284 = sshra.s32 %s281, 3
        %s285 = sand.u32 %s281, 7
        %s286 = smul.u32 %s282, 4
        %s287 = smul.u32 %s286, 8
        %s288 = sadd.s32 %s287, %s285
        %s289 = scalar_lea.vmem %s1, %s288
        %v290 = vld [vmem:[%s289] ss:$8 sm:$0xf]
        %s291 = sadd.s32 %s258, 3
        %s292 = sld [smem:[#allocation6 + %s291]]
        %s293 = sshra.s32 %s292, 3
        %s294 = sand.u32 %s292, 7
        %s295 = sshra.s32 %s292, 3
        %s296 = sand.u32 %s292, 7
        %s297 = smul.u32 %s293, 4
        %s298 = smul.u32 %s297, 8
        %s299 = sadd.s32 %s298, %s296
        %s300 = scalar_lea.vmem %s1, %s299
        %v301 = vld [vmem:[%s300] ss:$8 sm:$0xf]
        %s302 = sadd.s32 %s258, 4
        %s303 = sld [smem:[#allocation6 + %s302]]
        %s304 = sshra.s32 %s303, 3
        %s305 = sand.u32 %s303, 7
        %s306 = sshra.s32 %s303, 3
        %s307 = sand.u32 %s303, 7
        %s308 = smul.u32 %s304, 4
        %s309 = smul.u32 %s308, 8
        %s310 = sadd.s32 %s309, %s307
        %s311 = scalar_lea.vmem %s1, %s310
        %v312 = vld [vmem:[%s311] ss:$8 sm:$0xf]
        %s313 = sadd.s32 %s258, 5
        %s314 = sld [smem:[#allocation6 + %s313]]
        %s315 = sshra.s32 %s314, 3
        %s316 = sand.u32 %s314, 7
        %s317 = sshra.s32 %s314, 3
        %s318 = sand.u32 %s314, 7
        %s319 = smul.u32 %s315, 4
        %s320 = smul.u32 %s319, 8
        %s321 = sadd.s32 %s320, %s318
        %s322 = scalar_lea.vmem %s1, %s321
        %v323 = vld [vmem:[%s322] ss:$8 sm:$0xf]
        %s324 = sadd.s32 %s258, 6
        %s325 = sld [smem:[#allocation6 + %s324]]
        %s326 = sshra.s32 %s325, 3
        %s327 = sand.u32 %s325, 7
        %s328 = sshra.s32 %s325, 3
        %s329 = sand.u32 %s325, 7
        %s330 = smul.u32 %s326, 4
        %s331 = smul.u32 %s330, 8
        %s332 = sadd.s32 %s331, %s329
        %s333 = scalar_lea.vmem %s1, %s332
        %v334 = vld [vmem:[%s333] ss:$8 sm:$0xf]
        %s335 = sadd.s32 %s258, 7
        %s336 = sld [smem:[#allocation6 + %s335]]
        %s337 = sshra.s32 %s336, 3
        %s338 = sand.u32 %s336, 7
        %s339 = sshra.s32 %s336, 3
        %s340 = sand.u32 %s336, 7
        %s341 = smul.u32 %s337, 4
        %s342 = smul.u32 %s341, 8
        %s343 = sadd.s32 %s342, %s340
        %s344 = scalar_lea.vmem %s1, %s343
        %v345 = vld [vmem:[%s344] ss:$8 sm:$0xf]
        %v347 = vlaneseq
        %v348 = vshrl.u32 %v347, 7
        %v349 = vsub.s32 0, %v348
        %v350 = vrot.slane %v268, %v349
        %v351 = vlaneseq
        %v352 = vshrl.u32 %v351, 7
        %v353 = vsub.s32 1, %v352
        %v354 = vrot.slane %v268, %v353
        %v355 = vlaneseq
        %v356 = vshrl.u32 %v355, 7
        %v357 = vsub.s32 2, %v356
        %v358 = vrot.slane %v268, %v357
        %v359 = vlaneseq
        %v360 = vshrl.u32 %v359, 7
        %v361 = vsub.s32 3, %v360
        %v362 = vrot.slane %v268, %v361
        %v368 = vlaneseq
        %v369 = vshrl.u32 %v368, 7
        %v370 = vsub.s32 0, %v369
        %v371 = vrot.slane %v279, %v370
        %v372 = vlaneseq
        %v373 = vshrl.u32 %v372, 7
        %v374 = vsub.s32 1, %v373
        %v375 = vrot.slane %v279, %v374
        %v376 = vlaneseq
        %v377 = vshrl.u32 %v376, 7
        %v378 = vsub.s32 2, %v377
        %v379 = vrot.slane %v279, %v378
        %v380 = vlaneseq
        %v381 = vshrl.u32 %v380, 7
        %v382 = vsub.s32 3, %v381
        %v383 = vrot.slane %v279, %v382
        %v389 = vlaneseq
        %v390 = vshrl.u32 %v389, 7
        %v391 = vsub.s32 0, %v390
        %v392 = vrot.slane %v290, %v391
        %v393 = vlaneseq
        %v394 = vshrl.u32 %v393, 7
        %v395 = vsub.s32 1, %v394
        %v396 = vrot.slane %v290, %v395
        %v397 = vlaneseq
        %v398 = vshrl.u32 %v397, 7
        %v399 = vsub.s32 2, %v398
        %v400 = vrot.slane %v290, %v399
        %v401 = vlaneseq
        %v402 = vshrl.u32 %v401, 7
        %v403 = vsub.s32 3, %v402
        %v404 = vrot.slane %v290, %v403
        %v410 = vlaneseq
        %v411 = vshrl.u32 %v410, 7
        %v412 = vsub.s32 0, %v411
        %v413 = vrot.slane %v301, %v412
        %v414 = vlaneseq
        %v415 = vshrl.u32 %v414, 7
        %v416 = vsub.s32 1, %v415
        %v417 = vrot.slane %v301, %v416
        %v418 = vlaneseq
        %v419 = vshrl.u32 %v418, 7
        %v420 = vsub.s32 2, %v419
        %v421 = vrot.slane %v301, %v420
        %v422 = vlaneseq
        %v423 = vshrl.u32 %v422, 7
        %v424 = vsub.s32 3, %v423
        %v425 = vrot.slane %v301, %v424
        %v431 = vlaneseq
        %v432 = vshrl.u32 %v431, 7
        %v433 = vsub.s32 0, %v432
        %v434 = vrot.slane %v312, %v433
        %v435 = vlaneseq
        %v436 = vshrl.u32 %v435, 7
        %v437 = vsub.s32 1, %v436
        %v438 = vrot.slane %v312, %v437
        %v439 = vlaneseq
        %v440 = vshrl.u32 %v439, 7
        %v441 = vsub.s32 2, %v440
        %v442 = vrot.slane %v312, %v441
        %v443 = vlaneseq
        %v444 = vshrl.u32 %v443, 7
        %v445 = vsub.s32 3, %v444
        %v446 = vrot.slane %v312, %v445
        %v452 = vlaneseq
        %v453 = vshrl.u32 %v452, 7
        %v454 = vsub.s32 0, %v453
        %v455 = vrot.slane %v323, %v454
        %v456 = vlaneseq
        %v457 = vshrl.u32 %v456, 7
        %v458 = vsub.s32 1, %v457
        %v459 = vrot.slane %v323, %v458
        %v460 = vlaneseq
        %v461 = vshrl.u32 %v460, 7
        %v462 = vsub.s32 2, %v461
        %v463 = vrot.slane %v323, %v462
        %v464 = vlaneseq
        %v465 = vshrl.u32 %v464, 7
        %v466 = vsub.s32 3, %v465
        %v467 = vrot.slane %v323, %v466
        %v473 = vlaneseq
        %v474 = vshrl.u32 %v473, 7
        %v475 = vsub.s32 0, %v474
        %v476 = vrot.slane %v334, %v475
        %v477 = vlaneseq
        %v478 = vshrl.u32 %v477, 7
        %v479 = vsub.s32 1, %v478
        %v480 = vrot.slane %v334, %v479
        %v481 = vlaneseq
        %v482 = vshrl.u32 %v481, 7
        %v483 = vsub.s32 2, %v482
        %v484 = vrot.slane %v334, %v483
        %v485 = vlaneseq
        %v486 = vshrl.u32 %v485, 7
        %v487 = vsub.s32 3, %v486
        %v488 = vrot.slane %v334, %v487
        %v494 = vlaneseq
        %v495 = vshrl.u32 %v494, 7
        %v496 = vsub.s32 0, %v495
        %v497 = vrot.slane %v345, %v496
        %v498 = vlaneseq
        %v499 = vshrl.u32 %v498, 7
        %v500 = vsub.s32 1, %v499
        %v501 = vrot.slane %v345, %v500
        %v502 = vlaneseq
        %v503 = vshrl.u32 %v502, 7
        %v504 = vsub.s32 2, %v503
        %v505 = vrot.slane %v345, %v504
        %v506 = vlaneseq
        %v507 = vshrl.u32 %v506, 7
        %v508 = vsub.s32 3, %v507
        %v509 = vrot.slane %v345, %v508
        %vm514 = vcmask 1040384
        %v515 = vsel %vm514, %v350, %v371
        %v516 = vsel %vm514, %v354, %v375
        %v517 = vsel %vm514, %v358, %v379
        %v518 = vsel %vm514, %v362, %v383
        %vm519 = vcmask 1041408
        %v520 = vsel %vm519, %v515, %v392
        %v521 = vsel %vm519, %v516, %v396
        %v522 = vsel %vm519, %v517, %v400
        %v523 = vsel %vm519, %v518, %v404
        %vm524 = vcmask 1042432
        %v525 = vsel %vm524, %v520, %v413
        %v526 = vsel %vm524, %v521, %v417
        %v527 = vsel %vm524, %v522, %v421
        %v528 = vsel %vm524, %v523, %v425
        %vm529 = vcmask 1043456
        %v530 = vsel %vm529, %v525, %v434
        %v531 = vsel %vm529, %v526, %v438
        %v532 = vsel %vm529, %v527, %v442
        %v533 = vsel %vm529, %v528, %v446
        %vm534 = vcmask 1044480
        %v535 = vsel %vm534, %v530, %v455
        %v536 = vsel %vm534, %v531, %v459
        %v537 = vsel %vm534, %v532, %v463
        %v538 = vsel %vm534, %v533, %v467
        %vm539 = vcmask 1045504
        %v540 = vsel %vm539, %v535, %v476
        %v541 = vsel %vm539, %v536, %v480
        %v542 = vsel %vm539, %v537, %v484
        %v543 = vsel %vm539, %v538, %v488
        %vm544 = vcmask 1046528
        %v545 = vsel %vm544, %v540, %v497
        %v546 = vsel %vm544, %v541, %v501
        %v547 = vsel %vm544, %v542, %v505
        %v548 = vsel %vm544, %v543, %v509
        %549 = vmatprep.subr.mxu0 %v192
        %550 = vmatpush1.msra.mxu0 %v191
        %551 = vmatprep.subr.mxu0 %v196
        %552 = vmatpush1.msra.mxu0 %v195
        %553 = vmatprep.subr.mxu0 %v200
        %554 = vmatpush1.msra.mxu0 %v199
        %555 = vmatprep.subr.mxu0 %v204
        %556 = vmatpush1.msra.mxu0 %v203
        %557 = vmatprep.subr.mxu0 %v208
        %558 = vmatpush1.msra.mxu0 %v207
        %559 = vmatprep.subr.mxu0 %v212
        %560 = vmatpush1.msra.mxu0 %v211
        %561 = vmatprep.subr.mxu0 %v216
        %562 = vmatpush1.msra.mxu0 %v215
        %563 = vmatprep.subr.mxu0 %v220
        %564 = vmatpush1.msra.mxu0 %v219
        %565 = vmatprep.subr.mxu0 %v224
        %566 = vmatpush1.msra.mxu0 %v223
        %567 = vmatprep.subr.mxu0 %v228
        %568 = vmatpush1.msra.mxu0 %v227
        %569 = vmatprep.subr.mxu0 %v232
        %570 = vmatpush1.msra.mxu0 %v231
        %571 = vmatprep.subr.mxu0 %v236
        %572 = vmatpush1.msra.mxu0 %v235
        %573 = vmatprep.subr.mxu0 %v240
        %574 = vmatpush1.msra.mxu0 %v239
        %575 = vmatprep.subr.mxu0 %v244
        %576 = vmatpush1.msra.mxu0 %v243
        %577 = vmatprep.subr.mxu0 %v248
        %578 = vmatpush1.msra.mxu0 %v247
        %579 = vmatprep.subr.mxu0 %v252
        %580 = vmatpush1.msra.mxu0 %v251
        %581 = vmatprep.subr.mxu0 0.0
        %582 = vmatpush1.msra.mxu0 0.0
        %583 = vmatprep.subr.mxu0 0.0
        %584 = vmatpush1.msra.mxu0 0.0
        %585 = vmatprep.subr.mxu0 0.0
        %586 = vmatpush1.msra.mxu0 0.0
        %587 = vmatprep.subr.mxu0 0.0
        %588 = vmatpush1.msra.mxu0 0.0
        %589 = vmatprep.subr.mxu0 0.0
        %590 = vmatpush1.msra.mxu0 0.0
        %591 = vmatprep.subr.mxu0 0.0
        %592 = vmatpush1.msra.mxu0 0.0
        %593 = vmatprep.subr.mxu0 0.0
        %594 = vmatpush1.msra.mxu0 0.0
        %595 = vmatprep.subr.mxu0 0.0
        %596 = vmatpush1.msra.mxu0 0.0
        %597 = vmatprep.subr.mxu0 0.0
        %598 = vmatpush1.msra.mxu0 0.0
        %599 = vmatprep.subr.mxu0 0.0
        %600 = vmatpush1.msra.mxu0 0.0
        %601 = vmatprep.subr.mxu0 0.0
        %602 = vmatpush1.msra.mxu0 0.0
        %603 = vmatprep.subr.mxu0 0.0
        %604 = vmatpush1.msra.mxu0 0.0
        %605 = vmatprep.subr.mxu0 0.0
        %606 = vmatpush1.msra.mxu0 0.0
        %607 = vmatprep.subr.mxu0 0.0
        %608 = vmatpush1.msra.mxu0 0.0
        %609 = vmatprep.subr.mxu0 0.0
        %610 = vmatpush1.msra.mxu0 0.0
        %611 = vmatprep.subr.mxu0 0.0
        %612 = vmatpush1.msra.mxu0 0.0
        %613 = vmatprep.mubr.f32.mxu0 0.0
        %614 = vmatmul.mubr.f32.gmra.mrb[0].mxu0 %v256
        %v615 = vpop.f32.mrb[0].mxu0
        %v616 = vadd.f32 %v545, %v615
        %v617 = vpop.f32.mrb[0].mxu0
        %v618 = vadd.f32 %v546, %v617
        %619 = vdwg.mxu0
        %620 = vmatprep.subr.mxu0 %v194
        %621 = vmatpush1.msra.mxu0 %v193
        %622 = vmatprep.subr.mxu0 %v198
        %623 = vmatpush1.msra.mxu0 %v197
        %624 = vmatprep.subr.mxu0 %v202
        %625 = vmatpush1.msra.mxu0 %v201
        %626 = vmatprep.subr.mxu0 %v206
        %627 = vmatpush1.msra.mxu0 %v205
        %628 = vmatprep.subr.mxu0 %v210
        %629 = vmatpush1.msra.mxu0 %v209
        %630 = vmatprep.subr.mxu0 %v214
        %631 = vmatpush1.msra.mxu0 %v213
        %632 = vmatprep.subr.mxu0 %v218
        %633 = vmatpush1.msra.mxu0 %v217
        %634 = vmatprep.subr.mxu0 %v222
        %635 = vmatpush1.msra.mxu0 %v221
        %636 = vmatprep.subr.mxu0 %v226
        %637 = vmatpush1.msra.mxu0 %v225
        %638 = vmatprep.subr.mxu0 %v230
        %639 = vmatpush1.msra.mxu0 %v229
        %640 = vmatprep.subr.mxu0 %v234
        %641 = vmatpush1.msra.mxu0 %v233
        %642 = vmatprep.subr.mxu0 %v238
        %643 = vmatpush1.msra.mxu0 %v237
        %644 = vmatprep.subr.mxu0 %v242
        %645 = vmatpush1.msra.mxu0 %v241
        %646 = vmatprep.subr.mxu0 %v246
        %647 = vmatpush1.msra.mxu0 %v245
        %648 = vmatprep.subr.mxu0 %v250
        %649 = vmatpush1.msra.mxu0 %v249
        %650 = vmatprep.subr.mxu0 %v254
        %651 = vmatpush1.msra.mxu0 %v253
        %652 = vmatprep.subr.mxu0 0.0
        %653 = vmatpush1.msra.mxu0 0.0
        %654 = vmatprep.subr.mxu0 0.0
        %655 = vmatpush1.msra.mxu0 0.0
        %656 = vmatprep.subr.mxu0 0.0
        %657 = vmatpush1.msra.mxu0 0.0
        %658 = vmatprep.subr.mxu0 0.0
        %659 = vmatpush1.msra.mxu0 0.0
        %660 = vmatprep.subr.mxu0 0.0
        %661 = vmatpush1.msra.mxu0 0.0
        %662 = vmatprep.subr.mxu0 0.0
        %663 = vmatpush1.msra.mxu0 0.0
        %664 = vmatprep.subr.mxu0 0.0
        %665 = vmatpush1.msra.mxu0 0.0
        %666 = vmatprep.subr.mxu0 0.0
        %667 = vmatpush1.msra.mxu0 0.0
        %668 = vmatprep.subr.mxu0 0.0
        %669 = vmatpush1.msra.mxu0 0.0
        %670 = vmatprep.subr.mxu0 0.0
        %671 = vmatpush1.msra.mxu0 0.0
        %672 = vmatprep.subr.mxu0 0.0
        %673 = vmatpush1.msra.mxu0 0.0
        %674 = vmatprep.subr.mxu0 0.0
        %675 = vmatpush1.msra.mxu0 0.0
        %676 = vmatprep.subr.mxu0 0.0
        %677 = vmatpush1.msra.mxu0 0.0
        %678 = vmatprep.subr.mxu0 0.0
        %679 = vmatpush1.msra.mxu0 0.0
        %680 = vmatprep.subr.mxu0 0.0
        %681 = vmatpush1.msra.mxu0 0.0
        %682 = vmatprep.subr.mxu0 0.0
        %683 = vmatpush1.msra.mxu0 0.0
        %684 = vmatprep.mubr.f32.mxu0 0.0
        %685 = vmatmul.mubr.f32.gmra.mrb[0].mxu0 %v256
        %v686 = vpop.f32.mrb[0].mxu0
        %v687 = vadd.f32 %v547, %v686
        %v688 = vpop.f32.mrb[0].mxu0
        %v689 = vadd.f32 %v548, %v688
        %690 = vdwg.mxu0
        %v691 = vtanh.pop %v616
        %v692 = vmul.f32 %v618, 0.5
        %v693 = vtanh.pop %v692
        %v694 = vadd.f32 %v693, 1.0
        %v695 = vmul.f32 %v694, 0.5
        %v696 = vmul.f32 %v687, 0.5
        %v697 = vtanh.pop %v696
        %v698 = vadd.f32 %v697, 1.0
        %v699 = vmul.f32 %v698, 0.5
        %v700 = vmul.f32 %v689, 0.5
        %v701 = vtanh.pop %v700
        %v702 = vadd.f32 %v701, 1.0
        %v703 = vmul.f32 %v702, 0.5
        %v704 = vmul.f32 %v691, %v695
        %v705 = vmul.f32 %v257, %v699
        %v706 = vadd.f32 %v704, %v705
        %v707 = vtanh.pop %v706
        %v708 = vmul.f32 %v707, %v703
        %709 = vst [vmem:[#allocation4] sm:$0xff] %v708
        %s710 = sadd.s32 %s255, 1
        %s711 = smul.u32 %s710, 8
        %s712 = sld [smem:[#allocation6 + %s711]]
        %s713 = sshra.s32 %s712, 3
        %s714 = sand.u32 %s712, 7
        %s715 = sshra.s32 %s712, 3
        %s716 = sand.u32 %s712, 7
        %s717 = smul.u32 %s713, 4
        %s718 = smul.u32 %s717, 8
        %s719 = sadd.s32 %s718, %s716
        %s720 = scalar_lea.vmem %s1, %s719
        %v721 = vld [vmem:[%s720] ss:$8 sm:$0xf]
        %s722 = sadd.s32 %s711, 1
        %s723 = sld [smem:[#allocation6 + %s722]]
        %s724 = sshra.s32 %s723, 3
        %s725 = sand.u32 %s723, 7
        %s726 = sshra.s32 %s723, 3
        %s727 = sand.u32 %s723, 7
        %s728 = smul.u32 %s724, 4
        %s729 = smul.u32 %s728, 8
        %s730 = sadd.s32 %s729, %s727
        %s731 = scalar_lea.vmem %s1, %s730
        %v732 = vld [vmem:[%s731] ss:$8 sm:$0xf]
        %s733 = sadd.s32 %s711, 2
        %s734 = sld [smem:[#allocation6 + %s733]]
        %s735 = sshra.s32 %s734, 3
        %s736 = sand.u32 %s734, 7
        %s737 = sshra.s32 %s734, 3
        %s738 = sand.u32 %s734, 7
        %s739 = smul.u32 %s735, 4
        %s740 = smul.u32 %s739, 8
        %s741 = sadd.s32 %s740, %s738
        %s742 = scalar_lea.vmem %s1, %s741
        %v743 = vld [vmem:[%s742] ss:$8 sm:$0xf]
        %s744 = sadd.s32 %s711, 3
        %s745 = sld [smem:[#allocation6 + %s744]]
        %s746 = sshra.s32 %s745, 3
        %s747 = sand.u32 %s745, 7
        %s748 = sshra.s32 %s745, 3
        %s749 = sand.u32 %s745, 7
        %s750 = smul.u32 %s746, 4
        %s751 = smul.u32 %s750, 8
        %s752 = sadd.s32 %s751, %s749
        %s753 = scalar_lea.vmem %s1, %s752
        %v754 = vld [vmem:[%s753] ss:$8 sm:$0xf]
        %s755 = sadd.s32 %s711, 4
        %s756 = sld [smem:[#allocation6 + %s755]]
        %s757 = sshra.s32 %s756, 3
        %s758 = sand.u32 %s756, 7
        %s759 = sshra.s32 %s756, 3
        %s760 = sand.u32 %s756, 7
        %s761 = smul.u32 %s757, 4
        %s762 = smul.u32 %s761, 8
        %s763 = sadd.s32 %s762, %s760
        %s764 = scalar_lea.vmem %s1, %s763
        %v765 = vld [vmem:[%s764] ss:$8 sm:$0xf]
        %s766 = sadd.s32 %s711, 5
        %s767 = sld [smem:[#allocation6 + %s766]]
        %s768 = sshra.s32 %s767, 3
        %s769 = sand.u32 %s767, 7
        %s770 = sshra.s32 %s767, 3
        %s771 = sand.u32 %s767, 7
        %s772 = smul.u32 %s768, 4
        %s773 = smul.u32 %s772, 8
        %s774 = sadd.s32 %s773, %s771
        %s775 = scalar_lea.vmem %s1, %s774
        %v776 = vld [vmem:[%s775] ss:$8 sm:$0xf]
        %s777 = sadd.s32 %s711, 6
        %s778 = sld [smem:[#allocation6 + %s777]]
        %s779 = sshra.s32 %s778, 3
        %s780 = sand.u32 %s778, 7
        %s781 = sshra.s32 %s778, 3
        %s782 = sand.u32 %s778, 7
        %s783 = smul.u32 %s779, 4
        %s784 = smul.u32 %s783, 8
        %s785 = sadd.s32 %s784, %s782
        %s786 = scalar_lea.vmem %s1, %s785
        %v787 = vld [vmem:[%s786] ss:$8 sm:$0xf]
        %s788 = sadd.s32 %s711, 7
        %s789 = sld [smem:[#allocation6 + %s788]]
        %s790 = sshra.s32 %s789, 3
        %s791 = sand.u32 %s789, 7
        %s792 = sshra.s32 %s789, 3
        %s793 = sand.u32 %s789, 7
        %s794 = smul.u32 %s790, 4
        %s795 = smul.u32 %s794, 8
        %s796 = sadd.s32 %s795, %s793
        %s797 = scalar_lea.vmem %s1, %s796
        %v798 = vld [vmem:[%s797] ss:$8 sm:$0xf]
        %v800 = vlaneseq
        %v801 = vshrl.u32 %v800, 7
        %v802 = vsub.s32 0, %v801
        %v803 = vrot.slane %v721, %v802
        %v804 = vlaneseq
        %v805 = vshrl.u32 %v804, 7
        %v806 = vsub.s32 1, %v805
        %v807 = vrot.slane %v721, %v806
        %v808 = vlaneseq
        %v809 = vshrl.u32 %v808, 7
        %v810 = vsub.s32 2, %v809
        %v811 = vrot.slane %v721, %v810
        %v812 = vlaneseq
        %v813 = vshrl.u32 %v812, 7
        %v814 = vsub.s32 3, %v813
        %v815 = vrot.slane %v721, %v814
        %v821 = vlaneseq
        %v822 = vshrl.u32 %v821, 7
        %v823 = vsub.s32 0, %v822
        %v824 = vrot.slane %v732, %v823
        %v825 = vlaneseq
        %v826 = vshrl.u32 %v825, 7
        %v827 = vsub.s32 1, %v826
        %v828 = vrot.slane %v732, %v827
        %v829 = vlaneseq
        %v830 = vshrl.u32 %v829, 7
        %v831 = vsub.s32 2, %v830
        %v832 = vrot.slane %v732, %v831
        %v833 = vlaneseq
        %v834 = vshrl.u32 %v833, 7
        %v835 = vsub.s32 3, %v834
        %v836 = vrot.slane %v732, %v835
        %v842 = vlaneseq
        %v843 = vshrl.u32 %v842, 7
        %v844 = vsub.s32 0, %v843
        %v845 = vrot.slane %v743, %v844
        %v846 = vlaneseq
        %v847 = vshrl.u32 %v846, 7
        %v848 = vsub.s32 1, %v847
        %v849 = vrot.slane %v743, %v848
        %v850 = vlaneseq
        %v851 = vshrl.u32 %v850, 7
        %v852 = vsub.s32 2, %v851
        %v853 = vrot.slane %v743, %v852
        %v854 = vlaneseq
        %v855 = vshrl.u32 %v854, 7
        %v856 = vsub.s32 3, %v855
        %v857 = vrot.slane %v743, %v856
        %v863 = vlaneseq
        %v864 = vshrl.u32 %v863, 7
        %v865 = vsub.s32 0, %v864
        %v866 = vrot.slane %v754, %v865
        %v867 = vlaneseq
        %v868 = vshrl.u32 %v867, 7
        %v869 = vsub.s32 1, %v868
        %v870 = vrot.slane %v754, %v869
        %v871 = vlaneseq
        %v872 = vshrl.u32 %v871, 7
        %v873 = vsub.s32 2, %v872
        %v874 = vrot.slane %v754, %v873
        %v875 = vlaneseq
        %v876 = vshrl.u32 %v875, 7
        %v877 = vsub.s32 3, %v876
        %v878 = vrot.slane %v754, %v877
        %v884 = vlaneseq
        %v885 = vshrl.u32 %v884, 7
        %v886 = vsub.s32 0, %v885
        %v887 = vrot.slane %v765, %v886
        %v888 = vlaneseq
        %v889 = vshrl.u32 %v888, 7
        %v890 = vsub.s32 1, %v889
        %v891 = vrot.slane %v765, %v890
        %v892 = vlaneseq
        %v893 = vshrl.u32 %v892, 7
        %v894 = vsub.s32 2, %v893
        %v895 = vrot.slane %v765, %v894
        %v896 = vlaneseq
        %v897 = vshrl.u32 %v896, 7
        %v898 = vsub.s32 3, %v897
        %v899 = vrot.slane %v765, %v898
        %v905 = vlaneseq
        %v906 = vshrl.u32 %v905, 7
        %v907 = vsub.s32 0, %v906
        %v908 = vrot.slane %v776, %v907
        %v909 = vlaneseq
        %v910 = vshrl.u32 %v909, 7
        %v911 = vsub.s32 1, %v910
        %v912 = vrot.slane %v776, %v911
        %v913 = vlaneseq
        %v914 = vshrl.u32 %v913, 7
        %v915 = vsub.s32 2, %v914
        %v916 = vrot.slane %v776, %v915
        %v917 = vlaneseq
        %v918 = vshrl.u32 %v917, 7
        %v919 = vsub.s32 3, %v918
        %v920 = vrot.slane %v776, %v919
        %v926 = vlaneseq
        %v927 = vshrl.u32 %v926, 7
        %v928 = vsub.s32 0, %v927
        %v929 = vrot.slane %v787, %v928
        %v930 = vlaneseq
        %v931 = vshrl.u32 %v930, 7
        %v932 = vsub.s32 1, %v931
        %v933 = vrot.slane %v787, %v932
        %v934 = vlaneseq
        %v935 = vshrl.u32 %v934, 7
        %v936 = vsub.s32 2, %v935
        %v937 = vrot.slane %v787, %v936
        %v938 = vlaneseq
        %v939 = vshrl.u32 %v938, 7
        %v940 = vsub.s32 3, %v939
        %v941 = vrot.slane %v787, %v940
        %v947 = vlaneseq
        %v948 = vshrl.u32 %v947, 7
        %v949 = vsub.s32 0, %v948
        %v950 = vrot.slane %v798, %v949
        %v951 = vlaneseq
        %v952 = vshrl.u32 %v951, 7
        %v953 = vsub.s32 1, %v952
        %v954 = vrot.slane %v798, %v953
        %v955 = vlaneseq
        %v956 = vshrl.u32 %v955, 7
        %v957 = vsub.s32 2, %v956
        %v958 = vrot.slane %v798, %v957
        %v959 = vlaneseq
        %v960 = vshrl.u32 %v959, 7
        %v961 = vsub.s32 3, %v960
        %v962 = vrot.slane %v798, %v961
        %v967 = vsel %vm514, %v803, %v824
        %v968 = vsel %vm514, %v807, %v828
        %v969 = vsel %vm514, %v811, %v832
        %v970 = vsel %vm514, %v815, %v836
        %v971 = vsel %vm519, %v967, %v845
        %v972 = vsel %vm519, %v968, %v849
        %v973 = vsel %vm519, %v969, %v853
        %v974 = vsel %vm519, %v970, %v857
        %v975 = vsel %vm524, %v971, %v866
        %v976 = vsel %vm524, %v972, %v870
        %v977 = vsel %vm524, %v973, %v874
        %v978 = vsel %vm524, %v974, %v878
        %v979 = vsel %vm529, %v975, %v887
        %v980 = vsel %vm529, %v976, %v891
        %v981 = vsel %vm529, %v977, %v895
        %v982 = vsel %vm529, %v978, %v899
        %v983 = vsel %vm534, %v979, %v908
        %v984 = vsel %vm534, %v980, %v912
        %v985 = vsel %vm534, %v981, %v916
        %v986 = vsel %vm534, %v982, %v920
        %v987 = vsel %vm539, %v983, %v929
        %v988 = vsel %vm539, %v984, %v933
        %v989 = vsel %vm539, %v985, %v937
        %v990 = vsel %vm539, %v986, %v941
        %v991 = vsel %vm544, %v987, %v950
        %v992 = vsel %vm544, %v988, %v954
        %v993 = vsel %vm544, %v989, %v958
        %v994 = vsel %vm544, %v990, %v962
        %995 = vmatprep.subr.mxu0 %v192
        %996 = vmatpush1.msra.mxu0 %v191
        %997 = vmatprep.subr.mxu0 %v196
        %998 = vmatpush1.msra.mxu0 %v195
        %999 = vmatprep.subr.mxu0 %v200
        %1000 = vmatpush1.msra.mxu0 %v199
        %1001 = vmatprep.subr.mxu0 %v204
        %1002 = vmatpush1.msra.mxu0 %v203
        %1003 = vmatprep.subr.mxu0 %v208
        %1004 = vmatpush1.msra.mxu0 %v207
        %1005 = vmatprep.subr.mxu0 %v212
        %1006 = vmatpush1.msra.mxu0 %v211
        %1007 = vmatprep.subr.mxu0 %v216
        %1008 = vmatpush1.msra.mxu0 %v215
        %1009 = vmatprep.subr.mxu0 %v220
        %1010 = vmatpush1.msra.mxu0 %v219
        %1011 = vmatprep.subr.mxu0 %v224
        %1012 = vmatpush1.msra.mxu0 %v223
        %1013 = vmatprep.subr.mxu0 %v228
        %1014 = vmatpush1.msra.mxu0 %v227
        %1015 = vmatprep.subr.mxu0 %v232
        %1016 = vmatpush1.msra.mxu0 %v231
        %1017 = vmatprep.subr.mxu0 %v236
        %1018 = vmatpush1.msra.mxu0 %v235
        %1019 = vmatprep.subr.mxu0 %v240
        %1020 = vmatpush1.msra.mxu0 %v239
        %1021 = vmatprep.subr.mxu0 %v244
        %1022 = vmatpush1.msra.mxu0 %v243
        %1023 = vmatprep.subr.mxu0 %v248
        %1024 = vmatpush1.msra.mxu0 %v247
        %1025 = vmatprep.subr.mxu0 %v252
        %1026 = vmatpush1.msra.mxu0 %v251
        %1027 = vmatprep.subr.mxu0 0.0
        %1028 = vmatpush1.msra.mxu0 0.0
        %1029 = vmatprep.subr.mxu0 0.0
        %1030 = vmatpush1.msra.mxu0 0.0
        %1031 = vmatprep.subr.mxu0 0.0
        %1032 = vmatpush1.msra.mxu0 0.0
        %1033 = vmatprep.subr.mxu0 0.0
        %1034 = vmatpush1.msra.mxu0 0.0
        %1035 = vmatprep.subr.mxu0 0.0
        %1036 = vmatpush1.msra.mxu0 0.0
        %1037 = vmatprep.subr.mxu0 0.0
        %1038 = vmatpush1.msra.mxu0 0.0
        %1039 = vmatprep.subr.mxu0 0.0
        %1040 = vmatpush1.msra.mxu0 0.0
        %1041 = vmatprep.subr.mxu0 0.0
        %1042 = vmatpush1.msra.mxu0 0.0
        %1043 = vmatprep.subr.mxu0 0.0
        %1044 = vmatpush1.msra.mxu0 0.0
        %1045 = vmatprep.subr.mxu0 0.0
        %1046 = vmatpush1.msra.mxu0 0.0
        %1047 = vmatprep.subr.mxu0 0.0
        %1048 = vmatpush1.msra.mxu0 0.0
        %1049 = vmatprep.subr.mxu0 0.0
        %1050 = vmatpush1.msra.mxu0 0.0
        %1051 = vmatprep.subr.mxu0 0.0
        %1052 = vmatpush1.msra.mxu0 0.0
        %1053 = vmatprep.subr.mxu0 0.0
        %1054 = vmatpush1.msra.mxu0 0.0
        %1055 = vmatprep.subr.mxu0 0.0
        %1056 = vmatpush1.msra.mxu0 0.0
        %1057 = vmatprep.subr.mxu0 0.0
        %1058 = vmatpush1.msra.mxu0 0.0
        %1059 = vmatprep.mubr.f32.mxu0 0.0
        %1060 = vmatmul.mubr.f32.gmra.mrb[0].mxu0 %v708
        %v1061 = vpop.f32.mrb[0].mxu0
        %v1062 = vadd.f32 %v991, %v1061
        %v1063 = vpop.f32.mrb[0].mxu0
        %v1064 = vadd.f32 %v992, %v1063
        %1065 = vdwg.mxu0
        %1066 = vmatprep.subr.mxu0 %v194
        %1067 = vmatpush1.msra.mxu0 %v193
        %1068 = vmatprep.subr.mxu0 %v198
        %1069 = vmatpush1.msra.mxu0 %v197
        %1070 = vmatprep.subr.mxu0 %v202
        %1071 = vmatpush1.msra.mxu0 %v201
        %1072 = vmatprep.subr.mxu0 %v206
        %1073 = vmatpush1.msra.mxu0 %v205
        %1074 = vmatprep.subr.mxu0 %v210
        %1075 = vmatpush1.msra.mxu0 %v209
        %1076 = vmatprep.subr.mxu0 %v214
        %1077 = vmatpush1.msra.mxu0 %v213
        %1078 = vmatprep.subr.mxu0 %v218
        %1079 = vmatpush1.msra.mxu0 %v217
        %1080 = vmatprep.subr.mxu0 %v222
        %1081 = vmatpush1.msra.mxu0 %v221
        %1082 = vmatprep.subr.mxu0 %v226
        %1083 = vmatpush1.msra.mxu0 %v225
        %1084 = vmatprep.subr.mxu0 %v230
        %1085 = vmatpush1.msra.mxu0 %v229
        %1086 = vmatprep.subr.mxu0 %v234
        %1087 = vmatpush1.msra.mxu0 %v233
        %1088 = vmatprep.subr.mxu0 %v238
        %1089 = vmatpush1.msra.mxu0 %v237
        %1090 = vmatprep.subr.mxu0 %v242
        %1091 = vmatpush1.msra.mxu0 %v241
        %1092 = vmatprep.subr.mxu0 %v246
        %1093 = vmatpush1.msra.mxu0 %v245
        %1094 = vmatprep.subr.mxu0 %v250
        %1095 = vmatpush1.msra.mxu0 %v249
        %1096 = vmatprep.subr.mxu0 %v254
        %1097 = vmatpush1.msra.mxu0 %v253
        %1098 = vmatprep.subr.mxu0 0.0
        %1099 = vmatpush1.msra.mxu0 0.0
        %1100 = vmatprep.subr.mxu0 0.0
        %1101 = vmatpush1.msra.mxu0 0.0
        %1102 = vmatprep.subr.mxu0 0.0
        %1103 = vmatpush1.msra.mxu0 0.0
        %1104 = vmatprep.subr.mxu0 0.0
        %1105 = vmatpush1.msra.mxu0 0.0
        %1106 = vmatprep.subr.mxu0 0.0
        %1107 = vmatpush1.msra.mxu0 0.0
        %1108 = vmatprep.subr.mxu0 0.0
        %1109 = vmatpush1.msra.mxu0 0.0
        %1110 = vmatprep.subr.mxu0 0.0
        %1111 = vmatpush1.msra.mxu0 0.0
        %1112 = vmatprep.subr.mxu0 0.0
        %1113 = vmatpush1.msra.mxu0 0.0
        %1114 = vmatprep.subr.mxu0 0.0
        %1115 = vmatpush1.msra.mxu0 0.0
        %1116 = vmatprep.subr.mxu0 0.0
        %1117 = vmatpush1.msra.mxu0 0.0
        %1118 = vmatprep.subr.mxu0 0.0
        %1119 = vmatpush1.msra.mxu0 0.0
        %1120 = vmatprep.subr.mxu0 0.0
        %1121 = vmatpush1.msra.mxu0 0.0
        %1122 = vmatprep.subr.mxu0 0.0
        %1123 = vmatpush1.msra.mxu0 0.0
        %1124 = vmatprep.subr.mxu0 0.0
        %1125 = vmatpush1.msra.mxu0 0.0
        %1126 = vmatprep.subr.mxu0 0.0
        %1127 = vmatpush1.msra.mxu0 0.0
        %1128 = vmatprep.subr.mxu0 0.0
        %1129 = vmatpush1.msra.mxu0 0.0
        %1130 = vmatprep.mubr.f32.mxu0 0.0
        %1131 = vmatmul.mubr.f32.gmra.mrb[0].mxu0 %v708
        %v1132 = vpop.f32.mrb[0].mxu0
        %v1133 = vadd.f32 %v993, %v1132
        %v1134 = vpop.f32.mrb[0].mxu0
        %v1135 = vadd.f32 %v994, %v1134
        %1136 = vdwg.mxu0
        %v1137 = vtanh.pop %v1062
        %v1138 = vmul.f32 %v1064, 0.5
        %v1139 = vtanh.pop %v1138
        %v1140 = vadd.f32 %v1139, 1.0
        %v1141 = vmul.f32 %v1140, 0.5
        %v1142 = vmul.f32 %v1133, 0.5
        %v1143 = vtanh.pop %v1142
        %v1144 = vadd.f32 %v1143, 1.0
        %v1145 = vmul.f32 %v1144, 0.5
        %v1146 = vmul.f32 %v1135, 0.5
        %v1147 = vtanh.pop %v1146
        %v1148 = vadd.f32 %v1147, 1.0
        %v1149 = vmul.f32 %v1148, 0.5
        %v1150 = vmul.f32 %v1137, %v1141
        %v1151 = vmul.f32 %v706, %v1145
        %v1152 = vadd.f32 %v1150, %v1151
        %v1153 = vtanh.pop %v1152
        %v1154 = vmul.f32 %v1153, %v1149
        %s1155 = scalar_lea.vmem [#allocation4], 8
        %1156 = vst [vmem:[%s1155] sm:$0xff] %v1154
        %s1157 = sadd.s32 %s255, 2
        %s1158 = smul.u32 %s1157, 8
        %s1159 = sld [smem:[#allocation6 + %s1158]]
        %s1160 = sshra.s32 %s1159, 3
        %s1161 = sand.u32 %s1159, 7
        %s1162 = sshra.s32 %s1159, 3
        %s1163 = sand.u32 %s1159, 7
        %s1164 = smul.u32 %s1160, 4
        %s1165 = smul.u32 %s1164, 8
        %s1166 = sadd.s32 %s1165, %s1163
        %s1167 = scalar_lea.vmem %s1, %s1166
        %v1168 = vld [vmem:[%s1167] ss:$8 sm:$0xf]
        %s1169 = sadd.s32 %s1158, 1
        %s1170 = sld [smem:[#allocation6 + %s1169]]
        %s1171 = sshra.s32 %s1170, 3
        %s1172 = sand.u32 %s1170, 7
        %s1173 = sshra.s32 %s1170, 3
        %s1174 = sand.u32 %s1170, 7
        %s1175 = smul.u32 %s1171, 4
        %s1176 = smul.u32 %s1175, 8
        %s1177 = sadd.s32 %s1176, %s1174
        %s1178 = scalar_lea.vmem %s1, %s1177
        %v1179 = vld [vmem:[%s1178] ss:$8 sm:$0xf]
        %s1180 = sadd.s32 %s1158, 2
        %s1181 = sld [smem:[#allocation6 + %s1180]]
        %s1182 = sshra.s32 %s1181, 3
        %s1183 = sand.u32 %s1181, 7
        %s1184 = sshra.s32 %s1181, 3
        %s1185 = sand.u32 %s1181, 7
        %s1186 = smul.u32 %s1182, 4
        %s1187 = smul.u32 %s1186, 8
        %s1188 = sadd.s32 %s1187, %s1185
        %s1189 = scalar_lea.vmem %s1, %s1188
        %v1190 = vld [vmem:[%s1189] ss:$8 sm:$0xf]
        %s1191 = sadd.s32 %s1158, 3
        %s1192 = sld [smem:[#allocation6 + %s1191]]
        %s1193 = sshra.s32 %s1192, 3
        %s1194 = sand.u32 %s1192, 7
        %s1195 = sshra.s32 %s1192, 3
        %s1196 = sand.u32 %s1192, 7
        %s1197 = smul.u32 %s1193, 4
        %s1198 = smul.u32 %s1197, 8
        %s1199 = sadd.s32 %s1198, %s1196
        %s1200 = scalar_lea.vmem %s1, %s1199
        %v1201 = vld [vmem:[%s1200] ss:$8 sm:$0xf]
        %s1202 = sadd.s32 %s1158, 4
        %s1203 = sld [smem:[#allocation6 + %s1202]]
        %s1204 = sshra.s32 %s1203, 3
        %s1205 = sand.u32 %s1203, 7
        %s1206 = sshra.s32 %s1203, 3
        %s1207 = sand.u32 %s1203, 7
        %s1208 = smul.u32 %s1204, 4
        %s1209 = smul.u32 %s1208, 8
        %s1210 = sadd.s32 %s1209, %s1207
        %s1211 = scalar_lea.vmem %s1, %s1210
        %v1212 = vld [vmem:[%s1211] ss:$8 sm:$0xf]
        %s1213 = sadd.s32 %s1158, 5
        %s1214 = sld [smem:[#allocation6 + %s1213]]
        %s1215 = sshra.s32 %s1214, 3
        %s1216 = sand.u32 %s1214, 7
        %s1217 = sshra.s32 %s1214, 3
        %s1218 = sand.u32 %s1214, 7
        %s1219 = smul.u32 %s1215, 4
        %s1220 = smul.u32 %s1219, 8
        %s1221 = sadd.s32 %s1220, %s1218
        %s1222 = scalar_lea.vmem %s1, %s1221
        %v1223 = vld [vmem:[%s1222] ss:$8 sm:$0xf]
        %s1224 = sadd.s32 %s1158, 6
        %s1225 = sld [smem:[#allocation6 + %s1224]]
        %s1226 = sshra.s32 %s1225, 3
        %s1227 = sand.u32 %s1225, 7
        %s1228 = sshra.s32 %s1225, 3
        %s1229 = sand.u32 %s1225, 7
        %s1230 = smul.u32 %s1226, 4
        %s1231 = smul.u32 %s1230, 8
        %s1232 = sadd.s32 %s1231, %s1229
        %s1233 = scalar_lea.vmem %s1, %s1232
        %v1234 = vld [vmem:[%s1233] ss:$8 sm:$0xf]
        %s1235 = sadd.s32 %s1158, 7
        %s1236 = sld [smem:[#allocation6 + %s1235]]
        %s1237 = sshra.s32 %s1236, 3
        %s1238 = sand.u32 %s1236, 7
        %s1239 = sshra.s32 %s1236, 3
        %s1240 = sand.u32 %s1236, 7
        %s1241 = smul.u32 %s1237, 4
        %s1242 = smul.u32 %s1241, 8
        %s1243 = sadd.s32 %s1242, %s1240
        %s1244 = scalar_lea.vmem %s1, %s1243
        %v1245 = vld [vmem:[%s1244] ss:$8 sm:$0xf]
        %v1247 = vlaneseq
        %v1248 = vshrl.u32 %v1247, 7
        %v1249 = vsub.s32 0, %v1248
        %v1250 = vrot.slane %v1168, %v1249
        %v1251 = vlaneseq
        %v1252 = vshrl.u32 %v1251, 7
        %v1253 = vsub.s32 1, %v1252
        %v1254 = vrot.slane %v1168, %v1253
        %v1255 = vlaneseq
        %v1256 = vshrl.u32 %v1255, 7
        %v1257 = vsub.s32 2, %v1256
        %v1258 = vrot.slane %v1168, %v1257
        %v1259 = vlaneseq
        %v1260 = vshrl.u32 %v1259, 7
        %v1261 = vsub.s32 3, %v1260
        %v1262 = vrot.slane %v1168, %v1261
        %v1268 = vlaneseq
        %v1269 = vshrl.u32 %v1268, 7
        %v1270 = vsub.s32 0, %v1269
        %v1271 = vrot.slane %v1179, %v1270
        %v1272 = vlaneseq
        %v1273 = vshrl.u32 %v1272, 7
        %v1274 = vsub.s32 1, %v1273
        %v1275 = vrot.slane %v1179, %v1274
        %v1276 = vlaneseq
        %v1277 = vshrl.u32 %v1276, 7
        %v1278 = vsub.s32 2, %v1277
        %v1279 = vrot.slane %v1179, %v1278
        %v1280 = vlaneseq
        %v1281 = vshrl.u32 %v1280, 7
        %v1282 = vsub.s32 3, %v1281
        %v1283 = vrot.slane %v1179, %v1282
        %v1289 = vlaneseq
        %v1290 = vshrl.u32 %v1289, 7
        %v1291 = vsub.s32 0, %v1290
        %v1292 = vrot.slane %v1190, %v1291
        %v1293 = vlaneseq
        %v1294 = vshrl.u32 %v1293, 7
        %v1295 = vsub.s32 1, %v1294
        %v1296 = vrot.slane %v1190, %v1295
        %v1297 = vlaneseq
        %v1298 = vshrl.u32 %v1297, 7
        %v1299 = vsub.s32 2, %v1298
        %v1300 = vrot.slane %v1190, %v1299
        %v1301 = vlaneseq
        %v1302 = vshrl.u32 %v1301, 7
        %v1303 = vsub.s32 3, %v1302
        %v1304 = vrot.slane %v1190, %v1303
        %v1310 = vlaneseq
        %v1311 = vshrl.u32 %v1310, 7
        %v1312 = vsub.s32 0, %v1311
        %v1313 = vrot.slane %v1201, %v1312
        %v1314 = vlaneseq
        %v1315 = vshrl.u32 %v1314, 7
        %v1316 = vsub.s32 1, %v1315
        %v1317 = vrot.slane %v1201, %v1316
        %v1318 = vlaneseq
        %v1319 = vshrl.u32 %v1318, 7
        %v1320 = vsub.s32 2, %v1319
        %v1321 = vrot.slane %v1201, %v1320
        %v1322 = vlaneseq
        %v1323 = vshrl.u32 %v1322, 7
        %v1324 = vsub.s32 3, %v1323
        %v1325 = vrot.slane %v1201, %v1324
        %v1331 = vlaneseq
        %v1332 = vshrl.u32 %v1331, 7
        %v1333 = vsub.s32 0, %v1332
        %v1334 = vrot.slane %v1212, %v1333
        %v1335 = vlaneseq
        %v1336 = vshrl.u32 %v1335, 7
        %v1337 = vsub.s32 1, %v1336
        %v1338 = vrot.slane %v1212, %v1337
        %v1339 = vlaneseq
        %v1340 = vshrl.u32 %v1339, 7
        %v1341 = vsub.s32 2, %v1340
        %v1342 = vrot.slane %v1212, %v1341
        %v1343 = vlaneseq
        %v1344 = vshrl.u32 %v1343, 7
        %v1345 = vsub.s32 3, %v1344
        %v1346 = vrot.slane %v1212, %v1345
        %v1352 = vlaneseq
        %v1353 = vshrl.u32 %v1352, 7
        %v1354 = vsub.s32 0, %v1353
        %v1355 = vrot.slane %v1223, %v1354
        %v1356 = vlaneseq
        %v1357 = vshrl.u32 %v1356, 7
        %v1358 = vsub.s32 1, %v1357
        %v1359 = vrot.slane %v1223, %v1358
        %v1360 = vlaneseq
        %v1361 = vshrl.u32 %v1360, 7
        %v1362 = vsub.s32 2, %v1361
        %v1363 = vrot.slane %v1223, %v1362
        %v1364 = vlaneseq
        %v1365 = vshrl.u32 %v1364, 7
        %v1366 = vsub.s32 3, %v1365
        %v1367 = vrot.slane %v1223, %v1366
        %v1373 = vlaneseq
        %v1374 = vshrl.u32 %v1373, 7
        %v1375 = vsub.s32 0, %v1374
        %v1376 = vrot.slane %v1234, %v1375
        %v1377 = vlaneseq
        %v1378 = vshrl.u32 %v1377, 7
        %v1379 = vsub.s32 1, %v1378
        %v1380 = vrot.slane %v1234, %v1379
        %v1381 = vlaneseq
        %v1382 = vshrl.u32 %v1381, 7
        %v1383 = vsub.s32 2, %v1382
        %v1384 = vrot.slane %v1234, %v1383
        %v1385 = vlaneseq
        %v1386 = vshrl.u32 %v1385, 7
        %v1387 = vsub.s32 3, %v1386
        %v1388 = vrot.slane %v1234, %v1387
        %v1394 = vlaneseq
        %v1395 = vshrl.u32 %v1394, 7
        %v1396 = vsub.s32 0, %v1395
        %v1397 = vrot.slane %v1245, %v1396
        %v1398 = vlaneseq
        %v1399 = vshrl.u32 %v1398, 7
        %v1400 = vsub.s32 1, %v1399
        %v1401 = vrot.slane %v1245, %v1400
        %v1402 = vlaneseq
        %v1403 = vshrl.u32 %v1402, 7
        %v1404 = vsub.s32 2, %v1403
        %v1405 = vrot.slane %v1245, %v1404
        %v1406 = vlaneseq
        %v1407 = vshrl.u32 %v1406, 7
        %v1408 = vsub.s32 3, %v1407
        %v1409 = vrot.slane %v1245, %v1408
        %v1414 = vsel %vm514, %v1250, %v1271
        %v1415 = vsel %vm514, %v1254, %v1275
        %v1416 = vsel %vm514, %v1258, %v1279
        %v1417 = vsel %vm514, %v1262, %v1283
        %v1418 = vsel %vm519, %v1414, %v1292
        %v1419 = vsel %vm519, %v1415, %v1296
        %v1420 = vsel %vm519, %v1416, %v1300
        %v1421 = vsel %vm519, %v1417, %v1304
        %v1422 = vsel %vm524, %v1418, %v1313
        %v1423 = vsel %vm524, %v1419, %v1317
        %v1424 = vsel %vm524, %v1420, %v1321
        %v1425 = vsel %vm524, %v1421, %v1325
        %v1426 = vsel %vm529, %v1422, %v1334
        %v1427 = vsel %vm529, %v1423, %v1338
        %v1428 = vsel %vm529, %v1424, %v1342
        %v1429 = vsel %vm529, %v1425, %v1346
        %v1430 = vsel %vm534, %v1426, %v1355
        %v1431 = vsel %vm534, %v1427, %v1359
        %v1432 = vsel %vm534, %v1428, %v1363
        %v1433 = vsel %vm534, %v1429, %v1367
        %v1434 = vsel %vm539, %v1430, %v1376
        %v1435 = vsel %vm539, %v1431, %v1380
        %v1436 = vsel %vm539, %v1432, %v1384
        %v1437 = vsel %vm539, %v1433, %v1388
        %v1438 = vsel %vm544, %v1434, %v1397
        %v1439 = vsel %vm544, %v1435, %v1401
        %v1440 = vsel %vm544, %v1436, %v1405
        %v1441 = vsel %vm544, %v1437, %v1409
        %1442 = vmatprep.subr.mxu0 %v192
        %1443 = vmatpush1.msra.mxu0 %v191
        %1444 = vmatprep.subr.mxu0 %v196
        %1445 = vmatpush1.msra.mxu0 %v195
        %1446 = vmatprep.subr.mxu0 %v200
        %1447 = vmatpush1.msra.mxu0 %v199
        %1448 = vmatprep.subr.mxu0 %v204
        %1449 = vmatpush1.msra.mxu0 %v203
        %1450 = vmatprep.subr.mxu0 %v208
        %1451 = vmatpush1.msra.mxu0 %v207
        %1452 = vmatprep.subr.mxu0 %v212
        %1453 = vmatpush1.msra.mxu0 %v211
        %1454 = vmatprep.subr.mxu0 %v216
        %1455 = vmatpush1.msra.mxu0 %v215
        %1456 = vmatprep.subr.mxu0 %v220
        %1457 = vmatpush1.msra.mxu0 %v219
        %1458 = vmatprep.subr.mxu0 %v224
        %1459 = vmatpush1.msra.mxu0 %v223
        %1460 = vmatprep.subr.mxu0 %v228
        %1461 = vmatpush1.msra.mxu0 %v227
        %1462 = vmatprep.subr.mxu0 %v232
        %1463 = vmatpush1.msra.mxu0 %v231
        %1464 = vmatprep.subr.mxu0 %v236
        %1465 = vmatpush1.msra.mxu0 %v235
        %1466 = vmatprep.subr.mxu0 %v240
        %1467 = vmatpush1.msra.mxu0 %v239
        %1468 = vmatprep.subr.mxu0 %v244
        %1469 = vmatpush1.msra.mxu0 %v243
        %1470 = vmatprep.subr.mxu0 %v248
        %1471 = vmatpush1.msra.mxu0 %v247
        %1472 = vmatprep.subr.mxu0 %v252
        %1473 = vmatpush1.msra.mxu0 %v251
        %1474 = vmatprep.subr.mxu0 0.0
        %1475 = vmatpush1.msra.mxu0 0.0
        %1476 = vmatprep.subr.mxu0 0.0
        %1477 = vmatpush1.msra.mxu0 0.0
        %1478 = vmatprep.subr.mxu0 0.0
        %1479 = vmatpush1.msra.mxu0 0.0
        %1480 = vmatprep.subr.mxu0 0.0
        %1481 = vmatpush1.msra.mxu0 0.0
        %1482 = vmatprep.subr.mxu0 0.0
        %1483 = vmatpush1.msra.mxu0 0.0
        %1484 = vmatprep.subr.mxu0 0.0
        %1485 = vmatpush1.msra.mxu0 0.0
        %1486 = vmatprep.subr.mxu0 0.0
        %1487 = vmatpush1.msra.mxu0 0.0
        %1488 = vmatprep.subr.mxu0 0.0
        %1489 = vmatpush1.msra.mxu0 0.0
        %1490 = vmatprep.subr.mxu0 0.0
        %1491 = vmatpush1.msra.mxu0 0.0
        %1492 = vmatprep.subr.mxu0 0.0
        %1493 = vmatpush1.msra.mxu0 0.0
        %1494 = vmatprep.subr.mxu0 0.0
        %1495 = vmatpush1.msra.mxu0 0.0
        %1496 = vmatprep.subr.mxu0 0.0
        %1497 = vmatpush1.msra.mxu0 0.0
        %1498 = vmatprep.subr.mxu0 0.0
        %1499 = vmatpush1.msra.mxu0 0.0
        %1500 = vmatprep.subr.mxu0 0.0
        %1501 = vmatpush1.msra.mxu0 0.0
        %1502 = vmatprep.subr.mxu0 0.0
        %1503 = vmatpush1.msra.mxu0 0.0
        %1504 = vmatprep.subr.mxu0 0.0
        %1505 = vmatpush1.msra.mxu0 0.0
        %1506 = vmatprep.mubr.f32.mxu0 0.0
        %1507 = vmatmul.mubr.f32.gmra.mrb[0].mxu0 %v1154
        %v1508 = vpop.f32.mrb[0].mxu0
        %v1509 = vadd.f32 %v1438, %v1508
        %v1510 = vpop.f32.mrb[0].mxu0
        %v1511 = vadd.f32 %v1439, %v1510
        %1512 = vdwg.mxu0
        %1513 = vmatprep.subr.mxu0 %v194
        %1514 = vmatpush1.msra.mxu0 %v193
        %1515 = vmatprep.subr.mxu0 %v198
        %1516 = vmatpush1.msra.mxu0 %v197
        %1517 = vmatprep.subr.mxu0 %v202
        %1518 = vmatpush1.msra.mxu0 %v201
        %1519 = vmatprep.subr.mxu0 %v206
        %1520 = vmatpush1.msra.mxu0 %v205
        %1521 = vmatprep.subr.mxu0 %v210
        %1522 = vmatpush1.msra.mxu0 %v209
        %1523 = vmatprep.subr.mxu0 %v214
        %1524 = vmatpush1.msra.mxu0 %v213
        %1525 = vmatprep.subr.mxu0 %v218
        %1526 = vmatpush1.msra.mxu0 %v217
        %1527 = vmatprep.subr.mxu0 %v222
        %1528 = vmatpush1.msra.mxu0 %v221
        %1529 = vmatprep.subr.mxu0 %v226
        %1530 = vmatpush1.msra.mxu0 %v225
        %1531 = vmatprep.subr.mxu0 %v230
        %1532 = vmatpush1.msra.mxu0 %v229
        %1533 = vmatprep.subr.mxu0 %v234
        %1534 = vmatpush1.msra.mxu0 %v233
        %1535 = vmatprep.subr.mxu0 %v238
        %1536 = vmatpush1.msra.mxu0 %v237
        %1537 = vmatprep.subr.mxu0 %v242
        %1538 = vmatpush1.msra.mxu0 %v241
        %1539 = vmatprep.subr.mxu0 %v246
        %1540 = vmatpush1.msra.mxu0 %v245
        %1541 = vmatprep.subr.mxu0 %v250
        %1542 = vmatpush1.msra.mxu0 %v249
        %1543 = vmatprep.subr.mxu0 %v254
        %1544 = vmatpush1.msra.mxu0 %v253
        %1545 = vmatprep.subr.mxu0 0.0
        %1546 = vmatpush1.msra.mxu0 0.0
        %1547 = vmatprep.subr.mxu0 0.0
        %1548 = vmatpush1.msra.mxu0 0.0
        %1549 = vmatprep.subr.mxu0 0.0
        %1550 = vmatpush1.msra.mxu0 0.0
        %1551 = vmatprep.subr.mxu0 0.0
        %1552 = vmatpush1.msra.mxu0 0.0
        %1553 = vmatprep.subr.mxu0 0.0
        %1554 = vmatpush1.msra.mxu0 0.0
        %1555 = vmatprep.subr.mxu0 0.0
        %1556 = vmatpush1.msra.mxu0 0.0
        %1557 = vmatprep.subr.mxu0 0.0
        %1558 = vmatpush1.msra.mxu0 0.0
        %1559 = vmatprep.subr.mxu0 0.0
        %1560 = vmatpush1.msra.mxu0 0.0
        %1561 = vmatprep.subr.mxu0 0.0
        %1562 = vmatpush1.msra.mxu0 0.0
        %1563 = vmatprep.subr.mxu0 0.0
        %1564 = vmatpush1.msra.mxu0 0.0
        %1565 = vmatprep.subr.mxu0 0.0
        %1566 = vmatpush1.msra.mxu0 0.0
        %1567 = vmatprep.subr.mxu0 0.0
        %1568 = vmatpush1.msra.mxu0 0.0
        %1569 = vmatprep.subr.mxu0 0.0
        %1570 = vmatpush1.msra.mxu0 0.0
        %1571 = vmatprep.subr.mxu0 0.0
        %1572 = vmatpush1.msra.mxu0 0.0
        %1573 = vmatprep.subr.mxu0 0.0
        %1574 = vmatpush1.msra.mxu0 0.0
        %1575 = vmatprep.subr.mxu0 0.0
        %1576 = vmatpush1.msra.mxu0 0.0
        %1577 = vmatprep.mubr.f32.mxu0 0.0
        %1578 = vmatmul.mubr.f32.gmra.mrb[0].mxu0 %v1154
        %v1579 = vpop.f32.mrb[0].mxu0
        %v1580 = vadd.f32 %v1440, %v1579
        %v1581 = vpop.f32.mrb[0].mxu0
        %v1582 = vadd.f32 %v1441, %v1581
        %1583 = vdwg.mxu0
        %v1584 = vtanh.pop %v1509
        %v1585 = vmul.f32 %v1511, 0.5
        %v1586 = vtanh.pop %v1585
        %v1587 = vadd.f32 %v1586, 1.0
        %v1588 = vmul.f32 %v1587, 0.5
        %v1589 = vmul.f32 %v1580, 0.5
        %v1590 = vtanh.pop %v1589
        %v1591 = vadd.f32 %v1590, 1.0
        %v1592 = vmul.f32 %v1591, 0.5
        %v1593 = vmul.f32 %v1582, 0.5
        %v1594 = vtanh.pop %v1593
        %v1595 = vadd.f32 %v1594, 1.0
        %v1596 = vmul.f32 %v1595, 0.5
        %v1597 = vmul.f32 %v1584, %v1588
        %v1598 = vmul.f32 %v1152, %v1592
        %v1599 = vadd.f32 %v1597, %v1598
        %v1600 = vtanh.pop %v1599
        %v1601 = vmul.f32 %v1600, %v1596
        %s1602 = scalar_lea.vmem [#allocation4], 16
        %1603 = vst [vmem:[%s1602] sm:$0xff] %v1601
        %s1604 = sadd.s32 %s255, 3
        %s1605 = smul.u32 %s1604, 8
        %s1606 = sld [smem:[#allocation6 + %s1605]]
        %s1607 = sshra.s32 %s1606, 3
        %s1608 = sand.u32 %s1606, 7
        %s1609 = sshra.s32 %s1606, 3
        %s1610 = sand.u32 %s1606, 7
        %s1611 = smul.u32 %s1607, 4
        %s1612 = smul.u32 %s1611, 8
        %s1613 = sadd.s32 %s1612, %s1610
        %s1614 = scalar_lea.vmem %s1, %s1613
        %v1615 = vld [vmem:[%s1614] ss:$8 sm:$0xf]
        %s1616 = sadd.s32 %s1605, 1
        %s1617 = sld [smem:[#allocation6 + %s1616]]
        %s1618 = sshra.s32 %s1617, 3
        %s1619 = sand.u32 %s1617, 7
        %s1620 = sshra.s32 %s1617, 3
        %s1621 = sand.u32 %s1617, 7
        %s1622 = smul.u32 %s1618, 4
        %s1623 = smul.u32 %s1622, 8
        %s1624 = sadd.s32 %s1623, %s1621
        %s1625 = scalar_lea.vmem %s1, %s1624
        %v1626 = vld [vmem:[%s1625] ss:$8 sm:$0xf]
        %s1627 = sadd.s32 %s1605, 2
        %s1628 = sld [smem:[#allocation6 + %s1627]]
        %s1629 = sshra.s32 %s1628, 3
        %s1630 = sand.u32 %s1628, 7
        %s1631 = sshra.s32 %s1628, 3
        %s1632 = sand.u32 %s1628, 7
        %s1633 = smul.u32 %s1629, 4
        %s1634 = smul.u32 %s1633, 8
        %s1635 = sadd.s32 %s1634, %s1632
        %s1636 = scalar_lea.vmem %s1, %s1635
        %v1637 = vld [vmem:[%s1636] ss:$8 sm:$0xf]
        %s1638 = sadd.s32 %s1605, 3
        %s1639 = sld [smem:[#allocation6 + %s1638]]
        %s1640 = sshra.s32 %s1639, 3
        %s1641 = sand.u32 %s1639, 7
        %s1642 = sshra.s32 %s1639, 3
        %s1643 = sand.u32 %s1639, 7
        %s1644 = smul.u32 %s1640, 4
        %s1645 = smul.u32 %s1644, 8
        %s1646 = sadd.s32 %s1645, %s1643
        %s1647 = scalar_lea.vmem %s1, %s1646
        %v1648 = vld [vmem:[%s1647] ss:$8 sm:$0xf]
        %s1649 = sadd.s32 %s1605, 4
        %s1650 = sld [smem:[#allocation6 + %s1649]]
        %s1651 = sshra.s32 %s1650, 3
        %s1652 = sand.u32 %s1650, 7
        %s1653 = sshra.s32 %s1650, 3
        %s1654 = sand.u32 %s1650, 7
        %s1655 = smul.u32 %s1651, 4
        %s1656 = smul.u32 %s1655, 8
        %s1657 = sadd.s32 %s1656, %s1654
        %s1658 = scalar_lea.vmem %s1, %s1657
        %v1659 = vld [vmem:[%s1658] ss:$8 sm:$0xf]
        %s1660 = sadd.s32 %s1605, 5
        %s1661 = sld [smem:[#allocation6 + %s1660]]
        %s1662 = sshra.s32 %s1661, 3
        %s1663 = sand.u32 %s1661, 7
        %s1664 = sshra.s32 %s1661, 3
        %s1665 = sand.u32 %s1661, 7
        %s1666 = smul.u32 %s1662, 4
        %s1667 = smul.u32 %s1666, 8
        %s1668 = sadd.s32 %s1667, %s1665
        %s1669 = scalar_lea.vmem %s1, %s1668
        %v1670 = vld [vmem:[%s1669] ss:$8 sm:$0xf]
        %s1671 = sadd.s32 %s1605, 6
        %s1672 = sld [smem:[#allocation6 + %s1671]]
        %s1673 = sshra.s32 %s1672, 3
        %s1674 = sand.u32 %s1672, 7
        %s1675 = sshra.s32 %s1672, 3
        %s1676 = sand.u32 %s1672, 7
        %s1677 = smul.u32 %s1673, 4
        %s1678 = smul.u32 %s1677, 8
        %s1679 = sadd.s32 %s1678, %s1676
        %s1680 = scalar_lea.vmem %s1, %s1679
        %v1681 = vld [vmem:[%s1680] ss:$8 sm:$0xf]
        %s1682 = sadd.s32 %s1605, 7
        %s1683 = sld [smem:[#allocation6 + %s1682]]
        %s1684 = sshra.s32 %s1683, 3
        %s1685 = sand.u32 %s1683, 7
        %s1686 = sshra.s32 %s1683, 3
        %s1687 = sand.u32 %s1683, 7
        %s1688 = smul.u32 %s1684, 4
        %s1689 = smul.u32 %s1688, 8
        %s1690 = sadd.s32 %s1689, %s1687
        %s1691 = scalar_lea.vmem %s1, %s1690
        %v1692 = vld [vmem:[%s1691] ss:$8 sm:$0xf]
        %v1694 = vlaneseq
        %v1695 = vshrl.u32 %v1694, 7
        %v1696 = vsub.s32 0, %v1695
        %v1697 = vrot.slane %v1615, %v1696
        %v1698 = vlaneseq
        %v1699 = vshrl.u32 %v1698, 7
        %v1700 = vsub.s32 1, %v1699
        %v1701 = vrot.slane %v1615, %v1700
        %v1702 = vlaneseq
        %v1703 = vshrl.u32 %v1702, 7
        %v1704 = vsub.s32 2, %v1703
        %v1705 = vrot.slane %v1615, %v1704
        %v1706 = vlaneseq
        %v1707 = vshrl.u32 %v1706, 7
        %v1708 = vsub.s32 3, %v1707
        %v1709 = vrot.slane %v1615, %v1708
        %v1715 = vlaneseq
        %v1716 = vshrl.u32 %v1715, 7
        %v1717 = vsub.s32 0, %v1716
        %v1718 = vrot.slane %v1626, %v1717
        %v1719 = vlaneseq
        %v1720 = vshrl.u32 %v1719, 7
        %v1721 = vsub.s32 1, %v1720
        %v1722 = vrot.slane %v1626, %v1721
        %v1723 = vlaneseq
        %v1724 = vshrl.u32 %v1723, 7
        %v1725 = vsub.s32 2, %v1724
        %v1726 = vrot.slane %v1626, %v1725
        %v1727 = vlaneseq
        %v1728 = vshrl.u32 %v1727, 7
        %v1729 = vsub.s32 3, %v1728
        %v1730 = vrot.slane %v1626, %v1729
        %v1736 = vlaneseq
        %v1737 = vshrl.u32 %v1736, 7
        %v1738 = vsub.s32 0, %v1737
        %v1739 = vrot.slane %v1637, %v1738
        %v1740 = vlaneseq
        %v1741 = vshrl.u32 %v1740, 7
        %v1742 = vsub.s32 1, %v1741
        %v1743 = vrot.slane %v1637, %v1742
        %v1744 = vlaneseq
        %v1745 = vshrl.u32 %v1744, 7
        %v1746 = vsub.s32 2, %v1745
        %v1747 = vrot.slane %v1637, %v1746
        %v1748 = vlaneseq
        %v1749 = vshrl.u32 %v1748, 7
        %v1750 = vsub.s32 3, %v1749
        %v1751 = vrot.slane %v1637, %v1750
        %v1757 = vlaneseq
        %v1758 = vshrl.u32 %v1757, 7
        %v1759 = vsub.s32 0, %v1758
        %v1760 = vrot.slane %v1648, %v1759
        %v1761 = vlaneseq
        %v1762 = vshrl.u32 %v1761, 7
        %v1763 = vsub.s32 1, %v1762
        %v1764 = vrot.slane %v1648, %v1763
        %v1765 = vlaneseq
        %v1766 = vshrl.u32 %v1765, 7
        %v1767 = vsub.s32 2, %v1766
        %v1768 = vrot.slane %v1648, %v1767
        %v1769 = vlaneseq
        %v1770 = vshrl.u32 %v1769, 7
        %v1771 = vsub.s32 3, %v1770
        %v1772 = vrot.slane %v1648, %v1771
        %v1778 = vlaneseq
        %v1779 = vshrl.u32 %v1778, 7
        %v1780 = vsub.s32 0, %v1779
        %v1781 = vrot.slane %v1659, %v1780
        %v1782 = vlaneseq
        %v1783 = vshrl.u32 %v1782, 7
        %v1784 = vsub.s32 1, %v1783
        %v1785 = vrot.slane %v1659, %v1784
        %v1786 = vlaneseq
        %v1787 = vshrl.u32 %v1786, 7
        %v1788 = vsub.s32 2, %v1787
        %v1789 = vrot.slane %v1659, %v1788
        %v1790 = vlaneseq
        %v1791 = vshrl.u32 %v1790, 7
        %v1792 = vsub.s32 3, %v1791
        %v1793 = vrot.slane %v1659, %v1792
        %v1799 = vlaneseq
        %v1800 = vshrl.u32 %v1799, 7
        %v1801 = vsub.s32 0, %v1800
        %v1802 = vrot.slane %v1670, %v1801
        %v1803 = vlaneseq
        %v1804 = vshrl.u32 %v1803, 7
        %v1805 = vsub.s32 1, %v1804
        %v1806 = vrot.slane %v1670, %v1805
        %v1807 = vlaneseq
        %v1808 = vshrl.u32 %v1807, 7
        %v1809 = vsub.s32 2, %v1808
        %v1810 = vrot.slane %v1670, %v1809
        %v1811 = vlaneseq
        %v1812 = vshrl.u32 %v1811, 7
        %v1813 = vsub.s32 3, %v1812
        %v1814 = vrot.slane %v1670, %v1813
        %v1820 = vlaneseq
        %v1821 = vshrl.u32 %v1820, 7
        %v1822 = vsub.s32 0, %v1821
        %v1823 = vrot.slane %v1681, %v1822
        %v1824 = vlaneseq
        %v1825 = vshrl.u32 %v1824, 7
        %v1826 = vsub.s32 1, %v1825
        %v1827 = vrot.slane %v1681, %v1826
        %v1828 = vlaneseq
        %v1829 = vshrl.u32 %v1828, 7
        %v1830 = vsub.s32 2, %v1829
        %v1831 = vrot.slane %v1681, %v1830
        %v1832 = vlaneseq
        %v1833 = vshrl.u32 %v1832, 7
        %v1834 = vsub.s32 3, %v1833
        %v1835 = vrot.slane %v1681, %v1834
        %v1841 = vlaneseq
        %v1842 = vshrl.u32 %v1841, 7
        %v1843 = vsub.s32 0, %v1842
        %v1844 = vrot.slane %v1692, %v1843
        %v1845 = vlaneseq
        %v1846 = vshrl.u32 %v1845, 7
        %v1847 = vsub.s32 1, %v1846
        %v1848 = vrot.slane %v1692, %v1847
        %v1849 = vlaneseq
        %v1850 = vshrl.u32 %v1849, 7
        %v1851 = vsub.s32 2, %v1850
        %v1852 = vrot.slane %v1692, %v1851
        %v1853 = vlaneseq
        %v1854 = vshrl.u32 %v1853, 7
        %v1855 = vsub.s32 3, %v1854
        %v1856 = vrot.slane %v1692, %v1855
        %v1861 = vsel %vm514, %v1697, %v1718
        %v1862 = vsel %vm514, %v1701, %v1722
        %v1863 = vsel %vm514, %v1705, %v1726
        %v1864 = vsel %vm514, %v1709, %v1730
        %v1865 = vsel %vm519, %v1861, %v1739
        %v1866 = vsel %vm519, %v1862, %v1743
        %v1867 = vsel %vm519, %v1863, %v1747
        %v1868 = vsel %vm519, %v1864, %v1751
        %v1869 = vsel %vm524, %v1865, %v1760
        %v1870 = vsel %vm524, %v1866, %v1764
        %v1871 = vsel %vm524, %v1867, %v1768
        %v1872 = vsel %vm524, %v1868, %v1772
        %v1873 = vsel %vm529, %v1869, %v1781
        %v1874 = vsel %vm529, %v1870, %v1785
        %v1875 = vsel %vm529, %v1871, %v1789
        %v1876 = vsel %vm529, %v1872, %v1793
        %v1877 = vsel %vm534, %v1873, %v1802
        %v1878 = vsel %vm534, %v1874, %v1806
        %v1879 = vsel %vm534, %v1875, %v1810
        %v1880 = vsel %vm534, %v1876, %v1814
        %v1881 = vsel %vm539, %v1877, %v1823
        %v1882 = vsel %vm539, %v1878, %v1827
        %v1883 = vsel %vm539, %v1879, %v1831
        %v1884 = vsel %vm539, %v1880, %v1835
        %v1885 = vsel %vm544, %v1881, %v1844
        %v1886 = vsel %vm544, %v1882, %v1848
        %v1887 = vsel %vm544, %v1883, %v1852
        %v1888 = vsel %vm544, %v1884, %v1856
        %1889 = vmatprep.subr.mxu0 %v192
        %1890 = vmatpush1.msra.mxu0 %v191
        %1891 = vmatprep.subr.mxu0 %v196
        %1892 = vmatpush1.msra.mxu0 %v195
        %1893 = vmatprep.subr.mxu0 %v200
        %1894 = vmatpush1.msra.mxu0 %v199
        %1895 = vmatprep.subr.mxu0 %v204
        %1896 = vmatpush1.msra.mxu0 %v203
        %1897 = vmatprep.subr.mxu0 %v208
        %1898 = vmatpush1.msra.mxu0 %v207
        %1899 = vmatprep.subr.mxu0 %v212
        %1900 = vmatpush1.msra.mxu0 %v211
        %1901 = vmatprep.subr.mxu0 %v216
        %1902 = vmatpush1.msra.mxu0 %v215
        %1903 = vmatprep.subr.mxu0 %v220
        %1904 = vmatpush1.msra.mxu0 %v219
        %1905 = vmatprep.subr.mxu0 %v224
        %1906 = vmatpush1.msra.mxu0 %v223
        %1907 = vmatprep.subr.mxu0 %v228
        %1908 = vmatpush1.msra.mxu0 %v227
        %1909 = vmatprep.subr.mxu0 %v232
        %1910 = vmatpush1.msra.mxu0 %v231
        %1911 = vmatprep.subr.mxu0 %v236
        %1912 = vmatpush1.msra.mxu0 %v235
        %1913 = vmatprep.subr.mxu0 %v240
        %1914 = vmatpush1.msra.mxu0 %v239
        %1915 = vmatprep.subr.mxu0 %v244
        %1916 = vmatpush1.msra.mxu0 %v243
        %1917 = vmatprep.subr.mxu0 %v248
        %1918 = vmatpush1.msra.mxu0 %v247
        %1919 = vmatprep.subr.mxu0 %v252
        %1920 = vmatpush1.msra.mxu0 %v251
        %1921 = vmatprep.subr.mxu0 0.0
        %1922 = vmatpush1.msra.mxu0 0.0
        %1923 = vmatprep.subr.mxu0 0.0
        %1924 = vmatpush1.msra.mxu0 0.0
        %1925 = vmatprep.subr.mxu0 0.0
        %1926 = vmatpush1.msra.mxu0 0.0
        %1927 = vmatprep.subr.mxu0 0.0
        %1928 = vmatpush1.msra.mxu0 0.0
        %1929 = vmatprep.subr.mxu0 0.0
        %1930 = vmatpush1.msra.mxu0 0.0
        %1931 = vmatprep.subr.mxu0 0.0
        %1932 = vmatpush1.msra.mxu0 0.0
        %1933 = vmatprep.subr.mxu0 0.0
        %1934 = vmatpush1.msra.mxu0 0.0
        %1935 = vmatprep.subr.mxu0 0.0
        %1936 = vmatpush1.msra.mxu0 0.0
        %1937 = vmatprep.subr.mxu0 0.0
        %1938 = vmatpush1.msra.mxu0 0.0
        %1939 = vmatprep.subr.mxu0 0.0
        %1940 = vmatpush1.msra.mxu0 0.0
        %1941 = vmatprep.subr.mxu0 0.0
        %1942 = vmatpush1.msra.mxu0 0.0
        %1943 = vmatprep.subr.mxu0 0.0
        %1944 = vmatpush1.msra.mxu0 0.0
        %1945 = vmatprep.subr.mxu0 0.0
        %1946 = vmatpush1.msra.mxu0 0.0
        %1947 = vmatprep.subr.mxu0 0.0
        %1948 = vmatpush1.msra.mxu0 0.0
        %1949 = vmatprep.subr.mxu0 0.0
        %1950 = vmatpush1.msra.mxu0 0.0
        %1951 = vmatprep.subr.mxu0 0.0
        %1952 = vmatpush1.msra.mxu0 0.0
        %1953 = vmatprep.mubr.f32.mxu0 0.0
        %1954 = vmatmul.mubr.f32.gmra.mrb[0].mxu0 %v1601
        %v1955 = vpop.f32.mrb[0].mxu0
        %v1956 = vadd.f32 %v1885, %v1955
        %v1957 = vpop.f32.mrb[0].mxu0
        %v1958 = vadd.f32 %v1886, %v1957
        %1959 = vdwg.mxu0
        %1960 = vmatprep.subr.mxu0 %v194
        %1961 = vmatpush1.msra.mxu0 %v193
        %1962 = vmatprep.subr.mxu0 %v198
        %1963 = vmatpush1.msra.mxu0 %v197
        %1964 = vmatprep.subr.mxu0 %v202
        %1965 = vmatpush1.msra.mxu0 %v201
        %1966 = vmatprep.subr.mxu0 %v206
        %1967 = vmatpush1.msra.mxu0 %v205
        %1968 = vmatprep.subr.mxu0 %v210
        %1969 = vmatpush1.msra.mxu0 %v209
        %1970 = vmatprep.subr.mxu0 %v214
        %1971 = vmatpush1.msra.mxu0 %v213
        %1972 = vmatprep.subr.mxu0 %v218
        %1973 = vmatpush1.msra.mxu0 %v217
        %1974 = vmatprep.subr.mxu0 %v222
        %1975 = vmatpush1.msra.mxu0 %v221
        %1976 = vmatprep.subr.mxu0 %v226
        %1977 = vmatpush1.msra.mxu0 %v225
        %1978 = vmatprep.subr.mxu0 %v230
        %1979 = vmatpush1.msra.mxu0 %v229
        %1980 = vmatprep.subr.mxu0 %v234
        %1981 = vmatpush1.msra.mxu0 %v233
        %1982 = vmatprep.subr.mxu0 %v238
        %1983 = vmatpush1.msra.mxu0 %v237
        %1984 = vmatprep.subr.mxu0 %v242
        %1985 = vmatpush1.msra.mxu0 %v241
        %1986 = vmatprep.subr.mxu0 %v246
        %1987 = vmatpush1.msra.mxu0 %v245
        %1988 = vmatprep.subr.mxu0 %v250
        %1989 = vmatpush1.msra.mxu0 %v249
        %1990 = vmatprep.subr.mxu0 %v254
        %1991 = vmatpush1.msra.mxu0 %v253
        %1992 = vmatprep.subr.mxu0 0.0
        %1993 = vmatpush1.msra.mxu0 0.0
        %1994 = vmatprep.subr.mxu0 0.0
        %1995 = vmatpush1.msra.mxu0 0.0
        %1996 = vmatprep.subr.mxu0 0.0
        %1997 = vmatpush1.msra.mxu0 0.0
        %1998 = vmatprep.subr.mxu0 0.0
        %1999 = vmatpush1.msra.mxu0 0.0
        %2000 = vmatprep.subr.mxu0 0.0
        %2001 = vmatpush1.msra.mxu0 0.0
        %2002 = vmatprep.subr.mxu0 0.0
        %2003 = vmatpush1.msra.mxu0 0.0
        %2004 = vmatprep.subr.mxu0 0.0
        %2005 = vmatpush1.msra.mxu0 0.0
        %2006 = vmatprep.subr.mxu0 0.0
        %2007 = vmatpush1.msra.mxu0 0.0
        %2008 = vmatprep.subr.mxu0 0.0
        %2009 = vmatpush1.msra.mxu0 0.0
        %2010 = vmatprep.subr.mxu0 0.0
        %2011 = vmatpush1.msra.mxu0 0.0
        %2012 = vmatprep.subr.mxu0 0.0
        %2013 = vmatpush1.msra.mxu0 0.0
        %2014 = vmatprep.subr.mxu0 0.0
        %2015 = vmatpush1.msra.mxu0 0.0
        %2016 = vmatprep.subr.mxu0 0.0
        %2017 = vmatpush1.msra.mxu0 0.0
        %2018 = vmatprep.subr.mxu0 0.0
        %2019 = vmatpush1.msra.mxu0 0.0
        %2020 = vmatprep.subr.mxu0 0.0
        %2021 = vmatpush1.msra.mxu0 0.0
        %2022 = vmatprep.subr.mxu0 0.0
        %2023 = vmatpush1.msra.mxu0 0.0
        %2024 = vmatprep.mubr.f32.mxu0 0.0
        %2025 = vmatmul.mubr.f32.gmra.mrb[0].mxu0 %v1601
        %v2026 = vpop.f32.mrb[0].mxu0
        %v2027 = vadd.f32 %v1887, %v2026
        %v2028 = vpop.f32.mrb[0].mxu0
        %v2029 = vadd.f32 %v1888, %v2028
        %2030 = vdwg.mxu0
        %v2031 = vtanh.pop %v1956
        %v2032 = vmul.f32 %v1958, 0.5
        %v2033 = vtanh.pop %v2032
        %v2034 = vadd.f32 %v2033, 1.0
        %v2035 = vmul.f32 %v2034, 0.5
        %v2036 = vmul.f32 %v2027, 0.5
        %v2037 = vtanh.pop %v2036
        %v2038 = vadd.f32 %v2037, 1.0
        %v2039 = vmul.f32 %v2038, 0.5
        %v2040 = vmul.f32 %v2029, 0.5
        %v2041 = vtanh.pop %v2040
        %v2042 = vadd.f32 %v2041, 1.0
        %v2043 = vmul.f32 %v2042, 0.5
        %v2044 = vmul.f32 %v2031, %v2035
        %v2045 = vmul.f32 %v1599, %v2039
        %v2046 = vadd.f32 %v2044, %v2045
        %v2047 = vtanh.pop %v2046
        %v2048 = vmul.f32 %v2047, %v2043
        %s2049 = scalar_lea.vmem [#allocation4], 24
        %2050 = vst [vmem:[%s2049] sm:$0xff] %v2048
        %s2051 = sadd.s32 %s255, 4
        %s2052 = smul.u32 %s2051, 8
        %s2053 = sld [smem:[#allocation6 + %s2052]]
        %s2054 = sshra.s32 %s2053, 3
        %s2055 = sand.u32 %s2053, 7
        %s2056 = sshra.s32 %s2053, 3
        %s2057 = sand.u32 %s2053, 7
        %s2058 = smul.u32 %s2054, 4
        %s2059 = smul.u32 %s2058, 8
        %s2060 = sadd.s32 %s2059, %s2057
        %s2061 = scalar_lea.vmem %s1, %s2060
        %v2062 = vld [vmem:[%s2061] ss:$8 sm:$0xf]
        %s2063 = sadd.s32 %s2052, 1
        %s2064 = sld [smem:[#allocation6 + %s2063]]
        %s2065 = sshra.s32 %s2064, 3
        %s2066 = sand.u32 %s2064, 7
        %s2067 = sshra.s32 %s2064, 3
        %s2068 = sand.u32 %s2064, 7
        %s2069 = smul.u32 %s2065, 4
        %s2070 = smul.u32 %s2069, 8
        %s2071 = sadd.s32 %s2070, %s2068
        %s2072 = scalar_lea.vmem %s1, %s2071
        %v2073 = vld [vmem:[%s2072] ss:$8 sm:$0xf]
        %s2074 = sadd.s32 %s2052, 2
        %s2075 = sld [smem:[#allocation6 + %s2074]]
        %s2076 = sshra.s32 %s2075, 3
        %s2077 = sand.u32 %s2075, 7
        %s2078 = sshra.s32 %s2075, 3
        %s2079 = sand.u32 %s2075, 7
        %s2080 = smul.u32 %s2076, 4
        %s2081 = smul.u32 %s2080, 8
        %s2082 = sadd.s32 %s2081, %s2079
        %s2083 = scalar_lea.vmem %s1, %s2082
        %v2084 = vld [vmem:[%s2083] ss:$8 sm:$0xf]
        %s2085 = sadd.s32 %s2052, 3
        %s2086 = sld [smem:[#allocation6 + %s2085]]
        %s2087 = sshra.s32 %s2086, 3
        %s2088 = sand.u32 %s2086, 7
        %s2089 = sshra.s32 %s2086, 3
        %s2090 = sand.u32 %s2086, 7
        %s2091 = smul.u32 %s2087, 4
        %s2092 = smul.u32 %s2091, 8
        %s2093 = sadd.s32 %s2092, %s2090
        %s2094 = scalar_lea.vmem %s1, %s2093
        %v2095 = vld [vmem:[%s2094] ss:$8 sm:$0xf]
        %s2096 = sadd.s32 %s2052, 4
        %s2097 = sld [smem:[#allocation6 + %s2096]]
        %s2098 = sshra.s32 %s2097, 3
        %s2099 = sand.u32 %s2097, 7
        %s2100 = sshra.s32 %s2097, 3
        %s2101 = sand.u32 %s2097, 7
        %s2102 = smul.u32 %s2098, 4
        %s2103 = smul.u32 %s2102, 8
        %s2104 = sadd.s32 %s2103, %s2101
        %s2105 = scalar_lea.vmem %s1, %s2104
        %v2106 = vld [vmem:[%s2105] ss:$8 sm:$0xf]
        %s2107 = sadd.s32 %s2052, 5
        %s2108 = sld [smem:[#allocation6 + %s2107]]
        %s2109 = sshra.s32 %s2108, 3
        %s2110 = sand.u32 %s2108, 7
        %s2111 = sshra.s32 %s2108, 3
        %s2112 = sand.u32 %s2108, 7
        %s2113 = smul.u32 %s2109, 4
        %s2114 = smul.u32 %s2113, 8
        %s2115 = sadd.s32 %s2114, %s2112
        %s2116 = scalar_lea.vmem %s1, %s2115
        %v2117 = vld [vmem:[%s2116] ss:$8 sm:$0xf]
        %s2118 = sadd.s32 %s2052, 6
        %s2119 = sld [smem:[#allocation6 + %s2118]]
        %s2120 = sshra.s32 %s2119, 3
        %s2121 = sand.u32 %s2119, 7
        %s2122 = sshra.s32 %s2119, 3
        %s2123 = sand.u32 %s2119, 7
        %s2124 = smul.u32 %s2120, 4
        %s2125 = smul.u32 %s2124, 8
        %s2126 = sadd.s32 %s2125, %s2123
        %s2127 = scalar_lea.vmem %s1, %s2126
        %v2128 = vld [vmem:[%s2127] ss:$8 sm:$0xf]
        %s2129 = sadd.s32 %s2052, 7
        %s2130 = sld [smem:[#allocation6 + %s2129]]
        %s2131 = sshra.s32 %s2130, 3
        %s2132 = sand.u32 %s2130, 7
        %s2133 = sshra.s32 %s2130, 3
        %s2134 = sand.u32 %s2130, 7
        %s2135 = smul.u32 %s2131, 4
        %s2136 = smul.u32 %s2135, 8
        %s2137 = sadd.s32 %s2136, %s2134
        %s2138 = scalar_lea.vmem %s1, %s2137
        %v2139 = vld [vmem:[%s2138] ss:$8 sm:$0xf]
        %v2141 = vlaneseq
        %v2142 = vshrl.u32 %v2141, 7
        %v2143 = vsub.s32 0, %v2142
        %v2144 = vrot.slane %v2062, %v2143
        %v2145 = vlaneseq
        %v2146 = vshrl.u32 %v2145, 7
        %v2147 = vsub.s32 1, %v2146
        %v2148 = vrot.slane %v2062, %v2147
        %v2149 = vlaneseq
        %v2150 = vshrl.u32 %v2149, 7
        %v2151 = vsub.s32 2, %v2150
        %v2152 = vrot.slane %v2062, %v2151
        %v2153 = vlaneseq
        %v2154 = vshrl.u32 %v2153, 7
        %v2155 = vsub.s32 3, %v2154
        %v2156 = vrot.slane %v2062, %v2155
        %v2162 = vlaneseq
        %v2163 = vshrl.u32 %v2162, 7
        %v2164 = vsub.s32 0, %v2163
        %v2165 = vrot.slane %v2073, %v2164
        %v2166 = vlaneseq
        %v2167 = vshrl.u32 %v2166, 7
        %v2168 = vsub.s32 1, %v2167
        %v2169 = vrot.slane %v2073, %v2168
        %v2170 = vlaneseq
        %v2171 = vshrl.u32 %v2170, 7
        %v2172 = vsub.s32 2, %v2171
        %v2173 = vrot.slane %v2073, %v2172
        %v2174 = vlaneseq
        %v2175 = vshrl.u32 %v2174, 7
        %v2176 = vsub.s32 3, %v2175
        %v2177 = vrot.slane %v2073, %v2176
        %v2183 = vlaneseq
        %v2184 = vshrl.u32 %v2183, 7
        %v2185 = vsub.s32 0, %v2184
        %v2186 = vrot.slane %v2084, %v2185
        %v2187 = vlaneseq
        %v2188 = vshrl.u32 %v2187, 7
        %v2189 = vsub.s32 1, %v2188
        %v2190 = vrot.slane %v2084, %v2189
        %v2191 = vlaneseq
        %v2192 = vshrl.u32 %v2191, 7
        %v2193 = vsub.s32 2, %v2192
        %v2194 = vrot.slane %v2084, %v2193
        %v2195 = vlaneseq
        %v2196 = vshrl.u32 %v2195, 7
        %v2197 = vsub.s32 3, %v2196
        %v2198 = vrot.slane %v2084, %v2197
        %v2204 = vlaneseq
        %v2205 = vshrl.u32 %v2204, 7
        %v2206 = vsub.s32 0, %v2205
        %v2207 = vrot.slane %v2095, %v2206
        %v2208 = vlaneseq
        %v2209 = vshrl.u32 %v2208, 7
        %v2210 = vsub.s32 1, %v2209
        %v2211 = vrot.slane %v2095, %v2210
        %v2212 = vlaneseq
        %v2213 = vshrl.u32 %v2212, 7
        %v2214 = vsub.s32 2, %v2213
        %v2215 = vrot.slane %v2095, %v2214
        %v2216 = vlaneseq
        %v2217 = vshrl.u32 %v2216, 7
        %v2218 = vsub.s32 3, %v2217
        %v2219 = vrot.slane %v2095, %v2218
        %v2225 = vlaneseq
        %v2226 = vshrl.u32 %v2225, 7
        %v2227 = vsub.s32 0, %v2226
        %v2228 = vrot.slane %v2106, %v2227
        %v2229 = vlaneseq
        %v2230 = vshrl.u32 %v2229, 7
        %v2231 = vsub.s32 1, %v2230
        %v2232 = vrot.slane %v2106, %v2231
        %v2233 = vlaneseq
        %v2234 = vshrl.u32 %v2233, 7
        %v2235 = vsub.s32 2, %v2234
        %v2236 = vrot.slane %v2106, %v2235
        %v2237 = vlaneseq
        %v2238 = vshrl.u32 %v2237, 7
        %v2239 = vsub.s32 3, %v2238
        %v2240 = vrot.slane %v2106, %v2239
        %v2246 = vlaneseq
        %v2247 = vshrl.u32 %v2246, 7
        %v2248 = vsub.s32 0, %v2247
        %v2249 = vrot.slane %v2117, %v2248
        %v2250 = vlaneseq
        %v2251 = vshrl.u32 %v2250, 7
        %v2252 = vsub.s32 1, %v2251
        %v2253 = vrot.slane %v2117, %v2252
        %v2254 = vlaneseq
        %v2255 = vshrl.u32 %v2254, 7
        %v2256 = vsub.s32 2, %v2255
        %v2257 = vrot.slane %v2117, %v2256
        %v2258 = vlaneseq
        %v2259 = vshrl.u32 %v2258, 7
        %v2260 = vsub.s32 3, %v2259
        %v2261 = vrot.slane %v2117, %v2260
        %v2267 = vlaneseq
        %v2268 = vshrl.u32 %v2267, 7
        %v2269 = vsub.s32 0, %v2268
        %v2270 = vrot.slane %v2128, %v2269
        %v2271 = vlaneseq
        %v2272 = vshrl.u32 %v2271, 7
        %v2273 = vsub.s32 1, %v2272
        %v2274 = vrot.slane %v2128, %v2273
        %v2275 = vlaneseq
        %v2276 = vshrl.u32 %v2275, 7
        %v2277 = vsub.s32 2, %v2276
        %v2278 = vrot.slane %v2128, %v2277
        %v2279 = vlaneseq
        %v2280 = vshrl.u32 %v2279, 7
        %v2281 = vsub.s32 3, %v2280
        %v2282 = vrot.slane %v2128, %v2281
        %v2288 = vlaneseq
        %v2289 = vshrl.u32 %v2288, 7
        %v2290 = vsub.s32 0, %v2289
        %v2291 = vrot.slane %v2139, %v2290
        %v2292 = vlaneseq
        %v2293 = vshrl.u32 %v2292, 7
        %v2294 = vsub.s32 1, %v2293
        %v2295 = vrot.slane %v2139, %v2294
        %v2296 = vlaneseq
        %v2297 = vshrl.u32 %v2296, 7
        %v2298 = vsub.s32 2, %v2297
        %v2299 = vrot.slane %v2139, %v2298
        %v2300 = vlaneseq
        %v2301 = vshrl.u32 %v2300, 7
        %v2302 = vsub.s32 3, %v2301
        %v2303 = vrot.slane %v2139, %v2302
        %v2308 = vsel %vm514, %v2144, %v2165
        %v2309 = vsel %vm514, %v2148, %v2169
        %v2310 = vsel %vm514, %v2152, %v2173
        %v2311 = vsel %vm514, %v2156, %v2177
        %v2312 = vsel %vm519, %v2308, %v2186
        %v2313 = vsel %vm519, %v2309, %v2190
        %v2314 = vsel %vm519, %v2310, %v2194
        %v2315 = vsel %vm519, %v2311, %v2198
        %v2316 = vsel %vm524, %v2312, %v2207
        %v2317 = vsel %vm524, %v2313, %v2211
        %v2318 = vsel %vm524, %v2314, %v2215
        %v2319 = vsel %vm524, %v2315, %v2219
        %v2320 = vsel %vm529, %v2316, %v2228
        %v2321 = vsel %vm529, %v2317, %v2232
        %v2322 = vsel %vm529, %v2318, %v2236
        %v2323 = vsel %vm529, %v2319, %v2240
        %v2324 = vsel %vm534, %v2320, %v2249
        %v2325 = vsel %vm534, %v2321, %v2253
        %v2326 = vsel %vm534, %v2322, %v2257
        %v2327 = vsel %vm534, %v2323, %v2261
        %v2328 = vsel %vm539, %v2324, %v2270
        %v2329 = vsel %vm539, %v2325, %v2274
        %v2330 = vsel %vm539, %v2326, %v2278
        %v2331 = vsel %vm539, %v2327, %v2282
        %v2332 = vsel %vm544, %v2328, %v2291
        %v2333 = vsel %vm544, %v2329, %v2295
        %v2334 = vsel %vm544, %v2330, %v2299
        %v2335 = vsel %vm544, %v2331, %v2303
        %2336 = vmatprep.subr.mxu0 %v192
        %2337 = vmatpush1.msra.mxu0 %v191
        %2338 = vmatprep.subr.mxu0 %v196
        %2339 = vmatpush1.msra.mxu0 %v195
        %2340 = vmatprep.subr.mxu0 %v200
        %2341 = vmatpush1.msra.mxu0 %v199
        %2342 = vmatprep.subr.mxu0 %v204
        %2343 = vmatpush1.msra.mxu0 %v203
        %2344 = vmatprep.subr.mxu0 %v208
        %2345 = vmatpush1.msra.mxu0 %v207
        %2346 = vmatprep.subr.mxu0 %v212
        %2347 = vmatpush1.msra.mxu0 %v211
        %2348 = vmatprep.subr.mxu0 %v216
        %2349 = vmatpush1.msra.mxu0 %v215
        %2350 = vmatprep.subr.mxu0 %v220
        %2351 = vmatpush1.msra.mxu0 %v219
        %2352 = vmatprep.subr.mxu0 %v224
        %2353 = vmatpush1.msra.mxu0 %v223
        %2354 = vmatprep.subr.mxu0 %v228
        %2355 = vmatpush1.msra.mxu0 %v227
        %2356 = vmatprep.subr.mxu0 %v232
        %2357 = vmatpush1.msra.mxu0 %v231
        %2358 = vmatprep.subr.mxu0 %v236
        %2359 = vmatpush1.msra.mxu0 %v235
        %2360 = vmatprep.subr.mxu0 %v240
        %2361 = vmatpush1.msra.mxu0 %v239
        %2362 = vmatprep.subr.mxu0 %v244
        %2363 = vmatpush1.msra.mxu0 %v243
        %2364 = vmatprep.subr.mxu0 %v248
        %2365 = vmatpush1.msra.mxu0 %v247
        %2366 = vmatprep.subr.mxu0 %v252
        %2367 = vmatpush1.msra.mxu0 %v251
        %2368 = vmatprep.subr.mxu0 0.0
        %2369 = vmatpush1.msra.mxu0 0.0
        %2370 = vmatprep.subr.mxu0 0.0
        %2371 = vmatpush1.msra.mxu0 0.0
        %2372 = vmatprep.subr.mxu0 0.0
        %2373 = vmatpush1.msra.mxu0 0.0
        %2374 = vmatprep.subr.mxu0 0.0
        %2375 = vmatpush1.msra.mxu0 0.0
        %2376 = vmatprep.subr.mxu0 0.0
        %2377 = vmatpush1.msra.mxu0 0.0
        %2378 = vmatprep.subr.mxu0 0.0
        %2379 = vmatpush1.msra.mxu0 0.0
        %2380 = vmatprep.subr.mxu0 0.0
        %2381 = vmatpush1.msra.mxu0 0.0
        %2382 = vmatprep.subr.mxu0 0.0
        %2383 = vmatpush1.msra.mxu0 0.0
        %2384 = vmatprep.subr.mxu0 0.0
        %2385 = vmatpush1.msra.mxu0 0.0
        %2386 = vmatprep.subr.mxu0 0.0
        %2387 = vmatpush1.msra.mxu0 0.0
        %2388 = vmatprep.subr.mxu0 0.0
        %2389 = vmatpush1.msra.mxu0 0.0
        %2390 = vmatprep.subr.mxu0 0.0
        %2391 = vmatpush1.msra.mxu0 0.0
        %2392 = vmatprep.subr.mxu0 0.0
        %2393 = vmatpush1.msra.mxu0 0.0
        %2394 = vmatprep.subr.mxu0 0.0
        %2395 = vmatpush1.msra.mxu0 0.0
        %2396 = vmatprep.subr.mxu0 0.0
        %2397 = vmatpush1.msra.mxu0 0.0
        %2398 = vmatprep.subr.mxu0 0.0
        %2399 = vmatpush1.msra.mxu0 0.0
        %2400 = vmatprep.mubr.f32.mxu0 0.0
        %2401 = vmatmul.mubr.f32.gmra.mrb[0].mxu0 %v2048
        %v2402 = vpop.f32.mrb[0].mxu0
        %v2403 = vadd.f32 %v2332, %v2402
        %v2404 = vpop.f32.mrb[0].mxu0
        %v2405 = vadd.f32 %v2333, %v2404
        %2406 = vdwg.mxu0
        %2407 = vmatprep.subr.mxu0 %v194
        %2408 = vmatpush1.msra.mxu0 %v193
        %2409 = vmatprep.subr.mxu0 %v198
        %2410 = vmatpush1.msra.mxu0 %v197
        %2411 = vmatprep.subr.mxu0 %v202
        %2412 = vmatpush1.msra.mxu0 %v201
        %2413 = vmatprep.subr.mxu0 %v206
        %2414 = vmatpush1.msra.mxu0 %v205
        %2415 = vmatprep.subr.mxu0 %v210
        %2416 = vmatpush1.msra.mxu0 %v209
        %2417 = vmatprep.subr.mxu0 %v214
        %2418 = vmatpush1.msra.mxu0 %v213
        %2419 = vmatprep.subr.mxu0 %v218
        %2420 = vmatpush1.msra.mxu0 %v217
        %2421 = vmatprep.subr.mxu0 %v222
        %2422 = vmatpush1.msra.mxu0 %v221
        %2423 = vmatprep.subr.mxu0 %v226
        %2424 = vmatpush1.msra.mxu0 %v225
        %2425 = vmatprep.subr.mxu0 %v230
        %2426 = vmatpush1.msra.mxu0 %v229
        %2427 = vmatprep.subr.mxu0 %v234
        %2428 = vmatpush1.msra.mxu0 %v233
        %2429 = vmatprep.subr.mxu0 %v238
        %2430 = vmatpush1.msra.mxu0 %v237
        %2431 = vmatprep.subr.mxu0 %v242
        %2432 = vmatpush1.msra.mxu0 %v241
        %2433 = vmatprep.subr.mxu0 %v246
        %2434 = vmatpush1.msra.mxu0 %v245
        %2435 = vmatprep.subr.mxu0 %v250
        %2436 = vmatpush1.msra.mxu0 %v249
        %2437 = vmatprep.subr.mxu0 %v254
        %2438 = vmatpush1.msra.mxu0 %v253
        %2439 = vmatprep.subr.mxu0 0.0
        %2440 = vmatpush1.msra.mxu0 0.0
        %2441 = vmatprep.subr.mxu0 0.0
        %2442 = vmatpush1.msra.mxu0 0.0
        %2443 = vmatprep.subr.mxu0 0.0
        %2444 = vmatpush1.msra.mxu0 0.0
        %2445 = vmatprep.subr.mxu0 0.0
        %2446 = vmatpush1.msra.mxu0 0.0
        %2447 = vmatprep.subr.mxu0 0.0
        %2448 = vmatpush1.msra.mxu0 0.0
        %2449 = vmatprep.subr.mxu0 0.0
        %2450 = vmatpush1.msra.mxu0 0.0
        %2451 = vmatprep.subr.mxu0 0.0
        %2452 = vmatpush1.msra.mxu0 0.0
        %2453 = vmatprep.subr.mxu0 0.0
        %2454 = vmatpush1.msra.mxu0 0.0
        %2455 = vmatprep.subr.mxu0 0.0
        %2456 = vmatpush1.msra.mxu0 0.0
        %2457 = vmatprep.subr.mxu0 0.0
        %2458 = vmatpush1.msra.mxu0 0.0
        %2459 = vmatprep.subr.mxu0 0.0
        %2460 = vmatpush1.msra.mxu0 0.0
        %2461 = vmatprep.subr.mxu0 0.0
        %2462 = vmatpush1.msra.mxu0 0.0
        %2463 = vmatprep.subr.mxu0 0.0
        %2464 = vmatpush1.msra.mxu0 0.0
        %2465 = vmatprep.subr.mxu0 0.0
        %2466 = vmatpush1.msra.mxu0 0.0
        %2467 = vmatprep.subr.mxu0 0.0
        %2468 = vmatpush1.msra.mxu0 0.0
        %2469 = vmatprep.subr.mxu0 0.0
        %2470 = vmatpush1.msra.mxu0 0.0
        %2471 = vmatprep.mubr.f32.mxu0 0.0
        %2472 = vmatmul.mubr.f32.gmra.mrb[0].mxu0 %v2048
        %v2473 = vpop.f32.mrb[0].mxu0
        %v2474 = vadd.f32 %v2334, %v2473
        %v2475 = vpop.f32.mrb[0].mxu0
        %v2476 = vadd.f32 %v2335, %v2475
        %2477 = vdwg.mxu0
        %v2478 = vtanh.pop %v2403
        %v2479 = vmul.f32 %v2405, 0.5
        %v2480 = vtanh.pop %v2479
        %v2481 = vadd.f32 %v2480, 1.0
        %v2482 = vmul.f32 %v2481, 0.5
        %v2483 = vmul.f32 %v2474, 0.5
        %v2484 = vtanh.pop %v2483
        %v2485 = vadd.f32 %v2484, 1.0
        %v2486 = vmul.f32 %v2485, 0.5
        %v2487 = vmul.f32 %v2476, 0.5
        %v2488 = vtanh.pop %v2487
        %v2489 = vadd.f32 %v2488, 1.0
        %v2490 = vmul.f32 %v2489, 0.5
        %v2491 = vmul.f32 %v2478, %v2482
        %v2492 = vmul.f32 %v2046, %v2486
        %v2493 = vadd.f32 %v2491, %v2492
        %v2494 = vtanh.pop %v2493
        %v2495 = vmul.f32 %v2494, %v2490
        %s2496 = scalar_lea.vmem [#allocation4], 32
        %2497 = vst [vmem:[%s2496] sm:$0xff] %v2495
        %s2498 = sadd.s32 %s255, 5
        %s2499 = smul.u32 %s2498, 8
        %s2500 = sld [smem:[#allocation6 + %s2499]]
        %s2501 = sshra.s32 %s2500, 3
        %s2502 = sand.u32 %s2500, 7
        %s2503 = sshra.s32 %s2500, 3
        %s2504 = sand.u32 %s2500, 7
        %s2505 = smul.u32 %s2501, 4
        %s2506 = smul.u32 %s2505, 8
        %s2507 = sadd.s32 %s2506, %s2504
        %s2508 = scalar_lea.vmem %s1, %s2507
        %v2509 = vld [vmem:[%s2508] ss:$8 sm:$0xf]
        %s2510 = sadd.s32 %s2499, 1
        %s2511 = sld [smem:[#allocation6 + %s2510]]
        %s2512 = sshra.s32 %s2511, 3
        %s2513 = sand.u32 %s2511, 7
        %s2514 = sshra.s32 %s2511, 3
        %s2515 = sand.u32 %s2511, 7
        %s2516 = smul.u32 %s2512, 4
        %s2517 = smul.u32 %s2516, 8
        %s2518 = sadd.s32 %s2517, %s2515
        %s2519 = scalar_lea.vmem %s1, %s2518
        %v2520 = vld [vmem:[%s2519] ss:$8 sm:$0xf]
        %s2521 = sadd.s32 %s2499, 2
        %s2522 = sld [smem:[#allocation6 + %s2521]]
        %s2523 = sshra.s32 %s2522, 3
        %s2524 = sand.u32 %s2522, 7
        %s2525 = sshra.s32 %s2522, 3
        %s2526 = sand.u32 %s2522, 7
        %s2527 = smul.u32 %s2523, 4
        %s2528 = smul.u32 %s2527, 8
        %s2529 = sadd.s32 %s2528, %s2526
        %s2530 = scalar_lea.vmem %s1, %s2529
        %v2531 = vld [vmem:[%s2530] ss:$8 sm:$0xf]
        %s2532 = sadd.s32 %s2499, 3
        %s2533 = sld [smem:[#allocation6 + %s2532]]
        %s2534 = sshra.s32 %s2533, 3
        %s2535 = sand.u32 %s2533, 7
        %s2536 = sshra.s32 %s2533, 3
        %s2537 = sand.u32 %s2533, 7
        %s2538 = smul.u32 %s2534, 4
        %s2539 = smul.u32 %s2538, 8
        %s2540 = sadd.s32 %s2539, %s2537
        %s2541 = scalar_lea.vmem %s1, %s2540
        %v2542 = vld [vmem:[%s2541] ss:$8 sm:$0xf]
        %s2543 = sadd.s32 %s2499, 4
        %s2544 = sld [smem:[#allocation6 + %s2543]]
        %s2545 = sshra.s32 %s2544, 3
        %s2546 = sand.u32 %s2544, 7
        %s2547 = sshra.s32 %s2544, 3
        %s2548 = sand.u32 %s2544, 7
        %s2549 = smul.u32 %s2545, 4
        %s2550 = smul.u32 %s2549, 8
        %s2551 = sadd.s32 %s2550, %s2548
        %s2552 = scalar_lea.vmem %s1, %s2551
        %v2553 = vld [vmem:[%s2552] ss:$8 sm:$0xf]
        %s2554 = sadd.s32 %s2499, 5
        %s2555 = sld [smem:[#allocation6 + %s2554]]
        %s2556 = sshra.s32 %s2555, 3
        %s2557 = sand.u32 %s2555, 7
        %s2558 = sshra.s32 %s2555, 3
        %s2559 = sand.u32 %s2555, 7
        %s2560 = smul.u32 %s2556, 4
        %s2561 = smul.u32 %s2560, 8
        %s2562 = sadd.s32 %s2561, %s2559
        %s2563 = scalar_lea.vmem %s1, %s2562
        %v2564 = vld [vmem:[%s2563] ss:$8 sm:$0xf]
        %s2565 = sadd.s32 %s2499, 6
        %s2566 = sld [smem:[#allocation6 + %s2565]]
        %s2567 = sshra.s32 %s2566, 3
        %s2568 = sand.u32 %s2566, 7
        %s2569 = sshra.s32 %s2566, 3
        %s2570 = sand.u32 %s2566, 7
        %s2571 = smul.u32 %s2567, 4
        %s2572 = smul.u32 %s2571, 8
        %s2573 = sadd.s32 %s2572, %s2570
        %s2574 = scalar_lea.vmem %s1, %s2573
        %v2575 = vld [vmem:[%s2574] ss:$8 sm:$0xf]
        %s2576 = sadd.s32 %s2499, 7
        %s2577 = sld [smem:[#allocation6 + %s2576]]
        %s2578 = sshra.s32 %s2577, 3
        %s2579 = sand.u32 %s2577, 7
        %s2580 = sshra.s32 %s2577, 3
        %s2581 = sand.u32 %s2577, 7
        %s2582 = smul.u32 %s2578, 4
        %s2583 = smul.u32 %s2582, 8
        %s2584 = sadd.s32 %s2583, %s2581
        %s2585 = scalar_lea.vmem %s1, %s2584
        %v2586 = vld [vmem:[%s2585] ss:$8 sm:$0xf]
        %v2588 = vlaneseq
        %v2589 = vshrl.u32 %v2588, 7
        %v2590 = vsub.s32 0, %v2589
        %v2591 = vrot.slane %v2509, %v2590
        %v2592 = vlaneseq
        %v2593 = vshrl.u32 %v2592, 7
        %v2594 = vsub.s32 1, %v2593
        %v2595 = vrot.slane %v2509, %v2594
        %v2596 = vlaneseq
        %v2597 = vshrl.u32 %v2596, 7
        %v2598 = vsub.s32 2, %v2597
        %v2599 = vrot.slane %v2509, %v2598
        %v2600 = vlaneseq
        %v2601 = vshrl.u32 %v2600, 7
        %v2602 = vsub.s32 3, %v2601
        %v2603 = vrot.slane %v2509, %v2602
        %v2609 = vlaneseq
        %v2610 = vshrl.u32 %v2609, 7
        %v2611 = vsub.s32 0, %v2610
        %v2612 = vrot.slane %v2520, %v2611
        %v2613 = vlaneseq
        %v2614 = vshrl.u32 %v2613, 7
        %v2615 = vsub.s32 1, %v2614
        %v2616 = vrot.slane %v2520, %v2615
        %v2617 = vlaneseq
        %v2618 = vshrl.u32 %v2617, 7
        %v2619 = vsub.s32 2, %v2618
        %v2620 = vrot.slane %v2520, %v2619
        %v2621 = vlaneseq
        %v2622 = vshrl.u32 %v2621, 7
        %v2623 = vsub.s32 3, %v2622
        %v2624 = vrot.slane %v2520, %v2623
        %v2630 = vlaneseq
        %v2631 = vshrl.u32 %v2630, 7
        %v2632 = vsub.s32 0, %v2631
        %v2633 = vrot.slane %v2531, %v2632
        %v2634 = vlaneseq
        %v2635 = vshrl.u32 %v2634, 7
        %v2636 = vsub.s32 1, %v2635
        %v2637 = vrot.slane %v2531, %v2636
        %v2638 = vlaneseq
        %v2639 = vshrl.u32 %v2638, 7
        %v2640 = vsub.s32 2, %v2639
        %v2641 = vrot.slane %v2531, %v2640
        %v2642 = vlaneseq
        %v2643 = vshrl.u32 %v2642, 7
        %v2644 = vsub.s32 3, %v2643
        %v2645 = vrot.slane %v2531, %v2644
        %v2651 = vlaneseq
        %v2652 = vshrl.u32 %v2651, 7
        %v2653 = vsub.s32 0, %v2652
        %v2654 = vrot.slane %v2542, %v2653
        %v2655 = vlaneseq
        %v2656 = vshrl.u32 %v2655, 7
        %v2657 = vsub.s32 1, %v2656
        %v2658 = vrot.slane %v2542, %v2657
        %v2659 = vlaneseq
        %v2660 = vshrl.u32 %v2659, 7
        %v2661 = vsub.s32 2, %v2660
        %v2662 = vrot.slane %v2542, %v2661
        %v2663 = vlaneseq
        %v2664 = vshrl.u32 %v2663, 7
        %v2665 = vsub.s32 3, %v2664
        %v2666 = vrot.slane %v2542, %v2665
        %v2672 = vlaneseq
        %v2673 = vshrl.u32 %v2672, 7
        %v2674 = vsub.s32 0, %v2673
        %v2675 = vrot.slane %v2553, %v2674
        %v2676 = vlaneseq
        %v2677 = vshrl.u32 %v2676, 7
        %v2678 = vsub.s32 1, %v2677
        %v2679 = vrot.slane %v2553, %v2678
        %v2680 = vlaneseq
        %v2681 = vshrl.u32 %v2680, 7
        %v2682 = vsub.s32 2, %v2681
        %v2683 = vrot.slane %v2553, %v2682
        %v2684 = vlaneseq
        %v2685 = vshrl.u32 %v2684, 7
        %v2686 = vsub.s32 3, %v2685
        %v2687 = vrot.slane %v2553, %v2686
        %v2693 = vlaneseq
        %v2694 = vshrl.u32 %v2693, 7
        %v2695 = vsub.s32 0, %v2694
        %v2696 = vrot.slane %v2564, %v2695
        %v2697 = vlaneseq
        %v2698 = vshrl.u32 %v2697, 7
        %v2699 = vsub.s32 1, %v2698
        %v2700 = vrot.slane %v2564, %v2699
        %v2701 = vlaneseq
        %v2702 = vshrl.u32 %v2701, 7
        %v2703 = vsub.s32 2, %v2702
        %v2704 = vrot.slane %v2564, %v2703
        %v2705 = vlaneseq
        %v2706 = vshrl.u32 %v2705, 7
        %v2707 = vsub.s32 3, %v2706
        %v2708 = vrot.slane %v2564, %v2707
        %v2714 = vlaneseq
        %v2715 = vshrl.u32 %v2714, 7
        %v2716 = vsub.s32 0, %v2715
        %v2717 = vrot.slane %v2575, %v2716
        %v2718 = vlaneseq
        %v2719 = vshrl.u32 %v2718, 7
        %v2720 = vsub.s32 1, %v2719
        %v2721 = vrot.slane %v2575, %v2720
        %v2722 = vlaneseq
        %v2723 = vshrl.u32 %v2722, 7
        %v2724 = vsub.s32 2, %v2723
        %v2725 = vrot.slane %v2575, %v2724
        %v2726 = vlaneseq
        %v2727 = vshrl.u32 %v2726, 7
        %v2728 = vsub.s32 3, %v2727
        %v2729 = vrot.slane %v2575, %v2728
        %v2735 = vlaneseq
        %v2736 = vshrl.u32 %v2735, 7
        %v2737 = vsub.s32 0, %v2736
        %v2738 = vrot.slane %v2586, %v2737
        %v2739 = vlaneseq
        %v2740 = vshrl.u32 %v2739, 7
        %v2741 = vsub.s32 1, %v2740
        %v2742 = vrot.slane %v2586, %v2741
        %v2743 = vlaneseq
        %v2744 = vshrl.u32 %v2743, 7
        %v2745 = vsub.s32 2, %v2744
        %v2746 = vrot.slane %v2586, %v2745
        %v2747 = vlaneseq
        %v2748 = vshrl.u32 %v2747, 7
        %v2749 = vsub.s32 3, %v2748
        %v2750 = vrot.slane %v2586, %v2749
        %v2755 = vsel %vm514, %v2591, %v2612
        %v2756 = vsel %vm514, %v2595, %v2616
        %v2757 = vsel %vm514, %v2599, %v2620
        %v2758 = vsel %vm514, %v2603, %v2624
        %v2759 = vsel %vm519, %v2755, %v2633
        %v2760 = vsel %vm519, %v2756, %v2637
        %v2761 = vsel %vm519, %v2757, %v2641
        %v2762 = vsel %vm519, %v2758, %v2645
        %v2763 = vsel %vm524, %v2759, %v2654
        %v2764 = vsel %vm524, %v2760, %v2658
        %v2765 = vsel %vm524, %v2761, %v2662
        %v2766 = vsel %vm524, %v2762, %v2666
        %v2767 = vsel %vm529, %v2763, %v2675
        %v2768 = vsel %vm529, %v2764, %v2679
        %v2769 = vsel %vm529, %v2765, %v2683
        %v2770 = vsel %vm529, %v2766, %v2687
        %v2771 = vsel %vm534, %v2767, %v2696
        %v2772 = vsel %vm534, %v2768, %v2700
        %v2773 = vsel %vm534, %v2769, %v2704
        %v2774 = vsel %vm534, %v2770, %v2708
        %v2775 = vsel %vm539, %v2771, %v2717
        %v2776 = vsel %vm539, %v2772, %v2721
        %v2777 = vsel %vm539, %v2773, %v2725
        %v2778 = vsel %vm539, %v2774, %v2729
        %v2779 = vsel %vm544, %v2775, %v2738
        %v2780 = vsel %vm544, %v2776, %v2742
        %v2781 = vsel %vm544, %v2777, %v2746
        %v2782 = vsel %vm544, %v2778, %v2750
        %2783 = vmatprep.subr.mxu0 %v192
        %2784 = vmatpush1.msra.mxu0 %v191
        %2785 = vmatprep.subr.mxu0 %v196
        %2786 = vmatpush1.msra.mxu0 %v195
        %2787 = vmatprep.subr.mxu0 %v200
        %2788 = vmatpush1.msra.mxu0 %v199
        %2789 = vmatprep.subr.mxu0 %v204
        %2790 = vmatpush1.msra.mxu0 %v203
        %2791 = vmatprep.subr.mxu0 %v208
        %2792 = vmatpush1.msra.mxu0 %v207
        %2793 = vmatprep.subr.mxu0 %v212
        %2794 = vmatpush1.msra.mxu0 %v211
        %2795 = vmatprep.subr.mxu0 %v216
        %2796 = vmatpush1.msra.mxu0 %v215
        %2797 = vmatprep.subr.mxu0 %v220
        %2798 = vmatpush1.msra.mxu0 %v219
        %2799 = vmatprep.subr.mxu0 %v224
        %2800 = vmatpush1.msra.mxu0 %v223
        %2801 = vmatprep.subr.mxu0 %v228
        %2802 = vmatpush1.msra.mxu0 %v227
        %2803 = vmatprep.subr.mxu0 %v232
        %2804 = vmatpush1.msra.mxu0 %v231
        %2805 = vmatprep.subr.mxu0 %v236
        %2806 = vmatpush1.msra.mxu0 %v235
        %2807 = vmatprep.subr.mxu0 %v240
        %2808 = vmatpush1.msra.mxu0 %v239
        %2809 = vmatprep.subr.mxu0 %v244
        %2810 = vmatpush1.msra.mxu0 %v243
        %2811 = vmatprep.subr.mxu0 %v248
        %2812 = vmatpush1.msra.mxu0 %v247
        %2813 = vmatprep.subr.mxu0 %v252
        %2814 = vmatpush1.msra.mxu0 %v251
        %2815 = vmatprep.subr.mxu0 0.0
        %2816 = vmatpush1.msra.mxu0 0.0
        %2817 = vmatprep.subr.mxu0 0.0
        %2818 = vmatpush1.msra.mxu0 0.0
        %2819 = vmatprep.subr.mxu0 0.0
        %2820 = vmatpush1.msra.mxu0 0.0
        %2821 = vmatprep.subr.mxu0 0.0
        %2822 = vmatpush1.msra.mxu0 0.0
        %2823 = vmatprep.subr.mxu0 0.0
        %2824 = vmatpush1.msra.mxu0 0.0
        %2825 = vmatprep.subr.mxu0 0.0
        %2826 = vmatpush1.msra.mxu0 0.0
        %2827 = vmatprep.subr.mxu0 0.0
        %2828 = vmatpush1.msra.mxu0 0.0
        %2829 = vmatprep.subr.mxu0 0.0
        %2830 = vmatpush1.msra.mxu0 0.0
        %2831 = vmatprep.subr.mxu0 0.0
        %2832 = vmatpush1.msra.mxu0 0.0
        %2833 = vmatprep.subr.mxu0 0.0
        %2834 = vmatpush1.msra.mxu0 0.0
        %2835 = vmatprep.subr.mxu0 0.0
        %2836 = vmatpush1.msra.mxu0 0.0
        %2837 = vmatprep.subr.mxu0 0.0
        %2838 = vmatpush1.msra.mxu0 0.0
        %2839 = vmatprep.subr.mxu0 0.0
        %2840 = vmatpush1.msra.mxu0 0.0
        %2841 = vmatprep.subr.mxu0 0.0
        %2842 = vmatpush1.msra.mxu0 0.0
        %2843 = vmatprep.subr.mxu0 0.0
        %2844 = vmatpush1.msra.mxu0 0.0
        %2845 = vmatprep.subr.mxu0 0.0
        %2846 = vmatpush1.msra.mxu0 0.0
        %2847 = vmatprep.mubr.f32.mxu0 0.0
        %2848 = vmatmul.mubr.f32.gmra.mrb[0].mxu0 %v2495
        %v2849 = vpop.f32.mrb[0].mxu0
        %v2850 = vadd.f32 %v2779, %v2849
        %v2851 = vpop.f32.mrb[0].mxu0
        %v2852 = vadd.f32 %v2780, %v2851
        %2853 = vdwg.mxu0
        %2854 = vmatprep.subr.mxu0 %v194
        %2855 = vmatpush1.msra.mxu0 %v193
        %2856 = vmatprep.subr.mxu0 %v198
        %2857 = vmatpush1.msra.mxu0 %v197
        %2858 = vmatprep.subr.mxu0 %v202
        %2859 = vmatpush1.msra.mxu0 %v201
        %2860 = vmatprep.subr.mxu0 %v206
        %2861 = vmatpush1.msra.mxu0 %v205
        %2862 = vmatprep.subr.mxu0 %v210
        %2863 = vmatpush1.msra.mxu0 %v209
        %2864 = vmatprep.subr.mxu0 %v214
        %2865 = vmatpush1.msra.mxu0 %v213
        %2866 = vmatprep.subr.mxu0 %v218
        %2867 = vmatpush1.msra.mxu0 %v217
        %2868 = vmatprep.subr.mxu0 %v222
        %2869 = vmatpush1.msra.mxu0 %v221
        %2870 = vmatprep.subr.mxu0 %v226
        %2871 = vmatpush1.msra.mxu0 %v225
        %2872 = vmatprep.subr.mxu0 %v230
        %2873 = vmatpush1.msra.mxu0 %v229
        %2874 = vmatprep.subr.mxu0 %v234
        %2875 = vmatpush1.msra.mxu0 %v233
        %2876 = vmatprep.subr.mxu0 %v238
        %2877 = vmatpush1.msra.mxu0 %v237
        %2878 = vmatprep.subr.mxu0 %v242
        %2879 = vmatpush1.msra.mxu0 %v241
        %2880 = vmatprep.subr.mxu0 %v246
        %2881 = vmatpush1.msra.mxu0 %v245
        %2882 = vmatprep.subr.mxu0 %v250
        %2883 = vmatpush1.msra.mxu0 %v249
        %2884 = vmatprep.subr.mxu0 %v254
        %2885 = vmatpush1.msra.mxu0 %v253
        %2886 = vmatprep.subr.mxu0 0.0
        %2887 = vmatpush1.msra.mxu0 0.0
        %2888 = vmatprep.subr.mxu0 0.0
        %2889 = vmatpush1.msra.mxu0 0.0
        %2890 = vmatprep.subr.mxu0 0.0
        %2891 = vmatpush1.msra.mxu0 0.0
        %2892 = vmatprep.subr.mxu0 0.0
        %2893 = vmatpush1.msra.mxu0 0.0
        %2894 = vmatprep.subr.mxu0 0.0
        %2895 = vmatpush1.msra.mxu0 0.0
        %2896 = vmatprep.subr.mxu0 0.0
        %2897 = vmatpush1.msra.mxu0 0.0
        %2898 = vmatprep.subr.mxu0 0.0
        %2899 = vmatpush1.msra.mxu0 0.0
        %2900 = vmatprep.subr.mxu0 0.0
        %2901 = vmatpush1.msra.mxu0 0.0
        %2902 = vmatprep.subr.mxu0 0.0
        %2903 = vmatpush1.msra.mxu0 0.0
        %2904 = vmatprep.subr.mxu0 0.0
        %2905 = vmatpush1.msra.mxu0 0.0
        %2906 = vmatprep.subr.mxu0 0.0
        %2907 = vmatpush1.msra.mxu0 0.0
        %2908 = vmatprep.subr.mxu0 0.0
        %2909 = vmatpush1.msra.mxu0 0.0
        %2910 = vmatprep.subr.mxu0 0.0
        %2911 = vmatpush1.msra.mxu0 0.0
        %2912 = vmatprep.subr.mxu0 0.0
        %2913 = vmatpush1.msra.mxu0 0.0
        %2914 = vmatprep.subr.mxu0 0.0
        %2915 = vmatpush1.msra.mxu0 0.0
        %2916 = vmatprep.subr.mxu0 0.0
        %2917 = vmatpush1.msra.mxu0 0.0
        %2918 = vmatprep.mubr.f32.mxu0 0.0
        %2919 = vmatmul.mubr.f32.gmra.mrb[0].mxu0 %v2495
        %v2920 = vpop.f32.mrb[0].mxu0
        %v2921 = vadd.f32 %v2781, %v2920
        %v2922 = vpop.f32.mrb[0].mxu0
        %v2923 = vadd.f32 %v2782, %v2922
        %2924 = vdwg.mxu0
        %v2925 = vtanh.pop %v2850
        %v2926 = vmul.f32 %v2852, 0.5
        %v2927 = vtanh.pop %v2926
        %v2928 = vadd.f32 %v2927, 1.0
        %v2929 = vmul.f32 %v2928, 0.5
        %v2930 = vmul.f32 %v2921, 0.5
        %v2931 = vtanh.pop %v2930
        %v2932 = vadd.f32 %v2931, 1.0
        %v2933 = vmul.f32 %v2932, 0.5
        %v2934 = vmul.f32 %v2923, 0.5
        %v2935 = vtanh.pop %v2934
        %v2936 = vadd.f32 %v2935, 1.0
        %v2937 = vmul.f32 %v2936, 0.5
        %v2938 = vmul.f32 %v2925, %v2929
        %v2939 = vmul.f32 %v2493, %v2933
        %v2940 = vadd.f32 %v2938, %v2939
        %v2941 = vtanh.pop %v2940
        %v2942 = vmul.f32 %v2941, %v2937
        %s2943 = scalar_lea.vmem [#allocation4], 40
        %2944 = vst [vmem:[%s2943] sm:$0xff] %v2942
        %s2945 = sadd.s32 %s255, 6
        %s2946 = smul.u32 %s2945, 8
        %s2947 = sld [smem:[#allocation6 + %s2946]]
        %s2948 = sshra.s32 %s2947, 3
        %s2949 = sand.u32 %s2947, 7
        %s2950 = sshra.s32 %s2947, 3
        %s2951 = sand.u32 %s2947, 7
        %s2952 = smul.u32 %s2948, 4
        %s2953 = smul.u32 %s2952, 8
        %s2954 = sadd.s32 %s2953, %s2951
        %s2955 = scalar_lea.vmem %s1, %s2954
        %v2956 = vld [vmem:[%s2955] ss:$8 sm:$0xf]
        %s2957 = sadd.s32 %s2946, 1
        %s2958 = sld [smem:[#allocation6 + %s2957]]
        %s2959 = sshra.s32 %s2958, 3
        %s2960 = sand.u32 %s2958, 7
        %s2961 = sshra.s32 %s2958, 3
        %s2962 = sand.u32 %s2958, 7
        %s2963 = smul.u32 %s2959, 4
        %s2964 = smul.u32 %s2963, 8
        %s2965 = sadd.s32 %s2964, %s2962
        %s2966 = scalar_lea.vmem %s1, %s2965
        %v2967 = vld [vmem:[%s2966] ss:$8 sm:$0xf]
        %s2968 = sadd.s32 %s2946, 2
        %s2969 = sld [smem:[#allocation6 + %s2968]]
        %s2970 = sshra.s32 %s2969, 3
        %s2971 = sand.u32 %s2969, 7
        %s2972 = sshra.s32 %s2969, 3
        %s2973 = sand.u32 %s2969, 7
        %s2974 = smul.u32 %s2970, 4
        %s2975 = smul.u32 %s2974, 8
        %s2976 = sadd.s32 %s2975, %s2973
        %s2977 = scalar_lea.vmem %s1, %s2976
        %v2978 = vld [vmem:[%s2977] ss:$8 sm:$0xf]
        %s2979 = sadd.s32 %s2946, 3
        %s2980 = sld [smem:[#allocation6 + %s2979]]
        %s2981 = sshra.s32 %s2980, 3
        %s2982 = sand.u32 %s2980, 7
        %s2983 = sshra.s32 %s2980, 3
        %s2984 = sand.u32 %s2980, 7
        %s2985 = smul.u32 %s2981, 4
        %s2986 = smul.u32 %s2985, 8
        %s2987 = sadd.s32 %s2986, %s2984
        %s2988 = scalar_lea.vmem %s1, %s2987
        %v2989 = vld [vmem:[%s2988] ss:$8 sm:$0xf]
        %s2990 = sadd.s32 %s2946, 4
        %s2991 = sld [smem:[#allocation6 + %s2990]]
        %s2992 = sshra.s32 %s2991, 3
        %s2993 = sand.u32 %s2991, 7
        %s2994 = sshra.s32 %s2991, 3
        %s2995 = sand.u32 %s2991, 7
        %s2996 = smul.u32 %s2992, 4
        %s2997 = smul.u32 %s2996, 8
        %s2998 = sadd.s32 %s2997, %s2995
        %s2999 = scalar_lea.vmem %s1, %s2998
        %v3000 = vld [vmem:[%s2999] ss:$8 sm:$0xf]
        %s3001 = sadd.s32 %s2946, 5
        %s3002 = sld [smem:[#allocation6 + %s3001]]
        %s3003 = sshra.s32 %s3002, 3
        %s3004 = sand.u32 %s3002, 7
        %s3005 = sshra.s32 %s3002, 3
        %s3006 = sand.u32 %s3002, 7
        %s3007 = smul.u32 %s3003, 4
        %s3008 = smul.u32 %s3007, 8
        %s3009 = sadd.s32 %s3008, %s3006
        %s3010 = scalar_lea.vmem %s1, %s3009
        %v3011 = vld [vmem:[%s3010] ss:$8 sm:$0xf]
        %s3012 = sadd.s32 %s2946, 6
        %s3013 = sld [smem:[#allocation6 + %s3012]]
        %s3014 = sshra.s32 %s3013, 3
        %s3015 = sand.u32 %s3013, 7
        %s3016 = sshra.s32 %s3013, 3
        %s3017 = sand.u32 %s3013, 7
        %s3018 = smul.u32 %s3014, 4
        %s3019 = smul.u32 %s3018, 8
        %s3020 = sadd.s32 %s3019, %s3017
        %s3021 = scalar_lea.vmem %s1, %s3020
        %v3022 = vld [vmem:[%s3021] ss:$8 sm:$0xf]
        %s3023 = sadd.s32 %s2946, 7
        %s3024 = sld [smem:[#allocation6 + %s3023]]
        %s3025 = sshra.s32 %s3024, 3
        %s3026 = sand.u32 %s3024, 7
        %s3027 = sshra.s32 %s3024, 3
        %s3028 = sand.u32 %s3024, 7
        %s3029 = smul.u32 %s3025, 4
        %s3030 = smul.u32 %s3029, 8
        %s3031 = sadd.s32 %s3030, %s3028
        %s3032 = scalar_lea.vmem %s1, %s3031
        %v3033 = vld [vmem:[%s3032] ss:$8 sm:$0xf]
        %v3035 = vlaneseq
        %v3036 = vshrl.u32 %v3035, 7
        %v3037 = vsub.s32 0, %v3036
        %v3038 = vrot.slane %v2956, %v3037
        %v3039 = vlaneseq
        %v3040 = vshrl.u32 %v3039, 7
        %v3041 = vsub.s32 1, %v3040
        %v3042 = vrot.slane %v2956, %v3041
        %v3043 = vlaneseq
        %v3044 = vshrl.u32 %v3043, 7
        %v3045 = vsub.s32 2, %v3044
        %v3046 = vrot.slane %v2956, %v3045
        %v3047 = vlaneseq
        %v3048 = vshrl.u32 %v3047, 7
        %v3049 = vsub.s32 3, %v3048
        %v3050 = vrot.slane %v2956, %v3049
        %v3056 = vlaneseq
        %v3057 = vshrl.u32 %v3056, 7
        %v3058 = vsub.s32 0, %v3057
        %v3059 = vrot.slane %v2967, %v3058
        %v3060 = vlaneseq
        %v3061 = vshrl.u32 %v3060, 7
        %v3062 = vsub.s32 1, %v3061
        %v3063 = vrot.slane %v2967, %v3062
        %v3064 = vlaneseq
        %v3065 = vshrl.u32 %v3064, 7
        %v3066 = vsub.s32 2, %v3065
        %v3067 = vrot.slane %v2967, %v3066
        %v3068 = vlaneseq
        %v3069 = vshrl.u32 %v3068, 7
        %v3070 = vsub.s32 3, %v3069
        %v3071 = vrot.slane %v2967, %v3070
        %v3077 = vlaneseq
        %v3078 = vshrl.u32 %v3077, 7
        %v3079 = vsub.s32 0, %v3078
        %v3080 = vrot.slane %v2978, %v3079
        %v3081 = vlaneseq
        %v3082 = vshrl.u32 %v3081, 7
        %v3083 = vsub.s32 1, %v3082
        %v3084 = vrot.slane %v2978, %v3083
        %v3085 = vlaneseq
        %v3086 = vshrl.u32 %v3085, 7
        %v3087 = vsub.s32 2, %v3086
        %v3088 = vrot.slane %v2978, %v3087
        %v3089 = vlaneseq
        %v3090 = vshrl.u32 %v3089, 7
        %v3091 = vsub.s32 3, %v3090
        %v3092 = vrot.slane %v2978, %v3091
        %v3098 = vlaneseq
        %v3099 = vshrl.u32 %v3098, 7
        %v3100 = vsub.s32 0, %v3099
        %v3101 = vrot.slane %v2989, %v3100
        %v3102 = vlaneseq
        %v3103 = vshrl.u32 %v3102, 7
        %v3104 = vsub.s32 1, %v3103
        %v3105 = vrot.slane %v2989, %v3104
        %v3106 = vlaneseq
        %v3107 = vshrl.u32 %v3106, 7
        %v3108 = vsub.s32 2, %v3107
        %v3109 = vrot.slane %v2989, %v3108
        %v3110 = vlaneseq
        %v3111 = vshrl.u32 %v3110, 7
        %v3112 = vsub.s32 3, %v3111
        %v3113 = vrot.slane %v2989, %v3112
        %v3119 = vlaneseq
        %v3120 = vshrl.u32 %v3119, 7
        %v3121 = vsub.s32 0, %v3120
        %v3122 = vrot.slane %v3000, %v3121
        %v3123 = vlaneseq
        %v3124 = vshrl.u32 %v3123, 7
        %v3125 = vsub.s32 1, %v3124
        %v3126 = vrot.slane %v3000, %v3125
        %v3127 = vlaneseq
        %v3128 = vshrl.u32 %v3127, 7
        %v3129 = vsub.s32 2, %v3128
        %v3130 = vrot.slane %v3000, %v3129
        %v3131 = vlaneseq
        %v3132 = vshrl.u32 %v3131, 7
        %v3133 = vsub.s32 3, %v3132
        %v3134 = vrot.slane %v3000, %v3133
        %v3140 = vlaneseq
        %v3141 = vshrl.u32 %v3140, 7
        %v3142 = vsub.s32 0, %v3141
        %v3143 = vrot.slane %v3011, %v3142
        %v3144 = vlaneseq
        %v3145 = vshrl.u32 %v3144, 7
        %v3146 = vsub.s32 1, %v3145
        %v3147 = vrot.slane %v3011, %v3146
        %v3148 = vlaneseq
        %v3149 = vshrl.u32 %v3148, 7
        %v3150 = vsub.s32 2, %v3149
        %v3151 = vrot.slane %v3011, %v3150
        %v3152 = vlaneseq
        %v3153 = vshrl.u32 %v3152, 7
        %v3154 = vsub.s32 3, %v3153
        %v3155 = vrot.slane %v3011, %v3154
        %v3161 = vlaneseq
        %v3162 = vshrl.u32 %v3161, 7
        %v3163 = vsub.s32 0, %v3162
        %v3164 = vrot.slane %v3022, %v3163
        %v3165 = vlaneseq
        %v3166 = vshrl.u32 %v3165, 7
        %v3167 = vsub.s32 1, %v3166
        %v3168 = vrot.slane %v3022, %v3167
        %v3169 = vlaneseq
        %v3170 = vshrl.u32 %v3169, 7
        %v3171 = vsub.s32 2, %v3170
        %v3172 = vrot.slane %v3022, %v3171
        %v3173 = vlaneseq
        %v3174 = vshrl.u32 %v3173, 7
        %v3175 = vsub.s32 3, %v3174
        %v3176 = vrot.slane %v3022, %v3175
        %v3182 = vlaneseq
        %v3183 = vshrl.u32 %v3182, 7
        %v3184 = vsub.s32 0, %v3183
        %v3185 = vrot.slane %v3033, %v3184
        %v3186 = vlaneseq
        %v3187 = vshrl.u32 %v3186, 7
        %v3188 = vsub.s32 1, %v3187
        %v3189 = vrot.slane %v3033, %v3188
        %v3190 = vlaneseq
        %v3191 = vshrl.u32 %v3190, 7
        %v3192 = vsub.s32 2, %v3191
        %v3193 = vrot.slane %v3033, %v3192
        %v3194 = vlaneseq
        %v3195 = vshrl.u32 %v3194, 7
        %v3196 = vsub.s32 3, %v3195
        %v3197 = vrot.slane %v3033, %v3196
        %v3202 = vsel %vm514, %v3038, %v3059
        %v3203 = vsel %vm514, %v3042, %v3063
        %v3204 = vsel %vm514, %v3046, %v3067
        %v3205 = vsel %vm514, %v3050, %v3071
        %v3206 = vsel %vm519, %v3202, %v3080
        %v3207 = vsel %vm519, %v3203, %v3084
        %v3208 = vsel %vm519, %v3204, %v3088
        %v3209 = vsel %vm519, %v3205, %v3092
        %v3210 = vsel %vm524, %v3206, %v3101
        %v3211 = vsel %vm524, %v3207, %v3105
        %v3212 = vsel %vm524, %v3208, %v3109
        %v3213 = vsel %vm524, %v3209, %v3113
        %v3214 = vsel %vm529, %v3210, %v3122
        %v3215 = vsel %vm529, %v3211, %v3126
        %v3216 = vsel %vm529, %v3212, %v3130
        %v3217 = vsel %vm529, %v3213, %v3134
        %v3218 = vsel %vm534, %v3214, %v3143
        %v3219 = vsel %vm534, %v3215, %v3147
        %v3220 = vsel %vm534, %v3216, %v3151
        %v3221 = vsel %vm534, %v3217, %v3155
        %v3222 = vsel %vm539, %v3218, %v3164
        %v3223 = vsel %vm539, %v3219, %v3168
        %v3224 = vsel %vm539, %v3220, %v3172
        %v3225 = vsel %vm539, %v3221, %v3176
        %v3226 = vsel %vm544, %v3222, %v3185
        %v3227 = vsel %vm544, %v3223, %v3189
        %v3228 = vsel %vm544, %v3224, %v3193
        %v3229 = vsel %vm544, %v3225, %v3197
        %3230 = vmatprep.subr.mxu0 %v192
        %3231 = vmatpush1.msra.mxu0 %v191
        %3232 = vmatprep.subr.mxu0 %v196
        %3233 = vmatpush1.msra.mxu0 %v195
        %3234 = vmatprep.subr.mxu0 %v200
        %3235 = vmatpush1.msra.mxu0 %v199
        %3236 = vmatprep.subr.mxu0 %v204
        %3237 = vmatpush1.msra.mxu0 %v203
        %3238 = vmatprep.subr.mxu0 %v208
        %3239 = vmatpush1.msra.mxu0 %v207
        %3240 = vmatprep.subr.mxu0 %v212
        %3241 = vmatpush1.msra.mxu0 %v211
        %3242 = vmatprep.subr.mxu0 %v216
        %3243 = vmatpush1.msra.mxu0 %v215
        %3244 = vmatprep.subr.mxu0 %v220
        %3245 = vmatpush1.msra.mxu0 %v219
        %3246 = vmatprep.subr.mxu0 %v224
        %3247 = vmatpush1.msra.mxu0 %v223
        %3248 = vmatprep.subr.mxu0 %v228
        %3249 = vmatpush1.msra.mxu0 %v227
        %3250 = vmatprep.subr.mxu0 %v232
        %3251 = vmatpush1.msra.mxu0 %v231
        %3252 = vmatprep.subr.mxu0 %v236
        %3253 = vmatpush1.msra.mxu0 %v235
        %3254 = vmatprep.subr.mxu0 %v240
        %3255 = vmatpush1.msra.mxu0 %v239
        %3256 = vmatprep.subr.mxu0 %v244
        %3257 = vmatpush1.msra.mxu0 %v243
        %3258 = vmatprep.subr.mxu0 %v248
        %3259 = vmatpush1.msra.mxu0 %v247
        %3260 = vmatprep.subr.mxu0 %v252
        %3261 = vmatpush1.msra.mxu0 %v251
        %3262 = vmatprep.subr.mxu0 0.0
        %3263 = vmatpush1.msra.mxu0 0.0
        %3264 = vmatprep.subr.mxu0 0.0
        %3265 = vmatpush1.msra.mxu0 0.0
        %3266 = vmatprep.subr.mxu0 0.0
        %3267 = vmatpush1.msra.mxu0 0.0
        %3268 = vmatprep.subr.mxu0 0.0
        %3269 = vmatpush1.msra.mxu0 0.0
        %3270 = vmatprep.subr.mxu0 0.0
        %3271 = vmatpush1.msra.mxu0 0.0
        %3272 = vmatprep.subr.mxu0 0.0
        %3273 = vmatpush1.msra.mxu0 0.0
        %3274 = vmatprep.subr.mxu0 0.0
        %3275 = vmatpush1.msra.mxu0 0.0
        %3276 = vmatprep.subr.mxu0 0.0
        %3277 = vmatpush1.msra.mxu0 0.0
        %3278 = vmatprep.subr.mxu0 0.0
        %3279 = vmatpush1.msra.mxu0 0.0
        %3280 = vmatprep.subr.mxu0 0.0
        %3281 = vmatpush1.msra.mxu0 0.0
        %3282 = vmatprep.subr.mxu0 0.0
        %3283 = vmatpush1.msra.mxu0 0.0
        %3284 = vmatprep.subr.mxu0 0.0
        %3285 = vmatpush1.msra.mxu0 0.0
        %3286 = vmatprep.subr.mxu0 0.0
        %3287 = vmatpush1.msra.mxu0 0.0
        %3288 = vmatprep.subr.mxu0 0.0
        %3289 = vmatpush1.msra.mxu0 0.0
        %3290 = vmatprep.subr.mxu0 0.0
        %3291 = vmatpush1.msra.mxu0 0.0
        %3292 = vmatprep.subr.mxu0 0.0
        %3293 = vmatpush1.msra.mxu0 0.0
        %3294 = vmatprep.mubr.f32.mxu0 0.0
        %3295 = vmatmul.mubr.f32.gmra.mrb[0].mxu0 %v2942
        %v3296 = vpop.f32.mrb[0].mxu0
        %v3297 = vadd.f32 %v3226, %v3296
        %v3298 = vpop.f32.mrb[0].mxu0
        %v3299 = vadd.f32 %v3227, %v3298
        %3300 = vdwg.mxu0
        %3301 = vmatprep.subr.mxu0 %v194
        %3302 = vmatpush1.msra.mxu0 %v193
        %3303 = vmatprep.subr.mxu0 %v198
        %3304 = vmatpush1.msra.mxu0 %v197
        %3305 = vmatprep.subr.mxu0 %v202
        %3306 = vmatpush1.msra.mxu0 %v201
        %3307 = vmatprep.subr.mxu0 %v206
        %3308 = vmatpush1.msra.mxu0 %v205
        %3309 = vmatprep.subr.mxu0 %v210
        %3310 = vmatpush1.msra.mxu0 %v209
        %3311 = vmatprep.subr.mxu0 %v214
        %3312 = vmatpush1.msra.mxu0 %v213
        %3313 = vmatprep.subr.mxu0 %v218
        %3314 = vmatpush1.msra.mxu0 %v217
        %3315 = vmatprep.subr.mxu0 %v222
        %3316 = vmatpush1.msra.mxu0 %v221
        %3317 = vmatprep.subr.mxu0 %v226
        %3318 = vmatpush1.msra.mxu0 %v225
        %3319 = vmatprep.subr.mxu0 %v230
        %3320 = vmatpush1.msra.mxu0 %v229
        %3321 = vmatprep.subr.mxu0 %v234
        %3322 = vmatpush1.msra.mxu0 %v233
        %3323 = vmatprep.subr.mxu0 %v238
        %3324 = vmatpush1.msra.mxu0 %v237
        %3325 = vmatprep.subr.mxu0 %v242
        %3326 = vmatpush1.msra.mxu0 %v241
        %3327 = vmatprep.subr.mxu0 %v246
        %3328 = vmatpush1.msra.mxu0 %v245
        %3329 = vmatprep.subr.mxu0 %v250
        %3330 = vmatpush1.msra.mxu0 %v249
        %3331 = vmatprep.subr.mxu0 %v254
        %3332 = vmatpush1.msra.mxu0 %v253
        %3333 = vmatprep.subr.mxu0 0.0
        %3334 = vmatpush1.msra.mxu0 0.0
        %3335 = vmatprep.subr.mxu0 0.0
        %3336 = vmatpush1.msra.mxu0 0.0
        %3337 = vmatprep.subr.mxu0 0.0
        %3338 = vmatpush1.msra.mxu0 0.0
        %3339 = vmatprep.subr.mxu0 0.0
        %3340 = vmatpush1.msra.mxu0 0.0
        %3341 = vmatprep.subr.mxu0 0.0
        %3342 = vmatpush1.msra.mxu0 0.0
        %3343 = vmatprep.subr.mxu0 0.0
        %3344 = vmatpush1.msra.mxu0 0.0
        %3345 = vmatprep.subr.mxu0 0.0
        %3346 = vmatpush1.msra.mxu0 0.0
        %3347 = vmatprep.subr.mxu0 0.0
        %3348 = vmatpush1.msra.mxu0 0.0
        %3349 = vmatprep.subr.mxu0 0.0
        %3350 = vmatpush1.msra.mxu0 0.0
        %3351 = vmatprep.subr.mxu0 0.0
        %3352 = vmatpush1.msra.mxu0 0.0
        %3353 = vmatprep.subr.mxu0 0.0
        %3354 = vmatpush1.msra.mxu0 0.0
        %3355 = vmatprep.subr.mxu0 0.0
        %3356 = vmatpush1.msra.mxu0 0.0
        %3357 = vmatprep.subr.mxu0 0.0
        %3358 = vmatpush1.msra.mxu0 0.0
        %3359 = vmatprep.subr.mxu0 0.0
        %3360 = vmatpush1.msra.mxu0 0.0
        %3361 = vmatprep.subr.mxu0 0.0
        %3362 = vmatpush1.msra.mxu0 0.0
        %3363 = vmatprep.subr.mxu0 0.0
        %3364 = vmatpush1.msra.mxu0 0.0
        %3365 = vmatprep.mubr.f32.mxu0 0.0
        %3366 = vmatmul.mubr.f32.gmra.mrb[0].mxu0 %v2942
        %v3367 = vpop.f32.mrb[0].mxu0
        %v3368 = vadd.f32 %v3228, %v3367
        %v3369 = vpop.f32.mrb[0].mxu0
        %v3370 = vadd.f32 %v3229, %v3369
        %3371 = vdwg.mxu0
        %v3372 = vtanh.pop %v3297
        %v3373 = vmul.f32 %v3299, 0.5
        %v3374 = vtanh.pop %v3373
        %v3375 = vadd.f32 %v3374, 1.0
        %v3376 = vmul.f32 %v3375, 0.5
        %v3377 = vmul.f32 %v3368, 0.5
        %v3378 = vtanh.pop %v3377
        %v3379 = vadd.f32 %v3378, 1.0
        %v3380 = vmul.f32 %v3379, 0.5
        %v3381 = vmul.f32 %v3370, 0.5
        %v3382 = vtanh.pop %v3381
        %v3383 = vadd.f32 %v3382, 1.0
        %v3384 = vmul.f32 %v3383, 0.5
        %v3385 = vmul.f32 %v3372, %v3376
        %v3386 = vmul.f32 %v2940, %v3380
        %v3387 = vadd.f32 %v3385, %v3386
        %v3388 = vtanh.pop %v3387
        %v3389 = vmul.f32 %v3388, %v3384
        %s3390 = scalar_lea.vmem [#allocation4], 48
        %3391 = vst [vmem:[%s3390] sm:$0xff] %v3389
        %s3392 = sadd.s32 %s255, 7
        %s3393 = smul.u32 %s3392, 8
        %s3394 = sld [smem:[#allocation6 + %s3393]]
        %s3395 = sshra.s32 %s3394, 3
        %s3396 = sand.u32 %s3394, 7
        %s3397 = sshra.s32 %s3394, 3
        %s3398 = sand.u32 %s3394, 7
        %s3399 = smul.u32 %s3395, 4
        %s3400 = smul.u32 %s3399, 8
        %s3401 = sadd.s32 %s3400, %s3398
        %s3402 = scalar_lea.vmem %s1, %s3401
        %v3403 = vld [vmem:[%s3402] ss:$8 sm:$0xf]
        %s3404 = sadd.s32 %s3393, 1
        %s3405 = sld [smem:[#allocation6 + %s3404]]
        %s3406 = sshra.s32 %s3405, 3
        %s3407 = sand.u32 %s3405, 7
        %s3408 = sshra.s32 %s3405, 3
        %s3409 = sand.u32 %s3405, 7
        %s3410 = smul.u32 %s3406, 4
        %s3411 = smul.u32 %s3410, 8
        %s3412 = sadd.s32 %s3411, %s3409
        %s3413 = scalar_lea.vmem %s1, %s3412
        %v3414 = vld [vmem:[%s3413] ss:$8 sm:$0xf]
        %s3415 = sadd.s32 %s3393, 2
        %s3416 = sld [smem:[#allocation6 + %s3415]]
        %s3417 = sshra.s32 %s3416, 3
        %s3418 = sand.u32 %s3416, 7
        %s3419 = sshra.s32 %s3416, 3
        %s3420 = sand.u32 %s3416, 7
        %s3421 = smul.u32 %s3417, 4
        %s3422 = smul.u32 %s3421, 8
        %s3423 = sadd.s32 %s3422, %s3420
        %s3424 = scalar_lea.vmem %s1, %s3423
        %v3425 = vld [vmem:[%s3424] ss:$8 sm:$0xf]
        %s3426 = sadd.s32 %s3393, 3
        %s3427 = sld [smem:[#allocation6 + %s3426]]
        %s3428 = sshra.s32 %s3427, 3
        %s3429 = sand.u32 %s3427, 7
        %s3430 = sshra.s32 %s3427, 3
        %s3431 = sand.u32 %s3427, 7
        %s3432 = smul.u32 %s3428, 4
        %s3433 = smul.u32 %s3432, 8
        %s3434 = sadd.s32 %s3433, %s3431
        %s3435 = scalar_lea.vmem %s1, %s3434
        %v3436 = vld [vmem:[%s3435] ss:$8 sm:$0xf]
        %s3437 = sadd.s32 %s3393, 4
        %s3438 = sld [smem:[#allocation6 + %s3437]]
        %s3439 = sshra.s32 %s3438, 3
        %s3440 = sand.u32 %s3438, 7
        %s3441 = sshra.s32 %s3438, 3
        %s3442 = sand.u32 %s3438, 7
        %s3443 = smul.u32 %s3439, 4
        %s3444 = smul.u32 %s3443, 8
        %s3445 = sadd.s32 %s3444, %s3442
        %s3446 = scalar_lea.vmem %s1, %s3445
        %v3447 = vld [vmem:[%s3446] ss:$8 sm:$0xf]
        %s3448 = sadd.s32 %s3393, 5
        %s3449 = sld [smem:[#allocation6 + %s3448]]
        %s3450 = sshra.s32 %s3449, 3
        %s3451 = sand.u32 %s3449, 7
        %s3452 = sshra.s32 %s3449, 3
        %s3453 = sand.u32 %s3449, 7
        %s3454 = smul.u32 %s3450, 4
        %s3455 = smul.u32 %s3454, 8
        %s3456 = sadd.s32 %s3455, %s3453
        %s3457 = scalar_lea.vmem %s1, %s3456
        %v3458 = vld [vmem:[%s3457] ss:$8 sm:$0xf]
        %s3459 = sadd.s32 %s3393, 6
        %s3460 = sld [smem:[#allocation6 + %s3459]]
        %s3461 = sshra.s32 %s3460, 3
        %s3462 = sand.u32 %s3460, 7
        %s3463 = sshra.s32 %s3460, 3
        %s3464 = sand.u32 %s3460, 7
        %s3465 = smul.u32 %s3461, 4
        %s3466 = smul.u32 %s3465, 8
        %s3467 = sadd.s32 %s3466, %s3464
        %s3468 = scalar_lea.vmem %s1, %s3467
        %v3469 = vld [vmem:[%s3468] ss:$8 sm:$0xf]
        %s3470 = sadd.s32 %s3393, 7
        %s3471 = sld [smem:[#allocation6 + %s3470]]
        %s3472 = sshra.s32 %s3471, 3
        %s3473 = sand.u32 %s3471, 7
        %s3474 = sshra.s32 %s3471, 3
        %s3475 = sand.u32 %s3471, 7
        %s3476 = smul.u32 %s3472, 4
        %s3477 = smul.u32 %s3476, 8
        %s3478 = sadd.s32 %s3477, %s3475
        %s3479 = scalar_lea.vmem %s1, %s3478
        %v3480 = vld [vmem:[%s3479] ss:$8 sm:$0xf]
        %v3482 = vlaneseq
        %v3483 = vshrl.u32 %v3482, 7
        %v3484 = vsub.s32 0, %v3483
        %v3485 = vrot.slane %v3403, %v3484
        %v3486 = vlaneseq
        %v3487 = vshrl.u32 %v3486, 7
        %v3488 = vsub.s32 1, %v3487
        %v3489 = vrot.slane %v3403, %v3488
        %v3490 = vlaneseq
        %v3491 = vshrl.u32 %v3490, 7
        %v3492 = vsub.s32 2, %v3491
        %v3493 = vrot.slane %v3403, %v3492
        %v3494 = vlaneseq
        %v3495 = vshrl.u32 %v3494, 7
        %v3496 = vsub.s32 3, %v3495
        %v3497 = vrot.slane %v3403, %v3496
        %v3503 = vlaneseq
        %v3504 = vshrl.u32 %v3503, 7
        %v3505 = vsub.s32 0, %v3504
        %v3506 = vrot.slane %v3414, %v3505
        %v3507 = vlaneseq
        %v3508 = vshrl.u32 %v3507, 7
        %v3509 = vsub.s32 1, %v3508
        %v3510 = vrot.slane %v3414, %v3509
        %v3511 = vlaneseq
        %v3512 = vshrl.u32 %v3511, 7
        %v3513 = vsub.s32 2, %v3512
        %v3514 = vrot.slane %v3414, %v3513
        %v3515 = vlaneseq
        %v3516 = vshrl.u32 %v3515, 7
        %v3517 = vsub.s32 3, %v3516
        %v3518 = vrot.slane %v3414, %v3517
        %v3524 = vlaneseq
        %v3525 = vshrl.u32 %v3524, 7
        %v3526 = vsub.s32 0, %v3525
        %v3527 = vrot.slane %v3425, %v3526
        %v3528 = vlaneseq
        %v3529 = vshrl.u32 %v3528, 7
        %v3530 = vsub.s32 1, %v3529
        %v3531 = vrot.slane %v3425, %v3530
        %v3532 = vlaneseq
        %v3533 = vshrl.u32 %v3532, 7
        %v3534 = vsub.s32 2, %v3533
        %v3535 = vrot.slane %v3425, %v3534
        %v3536 = vlaneseq
        %v3537 = vshrl.u32 %v3536, 7
        %v3538 = vsub.s32 3, %v3537
        %v3539 = vrot.slane %v3425, %v3538
        %v3545 = vlaneseq
        %v3546 = vshrl.u32 %v3545, 7
        %v3547 = vsub.s32 0, %v3546
        %v3548 = vrot.slane %v3436, %v3547
        %v3549 = vlaneseq
        %v3550 = vshrl.u32 %v3549, 7
        %v3551 = vsub.s32 1, %v3550
        %v3552 = vrot.slane %v3436, %v3551
        %v3553 = vlaneseq
        %v3554 = vshrl.u32 %v3553, 7
        %v3555 = vsub.s32 2, %v3554
        %v3556 = vrot.slane %v3436, %v3555
        %v3557 = vlaneseq
        %v3558 = vshrl.u32 %v3557, 7
        %v3559 = vsub.s32 3, %v3558
        %v3560 = vrot.slane %v3436, %v3559
        %v3566 = vlaneseq
        %v3567 = vshrl.u32 %v3566, 7
        %v3568 = vsub.s32 0, %v3567
        %v3569 = vrot.slane %v3447, %v3568
        %v3570 = vlaneseq
        %v3571 = vshrl.u32 %v3570, 7
        %v3572 = vsub.s32 1, %v3571
        %v3573 = vrot.slane %v3447, %v3572
        %v3574 = vlaneseq
        %v3575 = vshrl.u32 %v3574, 7
        %v3576 = vsub.s32 2, %v3575
        %v3577 = vrot.slane %v3447, %v3576
        %v3578 = vlaneseq
        %v3579 = vshrl.u32 %v3578, 7
        %v3580 = vsub.s32 3, %v3579
        %v3581 = vrot.slane %v3447, %v3580
        %v3587 = vlaneseq
        %v3588 = vshrl.u32 %v3587, 7
        %v3589 = vsub.s32 0, %v3588
        %v3590 = vrot.slane %v3458, %v3589
        %v3591 = vlaneseq
        %v3592 = vshrl.u32 %v3591, 7
        %v3593 = vsub.s32 1, %v3592
        %v3594 = vrot.slane %v3458, %v3593
        %v3595 = vlaneseq
        %v3596 = vshrl.u32 %v3595, 7
        %v3597 = vsub.s32 2, %v3596
        %v3598 = vrot.slane %v3458, %v3597
        %v3599 = vlaneseq
        %v3600 = vshrl.u32 %v3599, 7
        %v3601 = vsub.s32 3, %v3600
        %v3602 = vrot.slane %v3458, %v3601
        %v3608 = vlaneseq
        %v3609 = vshrl.u32 %v3608, 7
        %v3610 = vsub.s32 0, %v3609
        %v3611 = vrot.slane %v3469, %v3610
        %v3612 = vlaneseq
        %v3613 = vshrl.u32 %v3612, 7
        %v3614 = vsub.s32 1, %v3613
        %v3615 = vrot.slane %v3469, %v3614
        %v3616 = vlaneseq
        %v3617 = vshrl.u32 %v3616, 7
        %v3618 = vsub.s32 2, %v3617
        %v3619 = vrot.slane %v3469, %v3618
        %v3620 = vlaneseq
        %v3621 = vshrl.u32 %v3620, 7
        %v3622 = vsub.s32 3, %v3621
        %v3623 = vrot.slane %v3469, %v3622
        %v3629 = vlaneseq
        %v3630 = vshrl.u32 %v3629, 7
        %v3631 = vsub.s32 0, %v3630
        %v3632 = vrot.slane %v3480, %v3631
        %v3633 = vlaneseq
        %v3634 = vshrl.u32 %v3633, 7
        %v3635 = vsub.s32 1, %v3634
        %v3636 = vrot.slane %v3480, %v3635
        %v3637 = vlaneseq
        %v3638 = vshrl.u32 %v3637, 7
        %v3639 = vsub.s32 2, %v3638
        %v3640 = vrot.slane %v3480, %v3639
        %v3641 = vlaneseq
        %v3642 = vshrl.u32 %v3641, 7
        %v3643 = vsub.s32 3, %v3642
        %v3644 = vrot.slane %v3480, %v3643
        %v3649 = vsel %vm514, %v3485, %v3506
        %v3650 = vsel %vm514, %v3489, %v3510
        %v3651 = vsel %vm514, %v3493, %v3514
        %v3652 = vsel %vm514, %v3497, %v3518
        %v3653 = vsel %vm519, %v3649, %v3527
        %v3654 = vsel %vm519, %v3650, %v3531
        %v3655 = vsel %vm519, %v3651, %v3535
        %v3656 = vsel %vm519, %v3652, %v3539
        %v3657 = vsel %vm524, %v3653, %v3548
        %v3658 = vsel %vm524, %v3654, %v3552
        %v3659 = vsel %vm524, %v3655, %v3556
        %v3660 = vsel %vm524, %v3656, %v3560
        %v3661 = vsel %vm529, %v3657, %v3569
        %v3662 = vsel %vm529, %v3658, %v3573
        %v3663 = vsel %vm529, %v3659, %v3577
        %v3664 = vsel %vm529, %v3660, %v3581
        %v3665 = vsel %vm534, %v3661, %v3590
        %v3666 = vsel %vm534, %v3662, %v3594
        %v3667 = vsel %vm534, %v3663, %v3598
        %v3668 = vsel %vm534, %v3664, %v3602
        %v3669 = vsel %vm539, %v3665, %v3611
        %v3670 = vsel %vm539, %v3666, %v3615
        %v3671 = vsel %vm539, %v3667, %v3619
        %v3672 = vsel %vm539, %v3668, %v3623
        %v3673 = vsel %vm544, %v3669, %v3632
        %v3674 = vsel %vm544, %v3670, %v3636
        %v3675 = vsel %vm544, %v3671, %v3640
        %v3676 = vsel %vm544, %v3672, %v3644
        %3677 = vmatprep.subr.mxu0 %v192
        %3678 = vmatpush1.msra.mxu0 %v191
        %3679 = vmatprep.subr.mxu0 %v196
        %3680 = vmatpush1.msra.mxu0 %v195
        %3681 = vmatprep.subr.mxu0 %v200
        %3682 = vmatpush1.msra.mxu0 %v199
        %3683 = vmatprep.subr.mxu0 %v204
        %3684 = vmatpush1.msra.mxu0 %v203
        %3685 = vmatprep.subr.mxu0 %v208
        %3686 = vmatpush1.msra.mxu0 %v207
        %3687 = vmatprep.subr.mxu0 %v212
        %3688 = vmatpush1.msra.mxu0 %v211
        %3689 = vmatprep.subr.mxu0 %v216
        %3690 = vmatpush1.msra.mxu0 %v215
        %3691 = vmatprep.subr.mxu0 %v220
        %3692 = vmatpush1.msra.mxu0 %v219
        %3693 = vmatprep.subr.mxu0 %v224
        %3694 = vmatpush1.msra.mxu0 %v223
        %3695 = vmatprep.subr.mxu0 %v228
        %3696 = vmatpush1.msra.mxu0 %v227
        %3697 = vmatprep.subr.mxu0 %v232
        %3698 = vmatpush1.msra.mxu0 %v231
        %3699 = vmatprep.subr.mxu0 %v236
        %3700 = vmatpush1.msra.mxu0 %v235
        %3701 = vmatprep.subr.mxu0 %v240
        %3702 = vmatpush1.msra.mxu0 %v239
        %3703 = vmatprep.subr.mxu0 %v244
        %3704 = vmatpush1.msra.mxu0 %v243
        %3705 = vmatprep.subr.mxu0 %v248
        %3706 = vmatpush1.msra.mxu0 %v247
        %3707 = vmatprep.subr.mxu0 %v252
        %3708 = vmatpush1.msra.mxu0 %v251
        %3709 = vmatprep.subr.mxu0 0.0
        %3710 = vmatpush1.msra.mxu0 0.0
        %3711 = vmatprep.subr.mxu0 0.0
        %3712 = vmatpush1.msra.mxu0 0.0
        %3713 = vmatprep.subr.mxu0 0.0
        %3714 = vmatpush1.msra.mxu0 0.0
        %3715 = vmatprep.subr.mxu0 0.0
        %3716 = vmatpush1.msra.mxu0 0.0
        %3717 = vmatprep.subr.mxu0 0.0
        %3718 = vmatpush1.msra.mxu0 0.0
        %3719 = vmatprep.subr.mxu0 0.0
        %3720 = vmatpush1.msra.mxu0 0.0
        %3721 = vmatprep.subr.mxu0 0.0
        %3722 = vmatpush1.msra.mxu0 0.0
        %3723 = vmatprep.subr.mxu0 0.0
        %3724 = vmatpush1.msra.mxu0 0.0
        %3725 = vmatprep.subr.mxu0 0.0
        %3726 = vmatpush1.msra.mxu0 0.0
        %3727 = vmatprep.subr.mxu0 0.0
        %3728 = vmatpush1.msra.mxu0 0.0
        %3729 = vmatprep.subr.mxu0 0.0
        %3730 = vmatpush1.msra.mxu0 0.0
        %3731 = vmatprep.subr.mxu0 0.0
        %3732 = vmatpush1.msra.mxu0 0.0
        %3733 = vmatprep.subr.mxu0 0.0
        %3734 = vmatpush1.msra.mxu0 0.0
        %3735 = vmatprep.subr.mxu0 0.0
        %3736 = vmatpush1.msra.mxu0 0.0
        %3737 = vmatprep.subr.mxu0 0.0
        %3738 = vmatpush1.msra.mxu0 0.0
        %3739 = vmatprep.subr.mxu0 0.0
        %3740 = vmatpush1.msra.mxu0 0.0
        %3741 = vmatprep.mubr.f32.mxu0 0.0
        %3742 = vmatmul.mubr.f32.gmra.mrb[0].mxu0 %v3389
        %v3743 = vpop.f32.mrb[0].mxu0
        %v3744 = vadd.f32 %v3673, %v3743
        %v3745 = vpop.f32.mrb[0].mxu0
        %v3746 = vadd.f32 %v3674, %v3745
        %3747 = vdwg.mxu0
        %3748 = vmatprep.subr.mxu0 %v194
        %3749 = vmatpush1.msra.mxu0 %v193
        %3750 = vmatprep.subr.mxu0 %v198
        %3751 = vmatpush1.msra.mxu0 %v197
        %3752 = vmatprep.subr.mxu0 %v202
        %3753 = vmatpush1.msra.mxu0 %v201
        %3754 = vmatprep.subr.mxu0 %v206
        %3755 = vmatpush1.msra.mxu0 %v205
        %3756 = vmatprep.subr.mxu0 %v210
        %3757 = vmatpush1.msra.mxu0 %v209
        %3758 = vmatprep.subr.mxu0 %v214
        %3759 = vmatpush1.msra.mxu0 %v213
        %3760 = vmatprep.subr.mxu0 %v218
        %3761 = vmatpush1.msra.mxu0 %v217
        %3762 = vmatprep.subr.mxu0 %v222
        %3763 = vmatpush1.msra.mxu0 %v221
        %3764 = vmatprep.subr.mxu0 %v226
        %3765 = vmatpush1.msra.mxu0 %v225
        %3766 = vmatprep.subr.mxu0 %v230
        %3767 = vmatpush1.msra.mxu0 %v229
        %3768 = vmatprep.subr.mxu0 %v234
        %3769 = vmatpush1.msra.mxu0 %v233
        %3770 = vmatprep.subr.mxu0 %v238
        %3771 = vmatpush1.msra.mxu0 %v237
        %3772 = vmatprep.subr.mxu0 %v242
        %3773 = vmatpush1.msra.mxu0 %v241
        %3774 = vmatprep.subr.mxu0 %v246
        %3775 = vmatpush1.msra.mxu0 %v245
        %3776 = vmatprep.subr.mxu0 %v250
        %3777 = vmatpush1.msra.mxu0 %v249
        %3778 = vmatprep.subr.mxu0 %v254
        %3779 = vmatpush1.msra.mxu0 %v253
        %3780 = vmatprep.subr.mxu0 0.0
        %3781 = vmatpush1.msra.mxu0 0.0
        %3782 = vmatprep.subr.mxu0 0.0
        %3783 = vmatpush1.msra.mxu0 0.0
        %3784 = vmatprep.subr.mxu0 0.0
        %3785 = vmatpush1.msra.mxu0 0.0
        %3786 = vmatprep.subr.mxu0 0.0
        %3787 = vmatpush1.msra.mxu0 0.0
        %3788 = vmatprep.subr.mxu0 0.0
        %3789 = vmatpush1.msra.mxu0 0.0
        %3790 = vmatprep.subr.mxu0 0.0
        %3791 = vmatpush1.msra.mxu0 0.0
        %3792 = vmatprep.subr.mxu0 0.0
        %3793 = vmatpush1.msra.mxu0 0.0
        %3794 = vmatprep.subr.mxu0 0.0
        %3795 = vmatpush1.msra.mxu0 0.0
        %3796 = vmatprep.subr.mxu0 0.0
        %3797 = vmatpush1.msra.mxu0 0.0
        %3798 = vmatprep.subr.mxu0 0.0
        %3799 = vmatpush1.msra.mxu0 0.0
        %3800 = vmatprep.subr.mxu0 0.0
        %3801 = vmatpush1.msra.mxu0 0.0
        %3802 = vmatprep.subr.mxu0 0.0
        %3803 = vmatpush1.msra.mxu0 0.0
        %3804 = vmatprep.subr.mxu0 0.0
        %3805 = vmatpush1.msra.mxu0 0.0
        %3806 = vmatprep.subr.mxu0 0.0
        %3807 = vmatpush1.msra.mxu0 0.0
        %3808 = vmatprep.subr.mxu0 0.0
        %3809 = vmatpush1.msra.mxu0 0.0
        %3810 = vmatprep.subr.mxu0 0.0
        %3811 = vmatpush1.msra.mxu0 0.0
        %3812 = vmatprep.mubr.f32.mxu0 0.0
        %3813 = vmatmul.mubr.f32.gmra.mrb[0].mxu0 %v3389
        %v3814 = vpop.f32.mrb[0].mxu0
        %v3815 = vadd.f32 %v3675, %v3814
        %v3816 = vpop.f32.mrb[0].mxu0
        %v3817 = vadd.f32 %v3676, %v3816
        %3818 = vdwg.mxu0
        %v3819 = vtanh.pop %v3744
        %v3820 = vmul.f32 %v3746, 0.5
        %v3821 = vtanh.pop %v3820
        %v3822 = vadd.f32 %v3821, 1.0
        %v3823 = vmul.f32 %v3822, 0.5
        %v3824 = vmul.f32 %v3815, 0.5
        %v3825 = vtanh.pop %v3824
        %v3826 = vadd.f32 %v3825, 1.0
        %v3827 = vmul.f32 %v3826, 0.5
        %v3828 = vmul.f32 %v3817, 0.5
        %v3829 = vtanh.pop %v3828
        %v3830 = vadd.f32 %v3829, 1.0
        %v3831 = vmul.f32 %v3830, 0.5
        %v3832 = vmul.f32 %v3819, %v3823
        %v3833 = vmul.f32 %v3387, %v3827
        %v3834 = vadd.f32 %v3832, %v3833
        %v3835 = vtanh.pop %v3834
        %v3836 = vmul.f32 %v3835, %v3831
        %s3837 = scalar_lea.vmem [#allocation4], 56
        %3838 = vst [vmem:[%s3837] sm:$0xff] %v3836
        %3839 = vst [vmem:[#allocation2] sm:$0xff] %v3836
        %3840 = vst [vmem:[#allocation3] sm:$0xff] %v3834
        %v3841 = vld [vmem:[#allocation4] sm:$0xff]
        %v3842 = vld [vmem:[#allocation4 + $0x8] sm:$0xff]
        %v3843 = vld [vmem:[#allocation4 + $0x10] sm:$0xff]
        %v3844 = vld [vmem:[#allocation4 + $0x18] sm:$0xff]
        %v3845 = vld [vmem:[#allocation4 + $0x20] sm:$0xff]
        %v3846 = vld [vmem:[#allocation4 + $0x28] sm:$0xff]
        %v3847 = vld [vmem:[#allocation4 + $0x30] sm:$0xff]
        %v3848 = vld [vmem:[#allocation4 + $0x38] sm:$0xff]
        %v3849 = vpack.c.bf16 %v3842, %v3841
        %v3850 = vpack.c.bf16 %v3844, %v3843
        %v3851 = vpack.c.bf16 %v3846, %v3845
        %v3852 = vpack.c.bf16 %v3848, %v3847
        %v3853 = vld [vmem:[%s3] sm:$0xf]
        %v3854 = vld [vmem:[%s3 + $0x4] sm:$0xf]
        %v3855 = vld [vmem:[%s3 + $0x8] sm:$0xf]
        %v3856 = vld [vmem:[%s3 + $0xc] sm:$0xf]
        %v3857 = vld [vmem:[%s3 + $0x10] sm:$0xf]
        %v3858 = vld [vmem:[%s3 + $0x14] sm:$0xf]
        %v3859 = vld [vmem:[%s3 + $0x18] sm:$0xf]
        %v3860 = vld [vmem:[%s3 + $0x1c] sm:$0xf]
        %v3861 = vld [vmem:[%s3 + $0x20] sm:$0xf]
        %v3862 = vld [vmem:[%s3 + $0x24] sm:$0xf]
        %v3863 = vld [vmem:[%s3 + $0x28] sm:$0xf]
        %v3864 = vld [vmem:[%s3 + $0x2c] sm:$0xf]
        %v3865 = vld [vmem:[%s3 + $0x30] sm:$0xf]
        %v3866 = vld [vmem:[%s3 + $0x34] sm:$0xf]
        %v3867 = vld [vmem:[%s3 + $0x38] sm:$0xf]
        %v3868 = vld [vmem:[%s3 + $0x3c] sm:$0xf]
        %v3869 = vld [vmem:[%s4] sm:$0x1]
        %v3871 = vlaneseq
        %v3872 = vshrl.u32 %v3871, 7
        %v3873 = vsub.s32 0, %v3872
        %v3874 = vrot.slane %v3869, %v3873
        %v3892 = vunpack.c.l.b16 %v3853
        %v3893 = vunpack.c.l.b16 %v3854
        %v3894 = vunpack.c.l.b16 %v3855
        %v3895 = vunpack.c.l.b16 %v3856
        %v3896 = vunpack.c.l.b16 %v3857
        %v3897 = vunpack.c.l.b16 %v3858
        %v3898 = vunpack.c.l.b16 %v3859
        %v3899 = vunpack.c.l.b16 %v3860
        %v3900 = vunpack.c.l.b16 %v3861
        %v3901 = vunpack.c.l.b16 %v3862
        %v3902 = vunpack.c.l.b16 %v3863
        %v3903 = vunpack.c.l.b16 %v3864
        %v3904 = vunpack.c.l.b16 %v3865
        %v3905 = vunpack.c.l.b16 %v3866
        %v3906 = vunpack.c.l.b16 %v3867
        %v3907 = vunpack.c.l.b16 %v3868
        %v3908 = vpack.c.b16 %v3893, %v3892
        %v3909 = vpack.c.b16 %v3895, %v3894
        %v3910 = vpack.c.b16 %v3897, %v3896
        %v3911 = vpack.c.b16 %v3899, %v3898
        %v3912 = vpack.c.b16 %v3901, %v3900
        %v3913 = vpack.c.b16 %v3903, %v3902
        %v3914 = vpack.c.b16 %v3905, %v3904
        %v3915 = vpack.c.b16 %v3907, %v3906
        %3924 = vmatprep.subr.bf16.mxu0 0
        %3925 = vmatpush1.bf16.msra.mxu0 %v3908
        %3926 = vmatprep.subr.bf16.mxu0 0
        %3927 = vmatpush1.bf16.msra.mxu0 %v3909
        %3928 = vmatprep.subr.bf16.mxu0 0
        %3929 = vmatpush1.bf16.msra.mxu0 %v3910
        %3930 = vmatprep.subr.bf16.mxu0 0
        %3931 = vmatpush1.bf16.msra.mxu0 %v3911
        %3932 = vmatprep.subr.bf16.mxu0 0
        %3933 = vmatpush1.bf16.msra.mxu0 %v3912
        %3934 = vmatprep.subr.bf16.mxu0 0
        %3935 = vmatpush1.bf16.msra.mxu0 %v3913
        %3936 = vmatprep.subr.bf16.mxu0 0
        %3937 = vmatpush1.bf16.msra.mxu0 %v3914
        %3938 = vmatprep.subr.bf16.mxu0 0
        %3939 = vmatpush1.bf16.msra.mxu0 %v3915
        %3940 = vmatprep.subr.bf16.mxu0 0
        %3941 = vmatpush1.bf16.msra.mxu0 0
        %3942 = vmatprep.subr.bf16.mxu0 0
        %3943 = vmatpush1.bf16.msra.mxu0 0
        %3944 = vmatprep.subr.bf16.mxu0 0
        %3945 = vmatpush1.bf16.msra.mxu0 0
        %3946 = vmatprep.subr.bf16.mxu0 0
        %3947 = vmatpush1.bf16.msra.mxu0 0
        %3948 = vmatprep.subr.bf16.mxu0 0
        %3949 = vmatpush1.bf16.msra.mxu0 0
        %3950 = vmatprep.subr.bf16.mxu0 0
        %3951 = vmatpush1.bf16.msra.mxu0 0
        %3952 = vmatprep.subr.bf16.mxu0 0
        %3953 = vmatpush1.bf16.msra.mxu0 0
        %3954 = vmatprep.subr.bf16.mxu0 0
        %3955 = vmatpush1.bf16.msra.mxu0 0
        %3956 = vmatprep.mubr.bf16.mxu0 0
        %3957 = vmatmul.mubr.bf16.gmra.mrb[0].mxu0 %v3849
        %v3958 = vpop.f32.mrb[0].mxu0
        %v3959 = vadd.f32 %v3874, %v3958
        %v3960 = vpop.f32.mrb[0].mxu0
        %v3961 = vpop.f32.mrb[0].mxu0
        %v3962 = vadd.f32 %v3874, %v3961
        %v3963 = vpop.f32.mrb[0].mxu0
        %3964 = vmatprep.mubr.bf16.mxu0 0
        %3965 = vmatmul.mubr.bf16.gmra.mrb[0].mxu0 %v3850
        %v3966 = vpop.f32.mrb[0].mxu0
        %v3967 = vadd.f32 %v3874, %v3966
        %v3968 = vpop.f32.mrb[0].mxu0
        %v3969 = vpop.f32.mrb[0].mxu0
        %v3970 = vadd.f32 %v3874, %v3969
        %v3971 = vpop.f32.mrb[0].mxu0
        %3972 = vmatprep.mubr.bf16.mxu0 0
        %3973 = vmatmul.mubr.bf16.gmra.mrb[0].mxu0 %v3851
        %v3974 = vpop.f32.mrb[0].mxu0
        %v3975 = vadd.f32 %v3874, %v3974
        %v3976 = vpop.f32.mrb[0].mxu0
        %v3977 = vpop.f32.mrb[0].mxu0
        %v3978 = vadd.f32 %v3874, %v3977
        %v3979 = vpop.f32.mrb[0].mxu0
        %3980 = vmatprep.mubr.bf16.mxu0 0
        %3981 = vmatmul.mubr.bf16.gmra.mrb[0].mxu0 %v3852
        %v3982 = vpop.f32.mrb[0].mxu0
        %v3983 = vadd.f32 %v3874, %v3982
        %v3984 = vpop.f32.mrb[0].mxu0
        %v3985 = vpop.f32.mrb[0].mxu0
        %v3986 = vadd.f32 %v3874, %v3985
        %v3987 = vpop.f32.mrb[0].mxu0
        %3988 = vdwg.mxu0
        %vm3989 = vcmask 261120
        %3990 = vst.msk [vmem:[%s182] sm:$0xff] %vm3989, %v3959
        %3991 = vst.msk [vmem:[%s182 + $0x8] sm:$0xff] %vm3989, %v3962
        %3992 = vst.msk [vmem:[%s182 + $0x10] sm:$0xff] %vm3989, %v3967
        %3993 = vst.msk [vmem:[%s182 + $0x18] sm:$0xff] %vm3989, %v3970
        %3994 = vst.msk [vmem:[%s182 + $0x20] sm:$0xff] %vm3989, %v3975
        %3995 = vst.msk [vmem:[%s182 + $0x28] sm:$0xff] %vm3989, %v3978
        %3996 = vst.msk [vmem:[%s182 + $0x30] sm:$0xff] %vm3989, %v3983
        %3997 = vst.msk [vmem:[%s182 + $0x38] sm:$0xff] %vm3989, %v3986
        %s3998 = sand.u32 %s117, 1
        %s3999 = scalar_lea.sflag [#allocation8], %s3998
        %s4000 = sand.u32 %s117, 1
        %s4001 = smul.addr %s4000, 64
        %s4002 = scalar_lea.vmem [#allocation7], %s4001
        // Predicated region
        $region41: #{text_generation_forward.3} parent=35 // pred_check
          %p4003 = pneg %p127
        $region42: #{text_generation_forward.3} parent=35 // pred_check_branch
          %4005 = sbr.rel (%p4003) target = $region44
        $region43: #{text_generation_forward.3} parent=35 // pred_region
          %s4006 = smul.u32 8, %s25
          %s4008 = ssub.s32 1024, 1024
          %4009 = vsyncadd %s3999, %s4008
          %s4010 = smul.addr %s4006, 128
          %s4011 = scalar_lea.hbm %s5, %s4010
          %s4012 = sshll.u32 %s4002, 4
          %s4013 = int_to_ptr.vmem [resolvable:$true] %s4012
          %4018 = dma.vmem_to_hbm [thread:$0]  %s4013, 1024, %s4011, %s3999, 128, 128, 8
        $region44: #{text_generation_forward.3} parent=35 // pred_fallthru
          _
      $region36: #{text_generation_forward.3} parent=5 // pred_fallthru
        _
      %p4019 = scmp.le.s32.totalorder 2, %s20
      // Predicated region
      $region45: #{text_generation_forward.3} parent=5 // pred_check
        %p4020 = pneg %p4019
      $region46: #{text_generation_forward.3} parent=5 // pred_check_branch
        %4022 = sbr.rel (%p4020) target = $region48
      $region47: #{text_generation_forward.3} parent=5 // pred_region
        %s4023 = ssub.s32 %s20, 2
        // Predicated region
        $region49: #{text_generation_forward.3} parent=47 // pred_check
          %p4024 = pneg %p133
        $region50: #{text_generation_forward.3} parent=47 // pred_check_branch
          %4026 = sbr.rel (%p4024) target = $region52
        $region51: #{text_generation_forward.3} parent=47 // pred_region
          %s4027 = sand.u32 %s118, 1
          %s4028 = scalar_lea.sflag [#allocation8], %s4027
          %s4029 = sand.u32 %s118, 1
          %s4030 = smul.addr %s4029, 64
          %s4031 = scalar_lea.vmem [#allocation7], %s4030
          %4032 = dma.done %s4028, 1024
        $region52: #{text_generation_forward.3} parent=47 // pred_fallthru
          _
      $region48: #{text_generation_forward.3} parent=5 // pred_fallthru
        _
    $region6: #{text_generation_forward.3} parent=1 // loop_footer
      %s24 = sadd.s32 1, %s20
    $region7: #{text_generation_forward.3} parent=1 // loop_footer_branch
      %19 = sbr.rel target = $region3
    $region8: #{text_generation_forward.3} parent=1 // loop_exit
      _
    %4033 = vsyncpa [#allocation8], 1
    %s4034 = scalar_lea.sflag [#allocation8], 1
    %4035 = vsyncpa %s4034, 1

</llo_original>
